<compile_context>
chip_gen: v5e
topology: v5e:2x2
jax: 0.10.0
libtpu: 0.0.40
codegen_flags: <defaults>
</compile_context>

<pallas_src>
import functools
import math

import jax
import jax.numpy as jnp
from jax import lax
from jax.experimental import pallas as pl
from jax.experimental.pallas import tpu as pltpu


# ----------------------------------------------------------------------------
# Patch-size selection (verbatim port of Encoder2D.find_optimal_patch_and_size)
# ----------------------------------------------------------------------------
def find_optimal_patch_and_size(image_size, depth, min_patches=9, max_patches=16):
    base = 2 ** depth
    best_patch_sizes, best_adjusted_sizes, best_num_patches = [], [], []
    for dimension in image_size:
        best_patch_diff = float("inf")
        best_patch_size = best_adjusted_size = best_patch_count = None
        for patch_size in range(base, dimension + 1, base):
            num_patches = math.ceil(dimension / patch_size)
            if min_patches <= num_patches <= max_patches:
                adjusted_size = patch_size * num_patches
                patch_diff = abs(dimension - adjusted_size)
                if patch_diff < best_patch_diff:
                    best_patch_diff = patch_diff
                    best_patch_size = patch_size
                    best_adjusted_size = adjusted_size
                    best_patch_count = num_patches
        best_patch_sizes.append(best_patch_size)
        best_adjusted_sizes.append(best_adjusted_size)
        best_num_patches.append(best_patch_count)
    return best_patch_sizes, best_adjusted_sizes, best_num_patches


def _padded_dims(cfg):
    """Sequence / contraction padding used by the fused kernel."""
    nh_, nw_ = cfg["num_patch"]
    S = nh_ * nw_ + 1
    Kp = cfg["in_chans"] * cfg["patch_size"][0] * cfg["patch_size"][1]
    Sp = ((S + 127) // 128) * 128        # pad tokens to full-lane multiple (128)
    Kpad = ((Kp + 127) // 128) * 128     # pad patch-pixel contraction dim
    return S, Sp, Kp, Kpad


# ----------------------------------------------------------------------------
# Fused encoder kernel: one grid step = one transformer block of one batch item.
# ----------------------------------------------------------------------------
def _encoder_block_kernel(
    xp_ref, emb_ref, pw_ref,
    ln1g_ref, ln1b_ref, qkvw_ref, qkvb_ref, projw_ref, projb_ref,
    ln2g_ref, ln2b_ref, fc1w_ref, fc1b_ref, fc2w_ref, fc2b_ref,
    lnfg_ref, lnfb_ref,
    o_ref,
    x2_ref,                               # VMEM scratch (Sp, D) f32 residual stream
    *, num_heads, head_dim, seq_valid, eps):
    D = num_heads * head_dim
    Sp = x2_ref.shape[0]
    l = pl.program_id(1)

    def layer_norm(x, g, b):
        mu = jnp.mean(x, axis=-1, keepdims=True)
        xc = x - mu
        var = jnp.mean(xc * xc, axis=-1, keepdims=True)
        return xc * lax.rsqrt(var + eps) * g + b

    # --- depth==0: patch embedding (conv as matmul) + CLS + pos-embed -> residual
    @pl.when(l == 0)
    def _():
        tok = jnp.dot(xp_ref[...].astype(jnp.bfloat16), pw_ref[...],
                      preferred_element_type=jnp.float32)
        # emb holds: row0 = cls + pos[0]; rows 1..N = patch_b + pos[1:]; rest 0.
        x2_ref[...] = tok + emb_ref[...]

    x2 = x2_ref[...]

    # --- attention sub-block (pre-norm) ---------------------------------------
    h = layer_norm(x2, ln1g_ref[...], ln1b_ref[...])
    qkv = jnp.dot(h.astype(jnp.bfloat16), qkvw_ref[...],
                  preferred_element_type=jnp.float32) + qkvb_ref[...]
    qkv = qkv.astype(jnp.bfloat16)                          # (Sp, 3D) resident in VMEM

    scale = head_dim ** -0.5
    col = lax.broadcasted_iota(jnp.int32, (Sp, Sp), 1)
    key_mask = col < seq_valid                              # mask padded key columns

    head_outs = []
    for hd in range(num_heads):                             # static unrolled head loop
        lo = hd * head_dim
        q = qkv[:, lo:lo + head_dim]
        k = qkv[:, D + lo:D + lo + head_dim]
        v = qkv[:, 2 * D + lo:2 * D + lo + head_dim]
        s = lax.dot_general(q, k, (((1,), (1,)), ((), ())),
                            preferred_element_type=jnp.float32) * scale
        s = jnp.where(key_mask, s, -1e30)
        m = jnp.max(s, axis=-1, keepdims=True)
        e = jnp.exp(s - m)
        inv = pl.reciprocal(jnp.sum(e, axis=-1, keepdims=True), approx=True)
        p = (e * inv).astype(jnp.bfloat16)
        head_outs.append(jnp.dot(p, v, preferred_element_type=jnp.float32))
    attn = jnp.concatenate(head_outs, axis=-1)              # (Sp, D), lane-dense

    x2 = x2 + jnp.dot(attn.astype(jnp.bfloat16), projw_ref[...],
                      preferred_element_type=jnp.float32) + projb_ref[...]

    # --- MLP sub-block (pre-norm) ---------------------------------------------
    h = layer_norm(x2, ln2g_ref[...], ln2b_ref[...])
    h = jnp.dot(h.astype(jnp.bfloat16), fc1w_ref[...],
                preferred_element_type=jnp.float32) + fc1b_ref[...]
    # TODO(synk): timm nn.GELU is exact erf-GELU; tanh approximation used here
    # for guaranteed Mosaic lowering.
    h = jax.nn.gelu(h, approximate=True)
    x2 = x2 + jnp.dot(h.astype(jnp.bfloat16), fc2w_ref[...],
                      preferred_element_type=jnp.float32) + fc2b_ref[...]
    x2_ref[...] = x2

    # --- last block: final LayerNorm, single lane-dense (Sp, D) store ----------
    @pl.when(l == pl.num_programs(1) - 1)
    def _():
        o_ref[...] = layer_norm(x2, lnfg_ref[...], lnfb_ref[...]).astype(o_ref.dtype)


def fused_encoder(xp_pad, prep, cfg):
    B = xp_pad.shape[0]
    D = cfg["hidden_dim"]
    Hd = cfg["mlp_hidden"]
    L = cfg["depth"]
    nheads = cfg["num_heads"]
    dh = D // nheads
    S, Sp, _, Kpad = _padded_dims(cfg)

    const = lambda b, l: (0, 0)
    per_b = lambda b, l: (b, 0, 0)
    per_l = lambda b, l: (l, 0, 0)

    kernel = functools.partial(
        _encoder_block_kernel,
        num_heads=nheads, head_dim=dh, seq_valid=S, eps=1e-6)

    return pl.pallas_call(
        kernel,
        out_shape=jax.ShapeDtypeStruct((B, Sp, D), jnp.float32),
        grid=(B, L),
        in_specs=[
            pl.BlockSpec((None, Sp, Kpad), per_b),      # xp_pad (patch pixels)
            pl.BlockSpec((Sp, D), const),               # fused cls/pos/patch-bias add
            pl.BlockSpec((Kpad, D), const),             # patch_w (bf16)
            pl.BlockSpec((None, 1, D), per_l),          # ln1_g
            pl.BlockSpec((None, 1, D), per_l),          # ln1_b
            pl.BlockSpec((None, D, 3 * D), per_l),      # qkv_w (bf16)
            pl.BlockSpec((None, 1, 3 * D), per_l),      # qkv_b
            pl.BlockSpec((None, D, D), per_l),          # proj_w (bf16)
            pl.BlockSpec((None, 1, D), per_l),          # proj_b
            pl.BlockSpec((None, 1, D), per_l),          # ln2_g
            pl.BlockSpec((None, 1, D), per_l),          # ln2_b
            pl.BlockSpec((None, D, Hd), per_l),         # fc1_w (bf16)
            pl.BlockSpec((None, 1, Hd), per_l),         # fc1_b
            pl.BlockSpec((None, Hd, D), per_l),         # fc2_w (bf16)
            pl.BlockSpec((None, 1, D), per_l),          # fc2_b
            pl.BlockSpec((1, D), const),                # lnf_g
            pl.BlockSpec((1, D), const),                # lnf_b
        ],
        out_specs=pl.BlockSpec((None, Sp, D), per_b),
        scratch_shapes=[pltpu.VMEM((Sp, D), jnp.float32)],
        compiler_params=pltpu.CompilerParams(
            dimension_semantics=("parallel", "arbitrary")),
    )(xp_pad, prep["emb"], prep["patch_w"], *prep["blocks"],
      prep["lnf_g"], prep["lnf_b"])


# ----------------------------------------------------------------------------
# Encoder2D forward
# ----------------------------------------------------------------------------
def encoder2d_forward(prep, x, cfg):
    B, C, H, W = x.shape
    ph, pw_ = cfg["patch_size"]
    nh_, nw_ = cfg["num_patch"]
    Hv, Wv = cfg["vit_image_size"]
    D = cfg["hidden_dim"]
    N = nh_ * nw_
    S, Sp, Kp, Kpad = _padded_dims(cfg)

    if (H, W) != (Hv, Wv):
        # ViT-internal resize to the adjusted image size (glue).
        # TODO(synk): torch F.interpolate(align_corners/antialias) not exactly matched.
        x = jax.image.resize(x, (B, C, Hv, Wv), method="bilinear")

    # Patch flatten (tiny XLA glue): row 0 reserved for CLS, rows 1..N = patches.
    xp = x.reshape(B, C, nh_, ph, nw_, pw_)
    xp = jnp.transpose(xp, (0, 2, 4, 1, 3, 5)).reshape(B, N, Kp)
    xp_pad = jnp.zeros((B, Sp, Kpad), jnp.float32)
    xp_pad = xp_pad.at[:, 1:1 + N, :Kp].set(xp)

    y = fused_encoder(xp_pad, prep, cfg)                     # (B, Sp, D)

    # Encoder2D epilogue: drop CLS + padding, permute, reshape to patch grid.
    tok = y[:, 1:1 + N, :]                                   # (B, N, D)
    out = jnp.transpose(tok, (0, 2, 1)).reshape(B, D, nh_, nw_)
    return out


# ----------------------------------------------------------------------------
# Deterministic parameter init (synthetic ViT) + one-time packing for the kernel
# ----------------------------------------------------------------------------
def init_params(key, cfg):
    D = cfg["hidden_dim"]
    C = cfg["in_chans"]
    ph, pw_ = cfg["patch_size"]
    nh_, nw_ = cfg["num_patch"]
    S = nh_ * nw_ + 1
    Hd = cfg["mlp_hidden"]

    def nrm(k, shape, std=0.02):
        return std * jax.random.normal(k, shape, jnp.float32)

    keys = iter(jax.random.split(key, 3 + 4 * cfg["depth"]))
    params = {
        "patch_w": nrm(next(keys), (C * ph * pw_, D)),
        "patch_b": jnp.zeros((D,), jnp.float32),
        "cls": nrm(next(keys), (1, 1, D)),
        "pos": nrm(next(keys), (1, S, D)),
        "lnf_g": jnp.ones((D,), jnp.float32),
        "lnf_b": jnp.zeros((D,), jnp.float32),
        "blocks": [],
    }
    for _ in range(cfg["depth"]):
        params["blocks"].append({
            "ln1_g": jnp.ones((D,), jnp.float32),
            "ln1_b": jnp.zeros((D,), jnp.float32),
            "qkv_w": nrm(next(keys), (D, 3 * D)),
            "qkv_b": jnp.zeros((3 * D,), jnp.float32),
            "proj_w": nrm(next(keys), (D, D)),
            "proj_b": jnp.zeros((D,), jnp.float32),
            "ln2_g": jnp.ones((D,), jnp.float32),
            "ln2_b": jnp.zeros((D,), jnp.float32),
            "fc1_w": nrm(next(keys), (D, Hd)),
            "fc1_b": jnp.zeros((Hd,), jnp.float32),
            "fc2_w": nrm(next(keys), (Hd, D)),
            "fc2_b": jnp.zeros((D,), jnp.float32),
        })
    return params


def prepare_fused_params(params, cfg):
    """One-time packing: stack per-block weights, pad patch weights, pre-cast bf16,
    and pre-fuse cls/pos-embed/patch-bias into a single additive (Sp, D) table."""
    D = cfg["hidden_dim"]
    Hd = cfg["mlp_hidden"]
    nh_, nw_ = cfg["num_patch"]
    N = nh_ * nw_
    S, Sp, Kp, Kpad = _padded_dims(cfg)

    patch_w = jnp.zeros((Kpad, D), jnp.float32).at[:Kp].set(params["patch_w"])
    patch_w = patch_w.astype(jnp.bfloat16)

    emb = jnp.zeros((Sp, D), jnp.float32)
    emb = emb.at[0].set(params["cls"][0, 0] + params["pos"][0, 0])
    emb = emb.at[1:1 + N].set(params["patch_b"][None, :] + params["pos"][0, 1:])

    def stack(name):
        return jnp.stack([blk[name] for blk in params["blocks"]])

    blocks = (
        stack("ln1_g").reshape(-1, 1, D),
        stack("ln1_b").reshape(-1, 1, D),
        stack("qkv_w").astype(jnp.bfloat16),
        stack("qkv_b").reshape(-1, 1, 3 * D),
        stack("proj_w").astype(jnp.bfloat16),
        stack("proj_b").reshape(-1, 1, D),
        stack("ln2_g").reshape(-1, 1, D),
        stack("ln2_b").reshape(-1, 1, D),
        stack("fc1_w").astype(jnp.bfloat16),
        stack("fc1_b").reshape(-1, 1, Hd),
        stack("fc2_w").astype(jnp.bfloat16),
        stack("fc2_b").reshape(-1, 1, D),
    )
    return {
        "patch_w": patch_w,
        "emb": emb,
        "blocks": blocks,
        "lnf_g": params["lnf_g"].reshape(1, D),
        "lnf_b": params["lnf_b"].reshape(1, D),
    }


# ----------------------------------------------------------------------------
if __name__ == "__main__":
    decode_depth = 2
    image_size = (36, 36)                      # small, square -> patch=4, grid 9x9
    patch_size, vit_image_size, num_patch = find_optimal_patch_and_size(
        image_size=image_size, depth=decode_depth)

    cfg = {
        "hidden_dim": 128,                     # synthetic ViT embed dim (small)
        "in_chans": 3,
        "num_heads": 4,
        "depth": 2,                            # synthetic transformer depth (small)
        "mlp_hidden": 256,
        "patch_size": tuple(patch_size),       # (4, 4)
        "vit_image_size": tuple(vit_image_size),  # (36, 36)
        "num_patch": tuple(num_patch),         # (9, 9)
    }

    key = jax.random.PRNGKey(0)
    pkey, xkey = jax.random.split(key)
    params = init_params(pkey, cfg)
    prep = prepare_fused_params(params, cfg)

    B = 2
    x = jax.random.normal(xkey, (B, cfg["in_chans"], image_size[0], image_size[1]),
                          jnp.float32)

    fwd = jax.jit(functools.partial(encoder2d_forward, cfg=cfg))
    out = fwd(prep, x)
    out = jax.block_until_ready(out)

    expected_shape = (B, cfg["hidden_dim"], cfg["num_patch"][0], cfg["num_patch"][1])
    assert out.shape == expected_shape, (out.shape, expected_shape)
    assert bool(jnp.all(jnp.isfinite(out)))
    print("KERNEL_OK")
</pallas_src>

<mosaic_0001>
module attributes {stable_mosaic.version = 11 : i64} {
  func.func @_encoder_block_kernel(%arg0: i32, %arg1: i32, %arg2: memref<1x128x128xf32, #tpu.memory_space<vmem>>, %arg3: memref<128x128xf32, #tpu.memory_space<vmem>>, %arg4: memref<128x128xbf16, #tpu.memory_space<vmem>>, %arg5: memref<1x1x128xf32, #tpu.memory_space<vmem>>, %arg6: memref<1x1x128xf32, #tpu.memory_space<vmem>>, %arg7: memref<1x128x384xbf16, #tpu.memory_space<vmem>>, %arg8: memref<1x1x384xf32, #tpu.memory_space<vmem>>, %arg9: memref<1x128x128xbf16, #tpu.memory_space<vmem>>, %arg10: memref<1x1x128xf32, #tpu.memory_space<vmem>>, %arg11: memref<1x1x128xf32, #tpu.memory_space<vmem>>, %arg12: memref<1x1x128xf32, #tpu.memory_space<vmem>>, %arg13: memref<1x128x256xbf16, #tpu.memory_space<vmem>>, %arg14: memref<1x1x256xf32, #tpu.memory_space<vmem>>, %arg15: memref<1x256x128xbf16, #tpu.memory_space<vmem>>, %arg16: memref<1x1x128xf32, #tpu.memory_space<vmem>>, %arg17: memref<1x128xf32, #tpu.memory_space<vmem>>, %arg18: memref<1x128xf32, #tpu.memory_space<vmem>>, %arg19: memref<1x128x128xf32, #tpu.memory_space<vmem>>, %arg20: memref<128x128xf32, #tpu.memory_space<vmem>>) attributes {dimension_semantics = [#tpu.dimension_semantics<parallel>, #tpu.dimension_semantics<arbitrary>], iteration_bounds = array<i64: 2, 2>, scalar_prefetch = 0 : i64, scratch_operands = 1 : i64, tpu.core_type = #tpu.core_type<tc>, window_params = [{transform_indices = @transform_0, window_bounds = array<i64: 1, 128, 128>}, {pipeline_mode = #tpu.pipeline_mode<synchronous>, transform_indices = @transform_1, window_bounds = array<i64: 128, 128>}, {pipeline_mode = #tpu.pipeline_mode<synchronous>, transform_indices = @transform_2, window_bounds = array<i64: 128, 128>}, {transform_indices = @transform_3, window_bounds = array<i64: 1, 1, 128>}, {transform_indices = @transform_4, window_bounds = array<i64: 1, 1, 128>}, {transform_indices = @transform_5, window_bounds = array<i64: 1, 128, 384>}, {transform_indices = @transform_6, window_bounds = array<i64: 1, 1, 384>}, {transform_indices = @transform_7, window_bounds = array<i64: 1, 128, 128>}, {transform_indices = @transform_8, window_bounds = array<i64: 1, 1, 128>}, {transform_indices = @transform_9, window_bounds = array<i64: 1, 1, 128>}, {transform_indices = @transform_10, window_bounds = array<i64: 1, 1, 128>}, {transform_indices = @transform_11, window_bounds = array<i64: 1, 128, 256>}, {transform_indices = @transform_12, window_bounds = array<i64: 1, 1, 256>}, {transform_indices = @transform_13, window_bounds = array<i64: 1, 256, 128>}, {transform_indices = @transform_14, window_bounds = array<i64: 1, 1, 128>}, {pipeline_mode = #tpu.pipeline_mode<synchronous>, transform_indices = @transform_15, window_bounds = array<i64: 1, 128>}, {pipeline_mode = #tpu.pipeline_mode<synchronous>, transform_indices = @transform_16, window_bounds = array<i64: 1, 128>}, {transform_indices = @transform_17, window_bounds = array<i64: 1, 128, 128>}]} {
    %c0_i32 = arith.constant 0 : i32
    %0 = arith.cmpi eq, %arg1, %c0_i32 : i32
    %1 = arith.extui %0 : i1 to i32
    %c0_i32_0 = arith.constant 0 : i32
    %2 = arith.cmpi ne, %1, %c0_i32_0 : i32
    scf.if %2 {
      %c0_82 = arith.constant 0 : index
      %c0_83 = arith.constant 0 : index
      %c0_84 = arith.constant 0 : index
      %188 = vector.load %arg2[%c0_82, %c0_83, %c0_84] : memref<1x128x128xf32, #tpu.memory_space<vmem>>, vector<1x128x128xf32>
      %189 = vector.shape_cast %188 : vector<1x128x128xf32> to vector<128x128xf32>
      %190 = arith.truncf %189 : vector<128x128xf32> to vector<128x128xbf16>
      %c0_85 = arith.constant 0 : index
      %c0_86 = arith.constant 0 : index
      %191 = vector.load %arg4[%c0_85, %c0_86] : memref<128x128xbf16, #tpu.memory_space<vmem>>, vector<128x128xbf16>
      %cst_87 = arith.constant dense<0.000000e+00> : vector<128x128xf32>
      %192 = tpu.matmul %190, %191, %cst_87 {dimension_numbers = #tpu.dot_dimension_numbers<[1], [0], [0], [1], [0, 0, 1, 1], [], []>} : vector<128x128xbf16>, vector<128x128xbf16>, vector<128x128xf32> -> vector<128x128xf32>
      %c0_88 = arith.constant 0 : index
      %c0_89 = arith.constant 0 : index
      %193 = vector.load %arg3[%c0_88, %c0_89] : memref<128x128xf32, #tpu.memory_space<vmem>>, vector<128x128xf32>
      %194 = arith.addf %192, %193 : vector<128x128xf32>
      %c0_90 = arith.constant 0 : index
      %c0_91 = arith.constant 0 : index
      %195 = vector.load %arg20[%c0_90, %c0_91] : memref<128x128xf32, #tpu.memory_space<vmem>>, vector<128x128xf32>
      tpu.vector_store %arg20[%c0_90, %c0_91], %194 {strides = array<i32>} : memref<128x128xf32, #tpu.memory_space<vmem>>, vector<128x128xf32>,
    } else {
    }
    %c0 = arith.constant 0 : index
    %c0_1 = arith.constant 0 : index
    %3 = vector.load %arg20[%c0, %c0_1] : memref<128x128xf32, #tpu.memory_space<vmem>>, vector<128x128xf32>
    %c0_2 = arith.constant 0 : index
    %c0_3 = arith.constant 0 : index
    %c0_4 = arith.constant 0 : index
    %4 = vector.load %arg5[%c0_2, %c0_3, %c0_4] : memref<1x1x128xf32, #tpu.memory_space<vmem>>, vector<1x1x128xf32>
    %5 = vector.shape_cast %4 : vector<1x1x128xf32> to vector<1x128xf32>
    %c0_5 = arith.constant 0 : index
    %c0_6 = arith.constant 0 : index
    %c0_7 = arith.constant 0 : index
    %6 = vector.load %arg6[%c0_5, %c0_6, %c0_7] : memref<1x1x128xf32, #tpu.memory_space<vmem>>, vector<1x1x128xf32>
    %7 = vector.shape_cast %6 : vector<1x1x128xf32> to vector<1x128xf32>
    %cst = arith.constant dense<0.000000e+00> : vector<128xf32>
    %8 = vector.multi_reduction <add>, %3, %cst [1] : vector<128x128xf32> to vector<128xf32>
    %9 = vector.shape_cast %8 : vector<128xf32> to vector<128x1xf32>
    %cst_8 = arith.constant 1.280000e+02 : f32
    %10 = vector.broadcast %cst_8 : f32 to vector<128x1xf32>
    %11 = arith.divf %9, %10 : vector<128x1xf32>
    %12 = vector.broadcast %11 : vector<128x1xf32> to vector<128x128xf32>
    %13 = arith.subf %3, %12 : vector<128x128xf32>
    %14 = arith.mulf %13, %13 : vector<128x128xf32>
    %cst_9 = arith.constant dense<0.000000e+00> : vector<128xf32>
    %15 = vector.multi_reduction <add>, %14, %cst_9 [1] : vector<128x128xf32> to vector<128xf32>
    %16 = vector.shape_cast %15 : vector<128xf32> to vector<128x1xf32>
    %cst_10 = arith.constant 1.280000e+02 : f32
    %17 = vector.broadcast %cst_10 : f32 to vector<128x1xf32>
    %18 = arith.divf %16, %17 : vector<128x1xf32>
    %cst_11 = arith.constant 9.99999997E-7 : f32
    %19 = vector.broadcast %cst_11 : f32 to vector<128x1xf32>
    %20 = arith.addf %18, %19 : vector<128x1xf32>
    %21 = math.rsqrt %20 : vector<128x1xf32>
    %22 = vector.broadcast %21 : vector<128x1xf32> to vector<128x128xf32>
    %23 = arith.mulf %13, %22 : vector<128x128xf32>
    %24 = vector.broadcast %5 : vector<1x128xf32> to vector<128x128xf32>
    %25 = arith.mulf %23, %24 : vector<128x128xf32>
    %26 = vector.broadcast %7 : vector<1x128xf32> to vector<128x128xf32>
    %27 = arith.addf %25, %26 : vector<128x128xf32>
    %28 = arith.truncf %27 : vector<128x128xf32> to vector<128x128xbf16>
    %c0_12 = arith.constant 0 : index
    %c0_13 = arith.constant 0 : index
    %c0_14 = arith.constant 0 : index
    %29 = vector.load %arg7[%c0_12, %c0_13, %c0_14] : memref<1x128x384xbf16, #tpu.memory_space<vmem>>, vector<1x128x384xbf16>
    %30 = vector.shape_cast %29 : vector<1x128x384xbf16> to vector<128x384xbf16>
    %cst_15 = arith.constant dense<0.000000e+00> : vector<128x384xf32>
    %31 = tpu.matmul %28, %30, %cst_15 {dimension_numbers = #tpu.dot_dimension_numbers<[1], [0], [0], [1], [0, 0, 1, 1], [], []>} : vector<128x128xbf16>, vector<128x384xbf16>, vector<128x384xf32> -> vector<128x384xf32>
    %c0_16 = arith.constant 0 : index
    %c0_17 = arith.constant 0 : index
    %c0_18 = arith.constant 0 : index
    %32 = vector.load %arg8[%c0_16, %c0_17, %c0_18] : memref<1x1x384xf32, #tpu.memory_space<vmem>>, vector<1x1x384xf32>
    %33 = vector.shape_cast %32 : vector<1x1x384xf32> to vector<1x384xf32>
    %34 = vector.broadcast %33 : vector<1x384xf32> to vector<128x384xf32>
    %35 = arith.addf %31, %34 : vector<128x384xf32>
    %36 = arith.truncf %35 : vector<128x384xf32> to vector<128x384xbf16>
    %37 = tpu.iota {dimensions = array<i32: 1>} : vector<128x128xi32>
    %c82_i32 = arith.constant 82 : i32
    %38 = vector.broadcast %c82_i32 : i32 to vector<128x128xi32>
    %39 = arith.cmpi slt, %37, %38 : vector<128x128xi32>
    %40 = vector.extract_strided_slice %36 {offsets = [0, 0], sizes = [128, 32], strides = [1, 1]} : vector<128x384xbf16> to vector<128x32xbf16>
    %41 = vector.extract_strided_slice %36 {offsets = [0, 128], sizes = [128, 32], strides = [1, 1]} : vector<128x384xbf16> to vector<128x32xbf16>
    %42 = vector.extract_strided_slice %36 {offsets = [0, 256], sizes = [128, 32], strides = [1, 1]} : vector<128x384xbf16> to vector<128x32xbf16>
    %cst_19 = arith.constant dense<0.000000e+00> : vector<128x128xf32>
    %43 = tpu.matmul %40, %41, %cst_19 {dimension_numbers = #tpu.dot_dimension_numbers<[1], [1], [0], [0], [0, 0, 1, 0], [], []>} : vector<128x32xbf16>, vector<128x32xbf16>, vector<128x128xf32> -> vector<128x128xf32>
    %cst_20 = arith.constant 0.176776692 : f32
    %44 = vector.broadcast %cst_20 : f32 to vector<128x128xf32>
    %45 = arith.mulf %43, %44 : vector<128x128xf32>
    %cst_21 = arith.constant -1.000000e+30 : f32
    %46 = vector.broadcast %cst_21 : f32 to vector<128x128xf32>
    %47 = arith.select %39, %45, %46 : vector<128x128xi1>, vector<128x128xf32>
    %cst_22 = arith.constant dense<0xFF800000> : vector<128xf32>
    %48 = vector.multi_reduction <maximumf>, %47, %cst_22 [1] : vector<128x128xf32> to vector<128xf32>
    %49 = vector.shape_cast %48 : vector<128xf32> to vector<128x1xf32>
    %50 = vector.broadcast %49 : vector<128x1xf32> to vector<128x128xf32>
    %51 = arith.subf %47, %50 : vector<128x128xf32>
    %52 = math.exp %51 : vector<128x128xf32>
    %cst_23 = arith.constant dense<0.000000e+00> : vector<128xf32>
    %53 = vector.multi_reduction <add>, %52, %cst_23 [1] : vector<128x128xf32> to vector<128xf32>
    %54 = vector.shape_cast %53 : vector<128xf32> to vector<128x1xf32>
    %55 = tpu.reciprocal %54 {approx = true} : vector<128x1xf32> -> vector<128x1xf32>
    %56 = vector.broadcast %55 : vector<128x1xf32> to vector<128x128xf32>
    %57 = arith.mulf %52, %56 : vector<128x128xf32>
    %58 = arith.truncf %57 : vector<128x128xf32> to vector<128x128xbf16>
    %cst_24 = arith.constant dense<0.000000e+00> : vector<128x32xf32>
    %59 = tpu.matmul %58, %42, %cst_24 {dimension_numbers = #tpu.dot_dimension_numbers<[1], [0], [0], [1], [0, 0, 1, 1], [], []>} : vector<128x128xbf16>, vector<128x32xbf16>, vector<128x32xf32> -> vector<128x32xf32>
    %60 = vector.extract_strided_slice %36 {offsets = [0, 32], sizes = [128, 32], strides = [1, 1]} : vector<128x384xbf16> to vector<128x32xbf16>
    %61 = vector.extract_strided_slice %36 {offsets = [0, 160], sizes = [128, 32], strides = [1, 1]} : vector<128x384xbf16> to vector<128x32xbf16>
    %62 = vector.extract_strided_slice %36 {offsets = [0, 288], sizes = [128, 32], strides = [1, 1]} : vector<128x384xbf16> to vector<128x32xbf16>
    %cst_25 = arith.constant dense<0.000000e+00> : vector<128x128xf32>
    %63 = tpu.matmul %60, %61, %cst_25 {dimension_numbers = #tpu.dot_dimension_numbers<[1], [1], [0], [0], [0, 0, 1, 0], [], []>} : vector<128x32xbf16>, vector<128x32xbf16>, vector<128x128xf32> -> vector<128x128xf32>
    %cst_26 = arith.constant 0.176776692 : f32
    %64 = vector.broadcast %cst_26 : f32 to vector<128x128xf32>
    %65 = arith.mulf %63, %64 : vector<128x128xf32>
    %cst_27 = arith.constant -1.000000e+30 : f32
    %66 = vector.broadcast %cst_27 : f32 to vector<128x128xf32>
    %67 = arith.select %39, %65, %66 : vector<128x128xi1>, vector<128x128xf32>
    %cst_28 = arith.constant dense<0xFF800000> : vector<128xf32>
    %68 = vector.multi_reduction <maximumf>, %67, %cst_28 [1] : vector<128x128xf32> to vector<128xf32>
    %69 = vector.shape_cast %68 : vector<128xf32> to vector<128x1xf32>
    %70 = vector.broadcast %69 : vector<128x1xf32> to vector<128x128xf32>
    %71 = arith.subf %67, %70 : vector<128x128xf32>
    %72 = math.exp %71 : vector<128x128xf32>
    %cst_29 = arith.constant dense<0.000000e+00> : vector<128xf32>
    %73 = vector.multi_reduction <add>, %72, %cst_29 [1] : vector<128x128xf32> to vector<128xf32>
    %74 = vector.shape_cast %73 : vector<128xf32> to vector<128x1xf32>
    %75 = tpu.reciprocal %74 {approx = true} : vector<128x1xf32> -> vector<128x1xf32>
    %76 = vector.broadcast %75 : vector<128x1xf32> to vector<128x128xf32>
    %77 = arith.mulf %72, %76 : vector<128x128xf32>
    %78 = arith.truncf %77 : vector<128x128xf32> to vector<128x128xbf16>
    %cst_30 = arith.constant dense<0.000000e+00> : vector<128x32xf32>
    %79 = tpu.matmul %78, %62, %cst_30 {dimension_numbers = #tpu.dot_dimension_numbers<[1], [0], [0], [1], [0, 0, 1, 1], [], []>} : vector<128x128xbf16>, vector<128x32xbf16>, vector<128x32xf32> -> vector<128x32xf32>
    %80 = vector.extract_strided_slice %36 {offsets = [0, 64], sizes = [128, 32], strides = [1, 1]} : vector<128x384xbf16> to vector<128x32xbf16>
    %81 = vector.extract_strided_slice %36 {offsets = [0, 192], sizes = [128, 32], strides = [1, 1]} : vector<128x384xbf16> to vector<128x32xbf16>
    %82 = vector.extract_strided_slice %36 {offsets = [0, 320], sizes = [128, 32], strides = [1, 1]} : vector<128x384xbf16> to vector<128x32xbf16>
    %cst_31 = arith.constant dense<0.000000e+00> : vector<128x128xf32>
    %83 = tpu.matmul %80, %81, %cst_31 {dimension_numbers = #tpu.dot_dimension_numbers<[1], [1], [0], [0], [0, 0, 1, 0], [], []>} : vector<128x32xbf16>, vector<128x32xbf16>, vector<128x128xf32> -> vector<128x128xf32>
    %cst_32 = arith.constant 0.176776692 : f32
    %84 = vector.broadcast %cst_32 : f32 to vector<128x128xf32>
    %85 = arith.mulf %83, %84 : vector<128x128xf32>
    %cst_33 = arith.constant -1.000000e+30 : f32
    %86 = vector.broadcast %cst_33 : f32 to vector<128x128xf32>
    %87 = arith.select %39, %85, %86 : vector<128x128xi1>, vector<128x128xf32>
    %cst_34 = arith.constant dense<0xFF800000> : vector<128xf32>
    %88 = vector.multi_reduction <maximumf>, %87, %cst_34 [1] : vector<128x128xf32> to vector<128xf32>
    %89 = vector.shape_cast %88 : vector<128xf32> to vector<128x1xf32>
    %90 = vector.broadcast %89 : vector<128x1xf32> to vector<128x128xf32>
    %91 = arith.subf %87, %90 : vector<128x128xf32>
    %92 = math.exp %91 : vector<128x128xf32>
    %cst_35 = arith.constant dense<0.000000e+00> : vector<128xf32>
    %93 = vector.multi_reduction <add>, %92, %cst_35 [1] : vector<128x128xf32> to vector<128xf32>
    %94 = vector.shape_cast %93 : vector<128xf32> to vector<128x1xf32>
    %95 = tpu.reciprocal %94 {approx = true} : vector<128x1xf32> -> vector<128x1xf32>
    %96 = vector.broadcast %95 : vector<128x1xf32> to vector<128x128xf32>
    %97 = arith.mulf %92, %96 : vector<128x128xf32>
    %98 = arith.truncf %97 : vector<128x128xf32> to vector<128x128xbf16>
    %cst_36 = arith.constant dense<0.000000e+00> : vector<128x32xf32>
    %99 = tpu.matmul %98, %82, %cst_36 {dimension_numbers = #tpu.dot_dimension_numbers<[1], [0], [0], [1], [0, 0, 1, 1], [], []>} : vector<128x128xbf16>, vector<128x32xbf16>, vector<128x32xf32> -> vector<128x32xf32>
    %100 = vector.extract_strided_slice %36 {offsets = [0, 96], sizes = [128, 32], strides = [1, 1]} : vector<128x384xbf16> to vector<128x32xbf16>
    %101 = vector.extract_strided_slice %36 {offsets = [0, 224], sizes = [128, 32], strides = [1, 1]} : vector<128x384xbf16> to vector<128x32xbf16>
    %102 = vector.extract_strided_slice %36 {offsets = [0, 352], sizes = [128, 32], strides = [1, 1]} : vector<128x384xbf16> to vector<128x32xbf16>
    %cst_37 = arith.constant dense<0.000000e+00> : vector<128x128xf32>
    %103 = tpu.matmul %100, %101, %cst_37 {dimension_numbers = #tpu.dot_dimension_numbers<[1], [1], [0], [0], [0, 0, 1, 0], [], []>} : vector<128x32xbf16>, vector<128x32xbf16>, vector<128x128xf32> -> vector<128x128xf32>
    %cst_38 = arith.constant 0.176776692 : f32
    %104 = vector.broadcast %cst_38 : f32 to vector<128x128xf32>
    %105 = arith.mulf %103, %104 : vector<128x128xf32>
    %cst_39 = arith.constant -1.000000e+30 : f32
    %106 = vector.broadcast %cst_39 : f32 to vector<128x128xf32>
    %107 = arith.select %39, %105, %106 : vector<128x128xi1>, vector<128x128xf32>
    %cst_40 = arith.constant dense<0xFF800000> : vector<128xf32>
    %108 = vector.multi_reduction <maximumf>, %107, %cst_40 [1] : vector<128x128xf32> to vector<128xf32>
    %109 = vector.shape_cast %108 : vector<128xf32> to vector<128x1xf32>
    %110 = vector.broadcast %109 : vector<128x1xf32> to vector<128x128xf32>
    %111 = arith.subf %107, %110 : vector<128x128xf32>
    %112 = math.exp %111 : vector<128x128xf32>
    %cst_41 = arith.constant dense<0.000000e+00> : vector<128xf32>
    %113 = vector.multi_reduction <add>, %112, %cst_41 [1] : vector<128x128xf32> to vector<128xf32>
    %114 = vector.shape_cast %113 : vector<128xf32> to vector<128x1xf32>
    %115 = tpu.reciprocal %114 {approx = true} : vector<128x1xf32> -> vector<128x1xf32>
    %116 = vector.broadcast %115 : vector<128x1xf32> to vector<128x128xf32>
    %117 = arith.mulf %112, %116 : vector<128x128xf32>
    %118 = arith.truncf %117 : vector<128x128xf32> to vector<128x128xbf16>
    %cst_42 = arith.constant dense<0.000000e+00> : vector<128x32xf32>
    %119 = tpu.matmul %118, %102, %cst_42 {dimension_numbers = #tpu.dot_dimension_numbers<[1], [0], [0], [1], [0, 0, 1, 1], [], []>} : vector<128x128xbf16>, vector<128x32xbf16>, vector<128x32xf32> -> vector<128x32xf32>
    %120 = tpu.concatenate %59, %79, %99, %119 in 1 : vector<128x32xf32>, vector<128x32xf32>, vector<128x32xf32>, vector<128x32xf32> -> vector<128x128xf32>
    %121 = arith.truncf %120 : vector<128x128xf32> to vector<128x128xbf16>
    %c0_43 = arith.constant 0 : index
    %c0_44 = arith.constant 0 : index
    %c0_45 = arith.constant 0 : index
    %122 = vector.load %arg9[%c0_43, %c0_44, %c0_45] : memref<1x128x128xbf16, #tpu.memory_space<vmem>>, vector<1x128x128xbf16>
    %123 = vector.shape_cast %122 : vector<1x128x128xbf16> to vector<128x128xbf16>
    %cst_46 = arith.constant dense<0.000000e+00> : vector<128x128xf32>
    %124 = tpu.matmul %121, %123, %cst_46 {dimension_numbers = #tpu.dot_dimension_numbers<[1], [0], [0], [1], [0, 0, 1, 1], [], []>} : vector<128x128xbf16>, vector<128x128xbf16>, vector<128x128xf32> -> vector<128x128xf32>
    %125 = arith.addf %3, %124 : vector<128x128xf32>
    %c0_47 = arith.constant 0 : index
    %c0_48 = arith.constant 0 : index
    %c0_49 = arith.constant 0 : index
    %126 = vector.load %arg10[%c0_47, %c0_48, %c0_49] : memref<1x1x128xf32, #tpu.memory_space<vmem>>, vector<1x1x128xf32>
    %127 = vector.shape_cast %126 : vector<1x1x128xf32> to vector<1x128xf32>
    %128 = vector.broadcast %127 : vector<1x128xf32> to vector<128x128xf32>
    %129 = arith.addf %125, %128 : vector<128x128xf32>
    %c0_50 = arith.constant 0 : index
    %c0_51 = arith.constant 0 : index
    %c0_52 = arith.constant 0 : index
    %130 = vector.load %arg11[%c0_50, %c0_51, %c0_52] : memref<1x1x128xf32, #tpu.memory_space<vmem>>, vector<1x1x128xf32>
    %131 = vector.shape_cast %130 : vector<1x1x128xf32> to vector<1x128xf32>
    %c0_53 = arith.constant 0 : index
    %c0_54 = arith.constant 0 : index
    %c0_55 = arith.constant 0 : index
    %132 = vector.load %arg12[%c0_53, %c0_54, %c0_55] : memref<1x1x128xf32, #tpu.memory_space<vmem>>, vector<1x1x128xf32>
    %133 = vector.shape_cast %132 : vector<1x1x128xf32> to vector<1x128xf32>
    %cst_56 = arith.constant dense<0.000000e+00> : vector<128xf32>
    %134 = vector.multi_reduction <add>, %129, %cst_56 [1] : vector<128x128xf32> to vector<128xf32>
    %135 = vector.shape_cast %134 : vector<128xf32> to vector<128x1xf32>
    %cst_57 = arith.constant 1.280000e+02 : f32
    %136 = vector.broadcast %cst_57 : f32 to vector<128x1xf32>
    %137 = arith.divf %135, %136 : vector<128x1xf32>
    %138 = vector.broadcast %137 : vector<128x1xf32> to vector<128x128xf32>
    %139 = arith.subf %129, %138 : vector<128x128xf32>
    %140 = arith.mulf %139, %139 : vector<128x128xf32>
    %cst_58 = arith.constant dense<0.000000e+00> : vector<128xf32>
    %141 = vector.multi_reduction <add>, %140, %cst_58 [1] : vector<128x128xf32> to vector<128xf32>
    %142 = vector.shape_cast %141 : vector<128xf32> to vector<128x1xf32>
    %cst_59 = arith.constant 1.280000e+02 : f32
    %143 = vector.broadcast %cst_59 : f32 to vector<128x1xf32>
    %144 = arith.divf %142, %143 : vector<128x1xf32>
    %cst_60 = arith.constant 9.99999997E-7 : f32
    %145 = vector.broadcast %cst_60 : f32 to vector<128x1xf32>
    %146 = arith.addf %144, %145 : vector<128x1xf32>
    %147 = math.rsqrt %146 : vector<128x1xf32>
    %148 = vector.broadcast %147 : vector<128x1xf32> to vector<128x128xf32>
    %149 = arith.mulf %139, %148 : vector<128x128xf32>
    %150 = vector.broadcast %131 : vector<1x128xf32> to vector<128x128xf32>
    %151 = arith.mulf %149, %150 : vector<128x128xf32>
    %152 = vector.broadcast %133 : vector<1x128xf32> to vector<128x128xf32>
    %153 = arith.addf %151, %152 : vector<128x128xf32>
    %154 = arith.truncf %153 : vector<128x128xf32> to vector<128x128xbf16>
    %c0_61 = arith.constant 0 : index
    %c0_62 = arith.constant 0 : index
    %c0_63 = arith.constant 0 : index
    %155 = vector.load %arg13[%c0_61, %c0_62, %c0_63] : memref<1x128x256xbf16, #tpu.memory_space<vmem>>, vector<1x128x256xbf16>
    %156 = vector.shape_cast %155 : vector<1x128x256xbf16> to vector<128x256xbf16>
    %cst_64 = arith.constant dense<0.000000e+00> : vector<128x256xf32>
    %157 = tpu.matmul %154, %156, %cst_64 {dimension_numbers = #tpu.dot_dimension_numbers<[1], [0], [0], [1], [0, 0, 1, 1], [], []>} : vector<128x128xbf16>, vector<128x256xbf16>, vector<128x256xf32> -> vector<128x256xf32>
    %c0_65 = arith.constant 0 : index
    %c0_66 = arith.constant 0 : index
    %c0_67 = arith.constant 0 : index
    %158 = vector.load %arg14[%c0_65, %c0_66, %c0_67] : memref<1x1x256xf32, #tpu.memory_space<vmem>>, vector<1x1x256xf32>
    %159 = vector.shape_cast %158 : vector<1x1x256xf32> to vector<1x256xf32>
    %160 = vector.broadcast %159 : vector<1x256xf32> to vector<128x256xf32>
    %161 = arith.addf %157, %160 : vector<128x256xf32>
    %162 = arith.mulf %161, %161 : vector<128x256xf32>
    %163 = arith.mulf %161, %162 : vector<128x256xf32>
    %cst_68 = arith.constant 4.471500e-02 : f32
    %164 = vector.broadcast %cst_68 : f32 to vector<128x256xf32>
    %165 = arith.mulf %164, %163 : vector<128x256xf32>
    %166 = arith.addf %161, %165 : vector<128x256xf32>
    %cst_69 = arith.constant 0.797884583 : f32
    %167 = vector.broadcast %cst_69 : f32 to vector<128x256xf32>
    %168 = arith.mulf %167, %166 : vector<128x256xf32>
    %169 = math.tanh %168 : vector<128x256xf32>
    %cst_70 = arith.constant 1.000000e+00 : f32
    %170 = vector.broadcast %cst_70 : f32 to vector<128x256xf32>
    %171 = arith.addf %170, %169 : vector<128x256xf32>
    %cst_71 = arith.constant 5.000000e-01 : f32
    %172 = vector.broadcast %cst_71 : f32 to vector<128x256xf32>
    %173 = arith.mulf %172, %171 : vector<128x256xf32>
    %174 = arith.mulf %161, %173 : vector<128x256xf32>
    %175 = arith.truncf %174 : vector<128x256xf32> to vector<128x256xbf16>
    %c0_72 = arith.constant 0 : index
    %c0_73 = arith.constant 0 : index
    %c0_74 = arith.constant 0 : index
    %176 = vector.load %arg15[%c0_72, %c0_73, %c0_74] : memref<1x256x128xbf16, #tpu.memory_space<vmem>>, vector<1x256x128xbf16>
    %177 = vector.shape_cast %176 : vector<1x256x128xbf16> to vector<256x128xbf16>
    %cst_75 = arith.constant dense<0.000000e+00> : vector<128x128xf32>
    %178 = tpu.matmul %175, %177, %cst_75 {dimension_numbers = #tpu.dot_dimension_numbers<[1], [0], [0], [1], [0, 0, 1, 1], [], []>} : vector<128x256xbf16>, vector<256x128xbf16>, vector<128x128xf32> -> vector<128x128xf32>
    %179 = arith.addf %129, %178 : vector<128x128xf32>
    %c0_76 = arith.constant 0 : index
    %c0_77 = arith.constant 0 : index
    %c0_78 = arith.constant 0 : index
    %180 = vector.load %arg16[%c0_76, %c0_77, %c0_78] : memref<1x1x128xf32, #tpu.memory_space<vmem>>, vector<1x1x128xf32>
    %181 = vector.shape_cast %180 : vector<1x1x128xf32> to vector<1x128xf32>
    %182 = vector.broadcast %181 : vector<1x128xf32> to vector<128x128xf32>
    %183 = arith.addf %179, %182 : vector<128x128xf32>
    %c0_79 = arith.constant 0 : index
    %c0_80 = arith.constant 0 : index
    %184 = vector.load %arg20[%c0_79, %c0_80] : memref<128x128xf32, #tpu.memory_space<vmem>>, vector<128x128xf32>
    tpu.vector_store %arg20[%c0_79, %c0_80], %183 {strides = array<i32>} : memref<128x128xf32, #tpu.memory_space<vmem>>, vector<128x128xf32>,
    %c1_i32 = arith.constant 1 : i32
    %185 = arith.cmpi eq, %arg1, %c1_i32 : i32
    %186 = arith.extui %185 : i1 to i32
    %c0_i32_81 = arith.constant 0 : i32
    %187 = arith.cmpi ne, %186, %c0_i32_81 : i32
    scf.if %187 {
      %c0_82 = arith.constant 0 : index
      %c0_83 = arith.constant 0 : index
      %188 = vector.load %arg17[%c0_82, %c0_83] : memref<1x128xf32, #tpu.memory_space<vmem>>, vector<1x128xf32>
      %c0_84 = arith.constant 0 : index
      %c0_85 = arith.constant 0 : index
      %189 = vector.load %arg18[%c0_84, %c0_85] : memref<1x128xf32, #tpu.memory_space<vmem>>, vector<1x128xf32>
      %cst_86 = arith.constant dense<0.000000e+00> : vector<128xf32>
      %190 = vector.multi_reduction <add>, %183, %cst_86 [1] : vector<128x128xf32> to vector<128xf32>
      %191 = vector.shape_cast %190 : vector<128xf32> to vector<128x1xf32>
      %cst_87 = arith.constant 1.280000e+02 : f32
      %192 = vector.broadcast %cst_87 : f32 to vector<128x1xf32>
      %193 = arith.divf %191, %192 : vector<128x1xf32>
      %194 = vector.broadcast %193 : vector<128x1xf32> to vector<128x128xf32>
      %195 = arith.subf %183, %194 : vector<128x128xf32>
      %196 = arith.mulf %195, %195 : vector<128x128xf32>
      %cst_88 = arith.constant dense<0.000000e+00> : vector<128xf32>
      %197 = vector.multi_reduction <add>, %196, %cst_88 [1] : vector<128x128xf32> to vector<128xf32>
      %198 = vector.shape_cast %197 : vector<128xf32> to vector<128x1xf32>
      %cst_89 = arith.constant 1.280000e+02 : f32
      %199 = vector.broadcast %cst_89 : f32 to vector<128x1xf32>
      %200 = arith.divf %198, %199 : vector<128x1xf32>
      %cst_90 = arith.constant 9.99999997E-7 : f32
      %201 = vector.broadcast %cst_90 : f32 to vector<128x1xf32>
      %202 = arith.addf %200, %201 : vector<128x1xf32>
      %203 = math.rsqrt %202 : vector<128x1xf32>
      %204 = vector.broadcast %203 : vector<128x1xf32> to vector<128x128xf32>
      %205 = arith.mulf %195, %204 : vector<128x128xf32>
      %206 = vector.broadcast %188 : vector<1x128xf32> to vector<128x128xf32>
      %207 = arith.mulf %205, %206 : vector<128x128xf32>
      %208 = vector.broadcast %189 : vector<1x128xf32> to vector<128x128xf32>
      %209 = arith.addf %207, %208 : vector<128x128xf32>
      %c0_91 = arith.constant 0 : index
      %c0_92 = arith.constant 0 : index
      %c0_93 = arith.constant 0 : index
      %210 = vector.load %arg19[%c0_91, %c0_92, %c0_93] : memref<1x128x128xf32, #tpu.memory_space<vmem>>, vector<1x128x128xf32>
      %211 = vector.shape_cast %210 : vector<1x128x128xf32> to vector<128x128xf32>
      %212 = vector.shape_cast %209 : vector<128x128xf32> to vector<1x128x128xf32>
      tpu.vector_store %arg19[%c0_91, %c0_92, %c0_93], %212 {strides = array<i32>} : memref<1x128x128xf32, #tpu.memory_space<vmem>>, vector<1x128x128xf32>,
    } else {
    }
    return
  }
  func.func @transform_0(%arg0: i32, %arg1: i32) -> (i32, i32, i32) {
    %c0_i32 = arith.constant 0 : i32
    %c0_i32_0 = arith.constant 0 : i32
    %c0_i32_1 = arith.constant 0 : i32
    return %arg0, %c0_i32, %c0_i32_0 : i32, i32, i32
  }
  func.func @transform_1(%arg0: i32, %arg1: i32) -> (i32, i32) {
    %c0_i32 = arith.constant 0 : i32
    %c0_i32_0 = arith.constant 0 : i32
    %c0_i32_1 = arith.constant 0 : i32
    return %c0_i32, %c0_i32_0 : i32, i32
  }
  func.func @transform_2(%arg0: i32, %arg1: i32) -> (i32, i32) {
    %c0_i32 = arith.constant 0 : i32
    %c0_i32_0 = arith.constant 0 : i32
    %c0_i32_1 = arith.constant 0 : i32
    return %c0_i32, %c0_i32_0 : i32, i32
  }
  func.func @transform_3(%arg0: i32, %arg1: i32) -> (i32, i32, i32) {
    %c0_i32 = arith.constant 0 : i32
    %c0_i32_0 = arith.constant 0 : i32
    %c0_i32_1 = arith.constant 0 : i32
    return %arg1, %c0_i32, %c0_i32_0 : i32, i32, i32
  }
  func.func @transform_4(%arg0: i32, %arg1: i32) -> (i32, i32, i32) {
    %c0_i32 = arith.constant 0 : i32
    %c0_i32_0 = arith.constant 0 : i32
    %c0_i32_1 = arith.constant 0 : i32
    return %arg1, %c0_i32, %c0_i32_0 : i32, i32, i32
  }
  func.func @transform_5(%arg0: i32, %arg1: i32) -> (i32, i32, i32) {
    %c0_i32 = arith.constant 0 : i32
    %c0_i32_0 = arith.constant 0 : i32
    %c0_i32_1 = arith.constant 0 : i32
    return %arg1, %c0_i32, %c0_i32_0 : i32, i32, i32
  }
  func.func @transform_6(%arg0: i32, %arg1: i32) -> (i32, i32, i32) {
    %c0_i32 = arith.constant 0 : i32
    %c0_i32_0 = arith.constant 0 : i32
    %c0_i32_1 = arith.constant 0 : i32
    return %arg1, %c0_i32, %c0_i32_0 : i32, i32, i32
  }
  func.func @transform_7(%arg0: i32, %arg1: i32) -> (i32, i32, i32) {
    %c0_i32 = arith.constant 0 : i32
    %c0_i32_0 = arith.constant 0 : i32
    %c0_i32_1 = arith.constant 0 : i32
    return %arg1, %c0_i32, %c0_i32_0 : i32, i32, i32
  }
  func.func @transform_8(%arg0: i32, %arg1: i32) -> (i32, i32, i32) {
    %c0_i32 = arith.constant 0 : i32
    %c0_i32_0 = arith.constant 0 : i32
    %c0_i32_1 = arith.constant 0 : i32
    return %arg1, %c0_i32, %c0_i32_0 : i32, i32, i32
  }
  func.func @transform_9(%arg0: i32, %arg1: i32) -> (i32, i32, i32) {
    %c0_i32 = arith.constant 0 : i32
    %c0_i32_0 = arith.constant 0 : i32
    %c0_i32_1 = arith.constant 0 : i32
    return %arg1, %c0_i32, %c0_i32_0 : i32, i32, i32
  }
  func.func @transform_10(%arg0: i32, %arg1: i32) -> (i32, i32, i32) {
    %c0_i32 = arith.constant 0 : i32
    %c0_i32_0 = arith.constant 0 : i32
    %c0_i32_1 = arith.constant 0 : i32
    return %arg1, %c0_i32, %c0_i32_0 : i32, i32, i32
  }
  func.func @transform_11(%arg0: i32, %arg1: i32) -> (i32, i32, i32) {
    %c0_i32 = arith.constant 0 : i32
    %c0_i32_0 = arith.constant 0 : i32
    %c0_i32_1 = arith.constant 0 : i32
    return %arg1, %c0_i32, %c0_i32_0 : i32, i32, i32
  }
  func.func @transform_12(%arg0: i32, %arg1: i32) -> (i32, i32, i32) {
    %c0_i32 = arith.constant 0 : i32
    %c0_i32_0 = arith.constant 0 : i32
    %c0_i32_1 = arith.constant 0 : i32
    return %arg1, %c0_i32, %c0_i32_0 : i32, i32, i32
  }
  func.func @transform_13(%arg0: i32, %arg1: i32) -> (i32, i32, i32) {
    %c0_i32 = arith.constant 0 : i32
    %c0_i32_0 = arith.constant 0 : i32
    %c0_i32_1 = arith.constant 0 : i32
    return %arg1, %c0_i32, %c0_i32_0 : i32, i32, i32
  }
  func.func @transform_14(%arg0: i32, %arg1: i32) -> (i32, i32, i32) {
    %c0_i32 = arith.constant 0 : i32
    %c0_i32_0 = arith.constant 0 : i32
    %c0_i32_1 = arith.constant 0 : i32
    return %arg1, %c0_i32, %c0_i32_0 : i32, i32, i32
  }
  func.func @transform_15(%arg0: i32, %arg1: i32) -> (i32, i32) {
    %c0_i32 = arith.constant 0 : i32
    %c0_i32_0 = arith.constant 0 : i32
    %c0_i32_1 = arith.constant 0 : i32
    return %c0_i32, %c0_i32_0 : i32, i32
  }
  func.func @transform_16(%arg0: i32, %arg1: i32) -> (i32, i32) {
    %c0_i32 = arith.constant 0 : i32
    %c0_i32_0 = arith.constant 0 : i32
    %c0_i32_1 = arith.constant 0 : i32
    return %c0_i32, %c0_i32_0 : i32, i32
  }
  func.func @transform_17(%arg0: i32, %arg1: i32) -> (i32, i32, i32) {
    %c0_i32 = arith.constant 0 : i32
    %c0_i32_0 = arith.constant 0 : i32
    %c0_i32_1 = arith.constant 0 : i32
    return %arg0, %c0_i32, %c0_i32_0 : i32, i32, i32
  }
}

</mosaic_0001>

<llo_original>
// kernel: encoder2d_forward.1
$region0: #{encoder2d_forward.1}
  #allocation0 [shape = 'u32[]', space=smem, size = 0x4, offset = 0x4, fixed_abs, tag = 'smem constant byte address 0x4 - core index']
  #allocation1 [shape = 'u32[72,128]{1,0:T(1,128)}', space=vmem, size = 0x9000, scoped, tag = 'internal scratch']
  #allocation2 [shape = 'f32[128,128]{1,0:T(8,128)}', space=vmem, size = 0x10000, scoped, tag = 'scratch operand']
  %s0 = inlined_call_operand.vmem [shape: f32[2,128,128], index: 0, kind: input, shape index: {}]
  %s1 = inlined_call_operand.vmem [shape: f32[128,128], index: 1, kind: input, shape index: {}]
  %s2 = inlined_call_operand.vmem [shape: bf16[128,128], index: 2, kind: input, shape index: {}]
  %s3 = inlined_call_operand.vmem [shape: f32[2,1,128], index: 3, kind: input, shape index: {}]
  %s4 = inlined_call_operand.vmem [shape: f32[2,1,128], index: 4, kind: input, shape index: {}]
  %s5 = inlined_call_operand.vmem [shape: bf16[2,128,384], index: 5, kind: input, shape index: {}]
  %s6 = inlined_call_operand.vmem [shape: f32[2,1,384], index: 6, kind: input, shape index: {}]
  %s7 = inlined_call_operand.vmem [shape: bf16[2,128,128], index: 7, kind: input, shape index: {}]
  %s8 = inlined_call_operand.vmem [shape: f32[2,1,128], index: 8, kind: input, shape index: {}]
  %s9 = inlined_call_operand.vmem [shape: f32[2,1,128], index: 9, kind: input, shape index: {}]
  %s10 = inlined_call_operand.vmem [shape: f32[2,1,128], index: 10, kind: input, shape index: {}]
  %s11 = inlined_call_operand.vmem [shape: bf16[2,128,256], index: 11, kind: input, shape index: {}]
  %s12 = inlined_call_operand.vmem [shape: f32[2,1,256], index: 12, kind: input, shape index: {}]
  %s13 = inlined_call_operand.vmem [shape: bf16[2,256,128], index: 13, kind: input, shape index: {}]
  %s14 = inlined_call_operand.vmem [shape: f32[2,1,128], index: 14, kind: input, shape index: {}]
  %s15 = inlined_call_operand.vmem [shape: f32[1,128], index: 15, kind: input, shape index: {}]
  %s16 = inlined_call_operand.vmem [shape: f32[1,128], index: 16, kind: input, shape index: {}]
  %s17 = inlined_call_operand.vmem [shape: f32[2,128,128], index: 17, kind: output, shape index: {}]
  %s18 = sld [smem:[#allocation0]]
  $region109: #{encoder2d_forward.1} parent=0
    _
  %s20 = ssub.s32 1, %s18
  %s21 = scalar_select 0, %s20, %s18
  loop: start=0, step=1, limit=6
  $region2: #{encoder2d_forward.1} parent=0 // loop_pre_header
    _
  $region3: #{encoder2d_forward.1} parent=0 // loop_header
    %s23 = sphi 0, %s27
    %p24 = scmp.ge.s32.totalorder %s23, 6
    %s30 = sphi 0, %s42
    %s31 = sphi 0, %s38
    %s32 = sphi 0, %s30
    %s33 = sphi 0, %s31
    %s34 = sphi 0, %s32
    %s35 = sphi 0, %s33
    %s45 = sphi 0, %s47
    %s48 = sphi 0, %s45
    %s49 = sphi 0, %s48
    %s65 = sphi 0, %s49
    %s69 = sphi 0, %s69
    %s71 = sphi 0, %s69
    %s72 = sphi 0, %s71
    %s86 = sphi 0, %s72
    %s90 = sphi 0, %s90
    %s92 = sphi 0, %s90
    %s93 = sphi 0, %s92
    %s107 = sphi 0, %s93
    %s113 = sphi 0, %s115
    %s116 = sphi 0, %s113
    %s117 = sphi 0, %s116
    %s133 = sphi 0, %s117
    %s139 = sphi 0, %s141
    %s142 = sphi 0, %s139
    %s143 = sphi 0, %s142
    %s159 = sphi 0, %s143
    %s165 = sphi 0, %s167
    %s168 = sphi 0, %s165
    %s169 = sphi 0, %s168
    %s185 = sphi 0, %s169
    %s191 = sphi 0, %s193
    %s194 = sphi 0, %s191
    %s195 = sphi 0, %s194
    %s211 = sphi 0, %s195
    %s217 = sphi 0, %s219
    %s220 = sphi 0, %s217
    %s221 = sphi 0, %s220
    %s237 = sphi 0, %s221
    %s243 = sphi 0, %s245
    %s246 = sphi 0, %s243
    %s247 = sphi 0, %s246
    %s263 = sphi 0, %s247
    %s269 = sphi 0, %s271
    %s272 = sphi 0, %s269
    %s273 = sphi 0, %s272
    %s289 = sphi 0, %s273
    %s295 = sphi 0, %s297
    %s298 = sphi 0, %s295
    %s299 = sphi 0, %s298
    %s315 = sphi 0, %s299
    %s321 = sphi 0, %s323
    %s324 = sphi 0, %s321
    %s325 = sphi 0, %s324
    %s341 = sphi 0, %s325
    %s347 = sphi 0, %s349
    %s350 = sphi 0, %s347
    %s351 = sphi 0, %s350
    %s367 = sphi 0, %s351
    %s373 = sphi 0, %s375
    %s376 = sphi 0, %s373
    %s377 = sphi 0, %s376
    %s393 = sphi 0, %s377
    %s399 = sphi 0, %s401
    %s402 = sphi 0, %s399
    %s403 = sphi 0, %s402
    %s419 = sphi 0, %s403
    %s423 = sphi 0, %s423
    %s425 = sphi 0, %s423
    %s426 = sphi 0, %s425
    %s440 = sphi 0, %s426
    %s444 = sphi 0, %s444
    %s446 = sphi 0, %s444
    %s447 = sphi 0, %s446
    %s461 = sphi 0, %s447
    %s467 = sphi 0, %s469
    %s470 = sphi 0, %s467
    %s471 = sphi 0, %s470
    %s487 = sphi 0, %s471
  $region4: #{encoder2d_forward.1} parent=0 // loop_header_branch
    %26 = sbr.rel (%p24) target = $region8
  $region5: #{encoder2d_forward.1} parent=0 // loop_body
    %s28 = ssub.s32 %s23, 1
    %s29 = ssub.s32 %s23, 2
    %s36 = sadd.s32 1, %s31
    %p37 = scmp.ge.s32.totalorder %s36, 2
    %s38 = scalar_select %p37, 0, %s36
    %s39 = sadd.s32 1, %s30
    %s40 = scalar_select %p37, %s39, %s30
    %p41 = scmp.ge.s32.totalorder %s40, 2
    %s42 = scalar_select %p41, 0, %s40
    %s43 = ssub.s32 %s30, %s42
    %p44 = scmp.eq.s32.totalorder %s43, 0
    %s46 = sadd.s32 %s45, 1
    %s47 = scalar_select %p44, %s45, %s46
    %p50 = pneg %p44
    %p51 = scmp.eq.s32.totalorder %s23, 3
    %p52 = por %p50, %p51
    %p53 = scmp.ne.s32.totalorder %s45, %s48
    %p54 = scmp.eq.s32.totalorder %s23, 0
    %p55 = por %p53, %p54
    %p56 = scmp.ne.s32.totalorder %s45, %s48
    %p57 = scmp.eq.s32.totalorder %s28, 3
    %p58 = por %p56, %p57
    %p59 = scmp.ne.s32.totalorder %s48, %s49
    %p60 = scmp.eq.s32.totalorder %s28, 0
    %p61 = por %p59, %p60
    %p62 = scmp.ne.s32.totalorder %s48, %s49
    %p63 = scmp.eq.s32.totalorder %s29, 3
    %p64 = por %p62, %p63
    %p66 = scmp.ne.s32.totalorder %s49, %s65
    %p67 = scmp.eq.s32.totalorder %s29, 0
    %p68 = por %p66, %p67
    %s70 = sadd.s32 %s69, 1
    %p73 = scmp.eq.s32.totalorder %s23, 3
    %p74 = scmp.ne.s32.totalorder %s69, %s71
    %p75 = scmp.eq.s32.totalorder %s23, 0
    %p76 = por %p74, %p75
    %p77 = scmp.ne.s32.totalorder %s69, %s71
    %p78 = scmp.eq.s32.totalorder %s28, 3
    %p79 = por %p77, %p78
    %p80 = scmp.ne.s32.totalorder %s71, %s72
    %p81 = scmp.eq.s32.totalorder %s28, 0
    %p82 = por %p80, %p81
    %p83 = scmp.ne.s32.totalorder %s71, %s72
    %p84 = scmp.eq.s32.totalorder %s29, 3
    %p85 = por %p83, %p84
    %p87 = scmp.ne.s32.totalorder %s72, %s86
    %p88 = scmp.eq.s32.totalorder %s29, 0
    %p89 = por %p87, %p88
    %s91 = sadd.s32 %s90, 1
    %p94 = scmp.eq.s32.totalorder %s23, 3
    %p95 = scmp.ne.s32.totalorder %s90, %s92
    %p96 = scmp.eq.s32.totalorder %s23, 0
    %p97 = por %p95, %p96
    %p98 = scmp.ne.s32.totalorder %s90, %s92
    %p99 = scmp.eq.s32.totalorder %s28, 3
    %p100 = por %p98, %p99
    %p101 = scmp.ne.s32.totalorder %s92, %s93
    %p102 = scmp.eq.s32.totalorder %s28, 0
    %p103 = por %p101, %p102
    %p104 = scmp.ne.s32.totalorder %s92, %s93
    %p105 = scmp.eq.s32.totalorder %s29, 3
    %p106 = por %p104, %p105
    %p108 = scmp.ne.s32.totalorder %s93, %s107
    %p109 = scmp.eq.s32.totalorder %s29, 0
    %p110 = por %p108, %p109
    %s111 = ssub.s32 %s31, %s38
    %p112 = scmp.eq.s32.totalorder %s111, 0
    %s114 = sadd.s32 %s113, 1
    %s115 = scalar_select %p112, %s113, %s114
    %p118 = pneg %p112
    %p119 = scmp.eq.s32.totalorder %s23, 3
    %p120 = por %p118, %p119
    %p121 = scmp.ne.s32.totalorder %s113, %s116
    %p122 = scmp.eq.s32.totalorder %s23, 0
    %p123 = por %p121, %p122
    %p124 = scmp.ne.s32.totalorder %s113, %s116
    %p125 = scmp.eq.s32.totalorder %s28, 3
    %p126 = por %p124, %p125
    %p127 = scmp.ne.s32.totalorder %s116, %s117
    %p128 = scmp.eq.s32.totalorder %s28, 0
    %p129 = por %p127, %p128
    %p130 = scmp.ne.s32.totalorder %s116, %s117
    %p131 = scmp.eq.s32.totalorder %s29, 3
    %p132 = por %p130, %p131
    %p134 = scmp.ne.s32.totalorder %s117, %s133
    %p135 = scmp.eq.s32.totalorder %s29, 0
    %p136 = por %p134, %p135
    %s137 = ssub.s32 %s31, %s38
    %p138 = scmp.eq.s32.totalorder %s137, 0
    %s140 = sadd.s32 %s139, 1
    %s141 = scalar_select %p138, %s139, %s140
    %p144 = pneg %p138
    %p145 = scmp.eq.s32.totalorder %s23, 3
    %p146 = por %p144, %p145
    %p147 = scmp.ne.s32.totalorder %s139, %s142
    %p148 = scmp.eq.s32.totalorder %s23, 0
    %p149 = por %p147, %p148
    %p150 = scmp.ne.s32.totalorder %s139, %s142
    %p151 = scmp.eq.s32.totalorder %s28, 3
    %p152 = por %p150, %p151
    %p153 = scmp.ne.s32.totalorder %s142, %s143
    %p154 = scmp.eq.s32.totalorder %s28, 0
    %p155 = por %p153, %p154
    %p156 = scmp.ne.s32.totalorder %s142, %s143
    %p157 = scmp.eq.s32.totalorder %s29, 3
    %p158 = por %p156, %p157
    %p160 = scmp.ne.s32.totalorder %s143, %s159
    %p161 = scmp.eq.s32.totalorder %s29, 0
    %p162 = por %p160, %p161
    %s163 = ssub.s32 %s31, %s38
    %p164 = scmp.eq.s32.totalorder %s163, 0
    %s166 = sadd.s32 %s165, 1
    %s167 = scalar_select %p164, %s165, %s166
    %p170 = pneg %p164
    %p171 = scmp.eq.s32.totalorder %s23, 3
    %p172 = por %p170, %p171
    %p173 = scmp.ne.s32.totalorder %s165, %s168
    %p174 = scmp.eq.s32.totalorder %s23, 0
    %p175 = por %p173, %p174
    %p176 = scmp.ne.s32.totalorder %s165, %s168
    %p177 = scmp.eq.s32.totalorder %s28, 3
    %p178 = por %p176, %p177
    %p179 = scmp.ne.s32.totalorder %s168, %s169
    %p180 = scmp.eq.s32.totalorder %s28, 0
    %p181 = por %p179, %p180
    %p182 = scmp.ne.s32.totalorder %s168, %s169
    %p183 = scmp.eq.s32.totalorder %s29, 3
    %p184 = por %p182, %p183
    %p186 = scmp.ne.s32.totalorder %s169, %s185
    %p187 = scmp.eq.s32.totalorder %s29, 0
    %p188 = por %p186, %p187
    %s189 = ssub.s32 %s31, %s38
    %p190 = scmp.eq.s32.totalorder %s189, 0
    %s192 = sadd.s32 %s191, 1
    %s193 = scalar_select %p190, %s191, %s192
    %p196 = pneg %p190
    %p197 = scmp.eq.s32.totalorder %s23, 3
    %p198 = por %p196, %p197
    %p199 = scmp.ne.s32.totalorder %s191, %s194
    %p200 = scmp.eq.s32.totalorder %s23, 0
    %p201 = por %p199, %p200
    %p202 = scmp.ne.s32.totalorder %s191, %s194
    %p203 = scmp.eq.s32.totalorder %s28, 3
    %p204 = por %p202, %p203
    %p205 = scmp.ne.s32.totalorder %s194, %s195
    %p206 = scmp.eq.s32.totalorder %s28, 0
    %p207 = por %p205, %p206
    %p208 = scmp.ne.s32.totalorder %s194, %s195
    %p209 = scmp.eq.s32.totalorder %s29, 3
    %p210 = por %p208, %p209
    %p212 = scmp.ne.s32.totalorder %s195, %s211
    %p213 = scmp.eq.s32.totalorder %s29, 0
    %p214 = por %p212, %p213
    %s215 = ssub.s32 %s31, %s38
    %p216 = scmp.eq.s32.totalorder %s215, 0
    %s218 = sadd.s32 %s217, 1
    %s219 = scalar_select %p216, %s217, %s218
    %p222 = pneg %p216
    %p223 = scmp.eq.s32.totalorder %s23, 3
    %p224 = por %p222, %p223
    %p225 = scmp.ne.s32.totalorder %s217, %s220
    %p226 = scmp.eq.s32.totalorder %s23, 0
    %p227 = por %p225, %p226
    %p228 = scmp.ne.s32.totalorder %s217, %s220
    %p229 = scmp.eq.s32.totalorder %s28, 3
    %p230 = por %p228, %p229
    %p231 = scmp.ne.s32.totalorder %s220, %s221
    %p232 = scmp.eq.s32.totalorder %s28, 0
    %p233 = por %p231, %p232
    %p234 = scmp.ne.s32.totalorder %s220, %s221
    %p235 = scmp.eq.s32.totalorder %s29, 3
    %p236 = por %p234, %p235
    %p238 = scmp.ne.s32.totalorder %s221, %s237
    %p239 = scmp.eq.s32.totalorder %s29, 0
    %p240 = por %p238, %p239
    %s241 = ssub.s32 %s31, %s38
    %p242 = scmp.eq.s32.totalorder %s241, 0
    %s244 = sadd.s32 %s243, 1
    %s245 = scalar_select %p242, %s243, %s244
    %p248 = pneg %p242
    %p249 = scmp.eq.s32.totalorder %s23, 3
    %p250 = por %p248, %p249
    %p251 = scmp.ne.s32.totalorder %s243, %s246
    %p252 = scmp.eq.s32.totalorder %s23, 0
    %p253 = por %p251, %p252
    %p254 = scmp.ne.s32.totalorder %s243, %s246
    %p255 = scmp.eq.s32.totalorder %s28, 3
    %p256 = por %p254, %p255
    %p257 = scmp.ne.s32.totalorder %s246, %s247
    %p258 = scmp.eq.s32.totalorder %s28, 0
    %p259 = por %p257, %p258
    %p260 = scmp.ne.s32.totalorder %s246, %s247
    %p261 = scmp.eq.s32.totalorder %s29, 3
    %p262 = por %p260, %p261
    %p264 = scmp.ne.s32.totalorder %s247, %s263
    %p265 = scmp.eq.s32.totalorder %s29, 0
    %p266 = por %p264, %p265
    %s267 = ssub.s32 %s31, %s38
    %p268 = scmp.eq.s32.totalorder %s267, 0
    %s270 = sadd.s32 %s269, 1
    %s271 = scalar_select %p268, %s269, %s270
    %p274 = pneg %p268
    %p275 = scmp.eq.s32.totalorder %s23, 3
    %p276 = por %p274, %p275
    %p277 = scmp.ne.s32.totalorder %s269, %s272
    %p278 = scmp.eq.s32.totalorder %s23, 0
    %p279 = por %p277, %p278
    %p280 = scmp.ne.s32.totalorder %s269, %s272
    %p281 = scmp.eq.s32.totalorder %s28, 3
    %p282 = por %p280, %p281
    %p283 = scmp.ne.s32.totalorder %s272, %s273
    %p284 = scmp.eq.s32.totalorder %s28, 0
    %p285 = por %p283, %p284
    %p286 = scmp.ne.s32.totalorder %s272, %s273
    %p287 = scmp.eq.s32.totalorder %s29, 3
    %p288 = por %p286, %p287
    %p290 = scmp.ne.s32.totalorder %s273, %s289
    %p291 = scmp.eq.s32.totalorder %s29, 0
    %p292 = por %p290, %p291
    %s293 = ssub.s32 %s31, %s38
    %p294 = scmp.eq.s32.totalorder %s293, 0
    %s296 = sadd.s32 %s295, 1
    %s297 = scalar_select %p294, %s295, %s296
    %p300 = pneg %p294
    %p301 = scmp.eq.s32.totalorder %s23, 3
    %p302 = por %p300, %p301
    %p303 = scmp.ne.s32.totalorder %s295, %s298
    %p304 = scmp.eq.s32.totalorder %s23, 0
    %p305 = por %p303, %p304
    %p306 = scmp.ne.s32.totalorder %s295, %s298
    %p307 = scmp.eq.s32.totalorder %s28, 3
    %p308 = por %p306, %p307
    %p309 = scmp.ne.s32.totalorder %s298, %s299
    %p310 = scmp.eq.s32.totalorder %s28, 0
    %p311 = por %p309, %p310
    %p312 = scmp.ne.s32.totalorder %s298, %s299
    %p313 = scmp.eq.s32.totalorder %s29, 3
    %p314 = por %p312, %p313
    %p316 = scmp.ne.s32.totalorder %s299, %s315
    %p317 = scmp.eq.s32.totalorder %s29, 0
    %p318 = por %p316, %p317
    %s319 = ssub.s32 %s31, %s38
    %p320 = scmp.eq.s32.totalorder %s319, 0
    %s322 = sadd.s32 %s321, 1
    %s323 = scalar_select %p320, %s321, %s322
    %p326 = pneg %p320
    %p327 = scmp.eq.s32.totalorder %s23, 3
    %p328 = por %p326, %p327
    %p329 = scmp.ne.s32.totalorder %s321, %s324
    %p330 = scmp.eq.s32.totalorder %s23, 0
    %p331 = por %p329, %p330
    %p332 = scmp.ne.s32.totalorder %s321, %s324
    %p333 = scmp.eq.s32.totalorder %s28, 3
    %p334 = por %p332, %p333
    %p335 = scmp.ne.s32.totalorder %s324, %s325
    %p336 = scmp.eq.s32.totalorder %s28, 0
    %p337 = por %p335, %p336
    %p338 = scmp.ne.s32.totalorder %s324, %s325
    %p339 = scmp.eq.s32.totalorder %s29, 3
    %p340 = por %p338, %p339
    %p342 = scmp.ne.s32.totalorder %s325, %s341
    %p343 = scmp.eq.s32.totalorder %s29, 0
    %p344 = por %p342, %p343
    %s345 = ssub.s32 %s31, %s38
    %p346 = scmp.eq.s32.totalorder %s345, 0
    %s348 = sadd.s32 %s347, 1
    %s349 = scalar_select %p346, %s347, %s348
    %p352 = pneg %p346
    %p353 = scmp.eq.s32.totalorder %s23, 3
    %p354 = por %p352, %p353
    %p355 = scmp.ne.s32.totalorder %s347, %s350
    %p356 = scmp.eq.s32.totalorder %s23, 0
    %p357 = por %p355, %p356
    %p358 = scmp.ne.s32.totalorder %s347, %s350
    %p359 = scmp.eq.s32.totalorder %s28, 3
    %p360 = por %p358, %p359
    %p361 = scmp.ne.s32.totalorder %s350, %s351
    %p362 = scmp.eq.s32.totalorder %s28, 0
    %p363 = por %p361, %p362
    %p364 = scmp.ne.s32.totalorder %s350, %s351
    %p365 = scmp.eq.s32.totalorder %s29, 3
    %p366 = por %p364, %p365
    %p368 = scmp.ne.s32.totalorder %s351, %s367
    %p369 = scmp.eq.s32.totalorder %s29, 0
    %p370 = por %p368, %p369
    %s371 = ssub.s32 %s31, %s38
    %p372 = scmp.eq.s32.totalorder %s371, 0
    %s374 = sadd.s32 %s373, 1
    %s375 = scalar_select %p372, %s373, %s374
    %p378 = pneg %p372
    %p379 = scmp.eq.s32.totalorder %s23, 3
    %p380 = por %p378, %p379
    %p381 = scmp.ne.s32.totalorder %s373, %s376
    %p382 = scmp.eq.s32.totalorder %s23, 0
    %p383 = por %p381, %p382
    %p384 = scmp.ne.s32.totalorder %s373, %s376
    %p385 = scmp.eq.s32.totalorder %s28, 3
    %p386 = por %p384, %p385
    %p387 = scmp.ne.s32.totalorder %s376, %s377
    %p388 = scmp.eq.s32.totalorder %s28, 0
    %p389 = por %p387, %p388
    %p390 = scmp.ne.s32.totalorder %s376, %s377
    %p391 = scmp.eq.s32.totalorder %s29, 3
    %p392 = por %p390, %p391
    %p394 = scmp.ne.s32.totalorder %s377, %s393
    %p395 = scmp.eq.s32.totalorder %s29, 0
    %p396 = por %p394, %p395
    %s397 = ssub.s32 %s31, %s38
    %p398 = scmp.eq.s32.totalorder %s397, 0
    %s400 = sadd.s32 %s399, 1
    %s401 = scalar_select %p398, %s399, %s400
    %p404 = pneg %p398
    %p405 = scmp.eq.s32.totalorder %s23, 3
    %p406 = por %p404, %p405
    %p407 = scmp.ne.s32.totalorder %s399, %s402
    %p408 = scmp.eq.s32.totalorder %s23, 0
    %p409 = por %p407, %p408
    %p410 = scmp.ne.s32.totalorder %s399, %s402
    %p411 = scmp.eq.s32.totalorder %s28, 3
    %p412 = por %p410, %p411
    %p413 = scmp.ne.s32.totalorder %s402, %s403
    %p414 = scmp.eq.s32.totalorder %s28, 0
    %p415 = por %p413, %p414
    %p416 = scmp.ne.s32.totalorder %s402, %s403
    %p417 = scmp.eq.s32.totalorder %s29, 3
    %p418 = por %p416, %p417
    %p420 = scmp.ne.s32.totalorder %s403, %s419
    %p421 = scmp.eq.s32.totalorder %s29, 0
    %p422 = por %p420, %p421
    %s424 = sadd.s32 %s423, 1
    %p427 = scmp.eq.s32.totalorder %s23, 3
    %p428 = scmp.ne.s32.totalorder %s423, %s425
    %p429 = scmp.eq.s32.totalorder %s23, 0
    %p430 = por %p428, %p429
    %p431 = scmp.ne.s32.totalorder %s423, %s425
    %p432 = scmp.eq.s32.totalorder %s28, 3
    %p433 = por %p431, %p432
    %p434 = scmp.ne.s32.totalorder %s425, %s426
    %p435 = scmp.eq.s32.totalorder %s28, 0
    %p436 = por %p434, %p435
    %p437 = scmp.ne.s32.totalorder %s425, %s426
    %p438 = scmp.eq.s32.totalorder %s29, 3
    %p439 = por %p437, %p438
    %p441 = scmp.ne.s32.totalorder %s426, %s440
    %p442 = scmp.eq.s32.totalorder %s29, 0
    %p443 = por %p441, %p442
    %s445 = sadd.s32 %s444, 1
    %p448 = scmp.eq.s32.totalorder %s23, 3
    %p449 = scmp.ne.s32.totalorder %s444, %s446
    %p450 = scmp.eq.s32.totalorder %s23, 0
    %p451 = por %p449, %p450
    %p452 = scmp.ne.s32.totalorder %s444, %s446
    %p453 = scmp.eq.s32.totalorder %s28, 3
    %p454 = por %p452, %p453
    %p455 = scmp.ne.s32.totalorder %s446, %s447
    %p456 = scmp.eq.s32.totalorder %s28, 0
    %p457 = por %p455, %p456
    %p458 = scmp.ne.s32.totalorder %s446, %s447
    %p459 = scmp.eq.s32.totalorder %s29, 3
    %p460 = por %p458, %p459
    %p462 = scmp.ne.s32.totalorder %s447, %s461
    %p463 = scmp.eq.s32.totalorder %s29, 0
    %p464 = por %p462, %p463
    %s465 = ssub.s32 %s30, %s42
    %p466 = scmp.eq.s32.totalorder %s465, 0
    %s468 = sadd.s32 %s467, 1
    %s469 = scalar_select %p466, %s467, %s468
    %p472 = pneg %p466
    %p473 = scmp.eq.s32.totalorder %s23, 3
    %p474 = por %p472, %p473
    %p475 = scmp.ne.s32.totalorder %s467, %s470
    %p476 = scmp.eq.s32.totalorder %s23, 0
    %p477 = por %p475, %p476
    %p478 = scmp.ne.s32.totalorder %s467, %s470
    %p479 = scmp.eq.s32.totalorder %s28, 3
    %p480 = por %p478, %p479
    %p481 = scmp.ne.s32.totalorder %s470, %s471
    %p482 = scmp.eq.s32.totalorder %s28, 0
    %p483 = por %p481, %p482
    %p484 = scmp.ne.s32.totalorder %s470, %s471
    %p485 = scmp.eq.s32.totalorder %s29, 3
    %p486 = por %p484, %p485
    %p488 = scmp.ne.s32.totalorder %s471, %s487
    %p489 = scmp.eq.s32.totalorder %s29, 0
    %p490 = por %p488, %p489
    %p491 = scmp.le.s32.totalorder 1, %s23
    %p492 = scmp.lt.s32.totalorder %s23, 5
    %p493 = pnand %p491, %p492
    %p494 = pneg %p493
    // Predicated region
    $region9: #{encoder2d_forward.1} parent=5 // pred_check
      _
    $region10: #{encoder2d_forward.1} parent=5 // pred_check_branch
      %496 = sbr.rel (%p493) target = $region12
    $region11: #{encoder2d_forward.1} parent=5 // pred_region
      %s497 = ssub.s32 %s23, 1
      // Predicated region
      $region13: #{encoder2d_forward.1} parent=11 // pred_check
        %p498 = pneg %p82
      $region14: #{encoder2d_forward.1} parent=11 // pred_check_branch
        %500 = sbr.rel (%p498) target = $region16
      $region15: #{encoder2d_forward.1} parent=11 // pred_region
        _
      $region16: #{encoder2d_forward.1} parent=11 // pred_fallthru
        _
      // Predicated region
      $region17: #{encoder2d_forward.1} parent=11 // pred_check
        %p501 = pneg %p103
      $region18: #{encoder2d_forward.1} parent=11 // pred_check_branch
        %503 = sbr.rel (%p501) target = $region20
      $region19: #{encoder2d_forward.1} parent=11 // pred_region
        _
      $region20: #{encoder2d_forward.1} parent=11 // pred_fallthru
        _
      // Predicated region
      $region21: #{encoder2d_forward.1} parent=11 // pred_check
        %p504 = pneg %p436
      $region22: #{encoder2d_forward.1} parent=11 // pred_check_branch
        %506 = sbr.rel (%p504) target = $region24
      $region23: #{encoder2d_forward.1} parent=11 // pred_region
        _
      $region24: #{encoder2d_forward.1} parent=11 // pred_fallthru
        _
      // Predicated region
      $region25: #{encoder2d_forward.1} parent=11 // pred_check
        %p507 = pneg %p457
      $region26: #{encoder2d_forward.1} parent=11 // pred_check_branch
        %509 = sbr.rel (%p507) target = $region28
      $region27: #{encoder2d_forward.1} parent=11 // pred_region
        _
      $region28: #{encoder2d_forward.1} parent=11 // pred_fallthru
        _
    $region12: #{encoder2d_forward.1} parent=5 // pred_fallthru
      _
    %p510 = scmp.lt.s32.totalorder %s23, 4
    // Predicated region
    $region29: #{encoder2d_forward.1} parent=5 // pred_check
      %p511 = pneg %p510
    $region30: #{encoder2d_forward.1} parent=5 // pred_check_branch
      %513 = sbr.rel (%p511) target = $region32
    $region31: #{encoder2d_forward.1} parent=5 // pred_region
      // Predicated region
      $region33: #{encoder2d_forward.1} parent=31 // pred_check
        %p514 = pneg %p55
      $region34: #{encoder2d_forward.1} parent=31 // pred_check_branch
        %516 = sbr.rel (%p514) target = $region36
      $region35: #{encoder2d_forward.1} parent=31 // pred_region
        %p517 = scmp.lt.s32.totalorder %s30, 1
        %s518 = scalar_select %p517, %s30, 1
        %s519 = smul.addr %s518, 16
        %s520 = smul.addr %s519, 8
        %s521 = scalar_lea.vmem %s0, %s520
      $region36: #{encoder2d_forward.1} parent=31 // pred_fallthru
        _
      // Predicated region
      $region37: #{encoder2d_forward.1} parent=31 // pred_check
        %p522 = pneg %p123
      $region38: #{encoder2d_forward.1} parent=31 // pred_check_branch
        %524 = sbr.rel (%p522) target = $region40
      $region39: #{encoder2d_forward.1} parent=31 // pred_region
        %p525 = scmp.lt.s32.totalorder %s31, 1
        %s526 = scalar_select %p525, %s31, 1
        %s527 = scalar_lea.vmem %s3, %s526
      $region40: #{encoder2d_forward.1} parent=31 // pred_fallthru
        _
      // Predicated region
      $region41: #{encoder2d_forward.1} parent=31 // pred_check
        %p528 = pneg %p149
      $region42: #{encoder2d_forward.1} parent=31 // pred_check_branch
        %530 = sbr.rel (%p528) target = $region44
      $region43: #{encoder2d_forward.1} parent=31 // pred_region
        %p531 = scmp.lt.s32.totalorder %s31, 1
        %s532 = scalar_select %p531, %s31, 1
        %s533 = scalar_lea.vmem %s4, %s532
      $region44: #{encoder2d_forward.1} parent=31 // pred_fallthru
        _
      // Predicated region
      $region45: #{encoder2d_forward.1} parent=31 // pred_check
        %p534 = pneg %p175
      $region46: #{encoder2d_forward.1} parent=31 // pred_check_branch
        %536 = sbr.rel (%p534) target = $region48
      $region47: #{encoder2d_forward.1} parent=31 // pred_region
        %p537 = scmp.lt.s32.totalorder %s31, 1
        %s538 = scalar_select %p537, %s31, 1
        %s539 = smul.addr %s538, 48
        %s540 = smul.addr %s539, 4
        %s541 = scalar_lea.vmem %s5, %s540
      $region48: #{encoder2d_forward.1} parent=31 // pred_fallthru
        _
      // Predicated region
      $region49: #{encoder2d_forward.1} parent=31 // pred_check
        %p542 = pneg %p201
      $region50: #{encoder2d_forward.1} parent=31 // pred_check_branch
        %544 = sbr.rel (%p542) target = $region52
      $region51: #{encoder2d_forward.1} parent=31 // pred_region
        %p545 = scmp.lt.s32.totalorder %s31, 1
        %s546 = scalar_select %p545, %s31, 1
        %s547 = smul.addr %s546, 3
        %s548 = scalar_lea.vmem %s6, %s547
      $region52: #{encoder2d_forward.1} parent=31 // pred_fallthru
        _
      // Predicated region
      $region53: #{encoder2d_forward.1} parent=31 // pred_check
        %p549 = pneg %p227
      $region54: #{encoder2d_forward.1} parent=31 // pred_check_branch
        %551 = sbr.rel (%p549) target = $region56
      $region55: #{encoder2d_forward.1} parent=31 // pred_region
        %p552 = scmp.lt.s32.totalorder %s31, 1
        %s553 = scalar_select %p552, %s31, 1
        %s554 = smul.addr %s553, 16
        %s555 = smul.addr %s554, 4
        %s556 = scalar_lea.vmem %s7, %s555
      $region56: #{encoder2d_forward.1} parent=31 // pred_fallthru
        _
      // Predicated region
      $region57: #{encoder2d_forward.1} parent=31 // pred_check
        %p557 = pneg %p253
      $region58: #{encoder2d_forward.1} parent=31 // pred_check_branch
        %559 = sbr.rel (%p557) target = $region60
      $region59: #{encoder2d_forward.1} parent=31 // pred_region
        %p560 = scmp.lt.s32.totalorder %s31, 1
        %s561 = scalar_select %p560, %s31, 1
        %s562 = scalar_lea.vmem %s8, %s561
      $region60: #{encoder2d_forward.1} parent=31 // pred_fallthru
        _
      // Predicated region
      $region61: #{encoder2d_forward.1} parent=31 // pred_check
        %p563 = pneg %p279
      $region62: #{encoder2d_forward.1} parent=31 // pred_check_branch
        %565 = sbr.rel (%p563) target = $region64
      $region63: #{encoder2d_forward.1} parent=31 // pred_region
        %p566 = scmp.lt.s32.totalorder %s31, 1
        %s567 = scalar_select %p566, %s31, 1
        %s568 = scalar_lea.vmem %s9, %s567
      $region64: #{encoder2d_forward.1} parent=31 // pred_fallthru
        _
      // Predicated region
      $region65: #{encoder2d_forward.1} parent=31 // pred_check
        %p569 = pneg %p305
      $region66: #{encoder2d_forward.1} parent=31 // pred_check_branch
        %571 = sbr.rel (%p569) target = $region68
      $region67: #{encoder2d_forward.1} parent=31 // pred_region
        %p572 = scmp.lt.s32.totalorder %s31, 1
        %s573 = scalar_select %p572, %s31, 1
        %s574 = scalar_lea.vmem %s10, %s573
      $region68: #{encoder2d_forward.1} parent=31 // pred_fallthru
        _
      // Predicated region
      $region69: #{encoder2d_forward.1} parent=31 // pred_check
        %p575 = pneg %p331
      $region70: #{encoder2d_forward.1} parent=31 // pred_check_branch
        %577 = sbr.rel (%p575) target = $region72
      $region71: #{encoder2d_forward.1} parent=31 // pred_region
        %p578 = scmp.lt.s32.totalorder %s31, 1
        %s579 = scalar_select %p578, %s31, 1
        %s580 = smul.addr %s579, 32
        %s581 = smul.addr %s580, 4
        %s582 = scalar_lea.vmem %s11, %s581
      $region72: #{encoder2d_forward.1} parent=31 // pred_fallthru
        _
      // Predicated region
      $region73: #{encoder2d_forward.1} parent=31 // pred_check
        %p583 = pneg %p357
      $region74: #{encoder2d_forward.1} parent=31 // pred_check_branch
        %585 = sbr.rel (%p583) target = $region76
      $region75: #{encoder2d_forward.1} parent=31 // pred_region
        %p586 = scmp.lt.s32.totalorder %s31, 1
        %s587 = scalar_select %p586, %s31, 1
        %s588 = smul.addr %s587, 2
        %s589 = scalar_lea.vmem %s12, %s588
      $region76: #{encoder2d_forward.1} parent=31 // pred_fallthru
        _
      // Predicated region
      $region77: #{encoder2d_forward.1} parent=31 // pred_check
        %p590 = pneg %p383
      $region78: #{encoder2d_forward.1} parent=31 // pred_check_branch
        %592 = sbr.rel (%p590) target = $region80
      $region79: #{encoder2d_forward.1} parent=31 // pred_region
        %p593 = scmp.lt.s32.totalorder %s31, 1
        %s594 = scalar_select %p593, %s31, 1
        %s595 = smul.addr %s594, 32
        %s596 = smul.addr %s595, 4
        %s597 = scalar_lea.vmem %s13, %s596
      $region80: #{encoder2d_forward.1} parent=31 // pred_fallthru
        _
      // Predicated region
      $region81: #{encoder2d_forward.1} parent=31 // pred_check
        %p598 = pneg %p409
      $region82: #{encoder2d_forward.1} parent=31 // pred_check_branch
        %600 = sbr.rel (%p598) target = $region84
      $region83: #{encoder2d_forward.1} parent=31 // pred_region
        %p601 = scmp.lt.s32.totalorder %s31, 1
        %s602 = scalar_select %p601, %s31, 1
        %s603 = scalar_lea.vmem %s14, %s602
      $region84: #{encoder2d_forward.1} parent=31 // pred_fallthru
        _
    $region32: #{encoder2d_forward.1} parent=5 // pred_fallthru
      _
    %p604 = scmp.le.s32.totalorder 1, %s23
    %p605 = scmp.lt.s32.totalorder %s23, 5
    %p606 = pnand %p604, %p605
    %p607 = pneg %p606
    // Predicated region
    $region85: #{encoder2d_forward.1} parent=5 // pred_check
      _
    $region86: #{encoder2d_forward.1} parent=5 // pred_check_branch
      %609 = sbr.rel (%p606) target = $region88
    $region87: #{encoder2d_forward.1} parent=5 // pred_region
      %s610 = ssub.s32 %s23, 1
      %p611 = scmp.lt.s32.totalorder %s32, 1
      %s612 = scalar_select %p611, %s32, 1
      %s613 = smul.addr %s612, 16
      %s614 = smul.addr %s613, 8
      %s615 = scalar_lea.vmem %s0, %s614
      %p616 = pneg %p61
      %p617 = pneg %p58
      %p618 = pneg %p82
      %p619 = pneg %p79
      %p620 = pneg %p103
      %p621 = pneg %p100
      %p622 = scmp.lt.s32.totalorder %s33, 1
      %s623 = scalar_select %p622, %s33, 1
      %s624 = scalar_lea.vmem %s3, %s623
      %p625 = pneg %p129
      %p626 = pneg %p126
      %p627 = scmp.lt.s32.totalorder %s33, 1
      %s628 = scalar_select %p627, %s33, 1
      %s629 = scalar_lea.vmem %s4, %s628
      %p630 = pneg %p155
      %p631 = pneg %p152
      %p632 = scmp.lt.s32.totalorder %s33, 1
      %s633 = scalar_select %p632, %s33, 1
      %s634 = smul.addr %s633, 48
      %s635 = smul.addr %s634, 4
      %s636 = scalar_lea.vmem %s5, %s635
      %p637 = pneg %p181
      %p638 = pneg %p178
      %p639 = scmp.lt.s32.totalorder %s33, 1
      %s640 = scalar_select %p639, %s33, 1
      %s641 = smul.addr %s640, 3
      %s642 = scalar_lea.vmem %s6, %s641
      %p643 = pneg %p207
      %p644 = pneg %p204
      %p645 = scmp.lt.s32.totalorder %s33, 1
      %s646 = scalar_select %p645, %s33, 1
      %s647 = smul.addr %s646, 16
      %s648 = smul.addr %s647, 4
      %s649 = scalar_lea.vmem %s7, %s648
      %p650 = pneg %p233
      %p651 = pneg %p230
      %p652 = scmp.lt.s32.totalorder %s33, 1
      %s653 = scalar_select %p652, %s33, 1
      %s654 = scalar_lea.vmem %s8, %s653
      %p655 = pneg %p259
      %p656 = pneg %p256
      %p657 = scmp.lt.s32.totalorder %s33, 1
      %s658 = scalar_select %p657, %s33, 1
      %s659 = scalar_lea.vmem %s9, %s658
      %p660 = pneg %p285
      %p661 = pneg %p282
      %p662 = scmp.lt.s32.totalorder %s33, 1
      %s663 = scalar_select %p662, %s33, 1
      %s664 = scalar_lea.vmem %s10, %s663
      %p665 = pneg %p311
      %p666 = pneg %p308
      %p667 = scmp.lt.s32.totalorder %s33, 1
      %s668 = scalar_select %p667, %s33, 1
      %s669 = smul.addr %s668, 32
      %s670 = smul.addr %s669, 4
      %s671 = scalar_lea.vmem %s11, %s670
      %p672 = pneg %p337
      %p673 = pneg %p334
      %p674 = scmp.lt.s32.totalorder %s33, 1
      %s675 = scalar_select %p674, %s33, 1
      %s676 = smul.addr %s675, 2
      %s677 = scalar_lea.vmem %s12, %s676
      %p678 = pneg %p363
      %p679 = pneg %p360
      %p680 = scmp.lt.s32.totalorder %s33, 1
      %s681 = scalar_select %p680, %s33, 1
      %s682 = smul.addr %s681, 32
      %s683 = smul.addr %s682, 4
      %s684 = scalar_lea.vmem %s13, %s683
      %p685 = pneg %p389
      %p686 = pneg %p386
      %p687 = scmp.lt.s32.totalorder %s33, 1
      %s688 = scalar_select %p687, %s33, 1
      %s689 = scalar_lea.vmem %s14, %s688
      %p690 = pneg %p415
      %p691 = pneg %p412
      %p692 = pneg %p436
      %p693 = pneg %p433
      %p694 = pneg %p457
      %p695 = pneg %p454
      %p696 = pneg %p483
      %p697 = pneg %p480
      %p698 = scmp.lt.s32.totalorder %s32, 1
      %s699 = scalar_select %p698, %s32, 1
      %s700 = smul.addr %s699, 16
      %s701 = smul.addr %s700, 8
      %s702 = scalar_lea.vmem %s17, %s701
      %p703 = scmp.lt.s32.totalorder %s32, 1
      %s704 = scalar_select %p703, %s32, 1
      %s705 = smul.addr %s704, 16
      %s706 = smul.addr %s705, 8
      %s707 = scalar_lea.vmem %s0, %s706
      %p708 = scmp.lt.s32.totalorder %s33, 1
      %s709 = scalar_select %p708, %s33, 1
      %s710 = scalar_lea.vmem %s3, %s709
      %p711 = scmp.lt.s32.totalorder %s33, 1
      %s712 = scalar_select %p711, %s33, 1
      %s713 = scalar_lea.vmem %s4, %s712
      %p714 = scmp.lt.s32.totalorder %s33, 1
      %s715 = scalar_select %p714, %s33, 1
      %s716 = smul.addr %s715, 48
      %s717 = smul.addr %s716, 4
      %s718 = scalar_lea.vmem %s5, %s717
      %p719 = scmp.lt.s32.totalorder %s33, 1
      %s720 = scalar_select %p719, %s33, 1
      %s721 = smul.addr %s720, 3
      %s722 = scalar_lea.vmem %s6, %s721
      %p723 = scmp.lt.s32.totalorder %s33, 1
      %s724 = scalar_select %p723, %s33, 1
      %s725 = smul.addr %s724, 16
      %s726 = smul.addr %s725, 4
      %s727 = scalar_lea.vmem %s7, %s726
      %p728 = scmp.lt.s32.totalorder %s33, 1
      %s729 = scalar_select %p728, %s33, 1
      %s730 = scalar_lea.vmem %s8, %s729
      %p731 = scmp.lt.s32.totalorder %s33, 1
      %s732 = scalar_select %p731, %s33, 1
      %s733 = scalar_lea.vmem %s9, %s732
      %p734 = scmp.lt.s32.totalorder %s33, 1
      %s735 = scalar_select %p734, %s33, 1
      %s736 = scalar_lea.vmem %s10, %s735
      %p737 = scmp.lt.s32.totalorder %s33, 1
      %s738 = scalar_select %p737, %s33, 1
      %s739 = smul.addr %s738, 32
      %s740 = smul.addr %s739, 4
      %s741 = scalar_lea.vmem %s11, %s740
      %p742 = scmp.lt.s32.totalorder %s33, 1
      %s743 = scalar_select %p742, %s33, 1
      %s744 = smul.addr %s743, 2
      %s745 = scalar_lea.vmem %s12, %s744
      %p746 = scmp.lt.s32.totalorder %s33, 1
      %s747 = scalar_select %p746, %s33, 1
      %s748 = smul.addr %s747, 32
      %s749 = smul.addr %s748, 4
      %s750 = scalar_lea.vmem %s13, %s749
      %p751 = scmp.lt.s32.totalorder %s33, 1
      %s752 = scalar_select %p751, %s33, 1
      %s753 = scalar_lea.vmem %s14, %s752
      %p754 = scmp.lt.s32.totalorder %s32, 1
      %s755 = scalar_select %p754, %s32, 1
      %s756 = smul.addr %s755, 16
      %s757 = smul.addr %s756, 8
      %s758 = scalar_lea.vmem %s17, %s757
      %p759 = scmp.eq.s32.totalorder %s33, 0
      // Predicated region
      $region89: #{encoder2d_forward.1} parent=87 // pred_check
        %p760 = pneg %p759
      $region90: #{encoder2d_forward.1} parent=87 // pred_check_branch
        %762 = sbr.rel (%p760) target = $region92
      $region91: #{encoder2d_forward.1} parent=87 // pred_region
        %v763 = vld [vmem:[%s707] sm:$0xff]
        %v764 = vld [vmem:[%s707 + $0x8] sm:$0xff]
        %v765 = vld [vmem:[%s707 + $0x10] sm:$0xff]
        %v766 = vld [vmem:[%s707 + $0x18] sm:$0xff]
        %v767 = vld [vmem:[%s707 + $0x20] sm:$0xff]
        %v768 = vld [vmem:[%s707 + $0x28] sm:$0xff]
        %v769 = vld [vmem:[%s707 + $0x30] sm:$0xff]
        %v770 = vld [vmem:[%s707 + $0x38] sm:$0xff]
        %v771 = vld [vmem:[%s707 + $0x40] sm:$0xff]
        %v772 = vld [vmem:[%s707 + $0x48] sm:$0xff]
        %v773 = vld [vmem:[%s707 + $0x50] sm:$0xff]
        %v774 = vld [vmem:[%s707 + $0x58] sm:$0xff]
        %v775 = vld [vmem:[%s707 + $0x60] sm:$0xff]
        %v776 = vld [vmem:[%s707 + $0x68] sm:$0xff]
        %v777 = vld [vmem:[%s707 + $0x70] sm:$0xff]
        %v778 = vld [vmem:[%s707 + $0x78] sm:$0xff]
        %v779 = vpack.c.bf16 %v764, %v763
        %v780 = vpack.c.bf16 %v766, %v765
        %v781 = vpack.c.bf16 %v768, %v767
        %v782 = vpack.c.bf16 %v770, %v769
        %v783 = vpack.c.bf16 %v772, %v771
        %v784 = vpack.c.bf16 %v774, %v773
        %v785 = vpack.c.bf16 %v776, %v775
        %v786 = vpack.c.bf16 %v778, %v777
        %v787 = vld [vmem:[%s2] sm:$0xf]
        %v788 = vld [vmem:[%s2 + $0x4] sm:$0xf]
        %v789 = vld [vmem:[%s2 + $0x8] sm:$0xf]
        %v790 = vld [vmem:[%s2 + $0xc] sm:$0xf]
        %v791 = vld [vmem:[%s2 + $0x10] sm:$0xf]
        %v792 = vld [vmem:[%s2 + $0x14] sm:$0xf]
        %v793 = vld [vmem:[%s2 + $0x18] sm:$0xf]
        %v794 = vld [vmem:[%s2 + $0x1c] sm:$0xf]
        %v795 = vld [vmem:[%s2 + $0x20] sm:$0xf]
        %v796 = vld [vmem:[%s2 + $0x24] sm:$0xf]
        %v797 = vld [vmem:[%s2 + $0x28] sm:$0xf]
        %v798 = vld [vmem:[%s2 + $0x2c] sm:$0xf]
        %v799 = vld [vmem:[%s2 + $0x30] sm:$0xf]
        %v800 = vld [vmem:[%s2 + $0x34] sm:$0xf]
        %v801 = vld [vmem:[%s2 + $0x38] sm:$0xf]
        %v802 = vld [vmem:[%s2 + $0x3c] sm:$0xf]
        %v803 = vld [vmem:[%s1] sm:$0xff]
        %v804 = vld [vmem:[%s1 + $0x8] sm:$0xff]
        %v805 = vld [vmem:[%s1 + $0x10] sm:$0xff]
        %v806 = vld [vmem:[%s1 + $0x18] sm:$0xff]
        %v807 = vld [vmem:[%s1 + $0x20] sm:$0xff]
        %v808 = vld [vmem:[%s1 + $0x28] sm:$0xff]
        %v809 = vld [vmem:[%s1 + $0x30] sm:$0xff]
        %v810 = vld [vmem:[%s1 + $0x38] sm:$0xff]
        %v811 = vld [vmem:[%s1 + $0x40] sm:$0xff]
        %v812 = vld [vmem:[%s1 + $0x48] sm:$0xff]
        %v813 = vld [vmem:[%s1 + $0x50] sm:$0xff]
        %v814 = vld [vmem:[%s1 + $0x58] sm:$0xff]
        %v815 = vld [vmem:[%s1 + $0x60] sm:$0xff]
        %v816 = vld [vmem:[%s1 + $0x68] sm:$0xff]
        %v817 = vld [vmem:[%s1 + $0x70] sm:$0xff]
        %v818 = vld [vmem:[%s1 + $0x78] sm:$0xff]
        %v835 = vunpack.c.l.b16 %v787
        %v836 = vunpack.c.l.b16 %v788
        %v837 = vunpack.c.l.b16 %v789
        %v838 = vunpack.c.l.b16 %v790
        %v839 = vunpack.c.l.b16 %v791
        %v840 = vunpack.c.l.b16 %v792
        %v841 = vunpack.c.l.b16 %v793
        %v842 = vunpack.c.l.b16 %v794
        %v843 = vunpack.c.l.b16 %v795
        %v844 = vunpack.c.l.b16 %v796
        %v845 = vunpack.c.l.b16 %v797
        %v846 = vunpack.c.l.b16 %v798
        %v847 = vunpack.c.l.b16 %v799
        %v848 = vunpack.c.l.b16 %v800
        %v849 = vunpack.c.l.b16 %v801
        %v850 = vunpack.c.l.b16 %v802
        %v851 = vpack.c.b16 %v836, %v835
        %v852 = vpack.c.b16 %v838, %v837
        %v853 = vpack.c.b16 %v840, %v839
        %v854 = vpack.c.b16 %v842, %v841
        %v855 = vpack.c.b16 %v844, %v843
        %v856 = vpack.c.b16 %v846, %v845
        %v857 = vpack.c.b16 %v848, %v847
        %v858 = vpack.c.b16 %v850, %v849
        %867 = vmatpush.bf16.msra.mxu0 %v858
        %868 = vmatpush.bf16.msra.mxu0 %v857
        %869 = vmatpush.bf16.msra.mxu0 %v856
        %870 = vmatpush.bf16.msra.mxu0 %v855
        %871 = vmatpush.bf16.msra.mxu0 %v854
        %872 = vmatpush.bf16.msra.mxu0 %v853
        %873 = vmatpush.bf16.msra.mxu0 %v852
        %874 = vmatpush.bf16.msra.mxu0 %v851
        %875 = vmatmul.bf16.gmra.mxu0 %v779
        %v876 = vpop.f32.mrf.mxu0
        %v877 = vadd.f32 %v803, %v876
        %v878 = vpop.f32.mrf.mxu0
        %v879 = vadd.f32 %v804, %v878
        %880 = vmatmul.bf16.gmra.mxu0 %v780
        %v881 = vpop.f32.mrf.mxu0
        %v882 = vadd.f32 %v805, %v881
        %v883 = vpop.f32.mrf.mxu0
        %v884 = vadd.f32 %v806, %v883
        %885 = vmatmul.bf16.gmra.mxu0 %v781
        %v886 = vpop.f32.mrf.mxu0
        %v887 = vadd.f32 %v807, %v886
        %v888 = vpop.f32.mrf.mxu0
        %v889 = vadd.f32 %v808, %v888
        %890 = vmatmul.bf16.gmra.mxu0 %v782
        %v891 = vpop.f32.mrf.mxu0
        %v892 = vadd.f32 %v809, %v891
        %v893 = vpop.f32.mrf.mxu0
        %v894 = vadd.f32 %v810, %v893
        %895 = vmatmul.bf16.gmra.mxu0 %v783
        %v896 = vpop.f32.mrf.mxu0
        %v897 = vadd.f32 %v811, %v896
        %v898 = vpop.f32.mrf.mxu0
        %v899 = vadd.f32 %v812, %v898
        %900 = vmatmul.bf16.gmra.mxu0 %v784
        %v901 = vpop.f32.mrf.mxu0
        %v902 = vadd.f32 %v813, %v901
        %v903 = vpop.f32.mrf.mxu0
        %v904 = vadd.f32 %v814, %v903
        %905 = vmatmul.bf16.gmra.mxu0 %v785
        %v906 = vpop.f32.mrf.mxu0
        %v907 = vadd.f32 %v815, %v906
        %v908 = vpop.f32.mrf.mxu0
        %v909 = vadd.f32 %v816, %v908
        %910 = vmatmul.bf16.gmra.mxu0 %v786
        %v911 = vpop.f32.mrf.mxu0
        %v912 = vadd.f32 %v817, %v911
        %v913 = vpop.f32.mrf.mxu0
        %v914 = vadd.f32 %v818, %v913
        %915 = vdwg.mxu0
        %916 = vst [vmem:[#allocation2] sm:$0xff] %v877
        %917 = vst [vmem:[#allocation2 + $0x8] sm:$0xff] %v879
        %918 = vst [vmem:[#allocation2 + $0x10] sm:$0xff] %v882
        %919 = vst [vmem:[#allocation2 + $0x18] sm:$0xff] %v884
        %920 = vst [vmem:[#allocation2 + $0x20] sm:$0xff] %v887
        %921 = vst [vmem:[#allocation2 + $0x28] sm:$0xff] %v889
        %922 = vst [vmem:[#allocation2 + $0x30] sm:$0xff] %v892
        %923 = vst [vmem:[#allocation2 + $0x38] sm:$0xff] %v894
        %924 = vst [vmem:[#allocation2 + $0x40] sm:$0xff] %v897
        %925 = vst [vmem:[#allocation2 + $0x48] sm:$0xff] %v899
        %926 = vst [vmem:[#allocation2 + $0x50] sm:$0xff] %v902
        %927 = vst [vmem:[#allocation2 + $0x58] sm:$0xff] %v904
        %928 = vst [vmem:[#allocation2 + $0x60] sm:$0xff] %v907
        %929 = vst [vmem:[#allocation2 + $0x68] sm:$0xff] %v909
        %930 = vst [vmem:[#allocation2 + $0x70] sm:$0xff] %v912
        %931 = vst [vmem:[#allocation2 + $0x78] sm:$0xff] %v914
      $region92: #{encoder2d_forward.1} parent=87 // pred_fallthru
        _
      %v932 = vld [vmem:[#allocation2] sm:$0xff]
      %v933 = vld [vmem:[#allocation2 + $0x8] sm:$0xff]
      %v934 = vld [vmem:[#allocation2 + $0x10] sm:$0xff]
      %v935 = vld [vmem:[#allocation2 + $0x18] sm:$0xff]
      %v936 = vld [vmem:[#allocation2 + $0x20] sm:$0xff]
      %v937 = vld [vmem:[#allocation2 + $0x28] sm:$0xff]
      %v938 = vld [vmem:[#allocation2 + $0x30] sm:$0xff]
      %v939 = vld [vmem:[#allocation2 + $0x38] sm:$0xff]
      %v940 = vld [vmem:[#allocation2 + $0x40] sm:$0xff]
      %v941 = vld [vmem:[#allocation2 + $0x48] sm:$0xff]
      %v942 = vld [vmem:[#allocation2 + $0x50] sm:$0xff]
      %v943 = vld [vmem:[#allocation2 + $0x58] sm:$0xff]
      %v944 = vld [vmem:[#allocation2 + $0x60] sm:$0xff]
      %v945 = vld [vmem:[#allocation2 + $0x68] sm:$0xff]
      %v946 = vld [vmem:[#allocation2 + $0x70] sm:$0xff]
      %v947 = vld [vmem:[#allocation2 + $0x78] sm:$0xff]
      %v948 = vld [vmem:[%s710] sm:$0x1]
      %v949 = vld [vmem:[%s713] sm:$0x1]
      %950 = vadd.xlane.f32.xlu0 %v932
      %v951 = vpop.xlane.xlu0 %950
      %952 = vadd.xlane.f32.xlu0 %v933
      %v953 = vpop.xlane.xlu0 %952
      %954 = vadd.xlane.f32.xlu0 %v934
      %v955 = vpop.xlane.xlu0 %954
      %956 = vadd.xlane.f32.xlu0 %v935
      %v957 = vpop.xlane.xlu0 %956
      %958 = vadd.xlane.f32.xlu0 %v936
      %v959 = vpop.xlane.xlu0 %958
      %960 = vadd.xlane.f32.xlu0 %v937
      %v961 = vpop.xlane.xlu0 %960
      %962 = vadd.xlane.f32.xlu0 %v938
      %v963 = vpop.xlane.xlu0 %962
      %964 = vadd.xlane.f32.xlu0 %v939
      %v965 = vpop.xlane.xlu0 %964
      %966 = vadd.xlane.f32.xlu0 %v940
      %v967 = vpop.xlane.xlu0 %966
      %968 = vadd.xlane.f32.xlu0 %v941
      %v969 = vpop.xlane.xlu0 %968
      %970 = vadd.xlane.f32.xlu0 %v942
      %v971 = vpop.xlane.xlu0 %970
      %972 = vadd.xlane.f32.xlu0 %v943
      %v973 = vpop.xlane.xlu0 %972
      %974 = vadd.xlane.f32.xlu0 %v944
      %v975 = vpop.xlane.xlu0 %974
      %976 = vadd.xlane.f32.xlu0 %v945
      %v977 = vpop.xlane.xlu0 %976
      %978 = vadd.xlane.f32.xlu0 %v946
      %v979 = vpop.xlane.xlu0 %978
      %980 = vadd.xlane.f32.xlu0 %v947
      %v981 = vpop.xlane.xlu0 %980
      %v982 = vrcp.pop 128.0
      %v983 = vmul.f32 128.0, %v982
      %v984 = vsub.f32 1.0, %v983
      %v985 = vmul.f32 %v982, %v984
      %v986 = vadd.f32 %v982, %v985
      %vm987 = vweird.f32 %v982
      %v988 = vsel %vm987, %v982, %v986
      %v989 = vmul.f32 %v951, %v988
      %v990 = vmul.f32 %v953, %v988
      %v991 = vmul.f32 %v955, %v988
      %v992 = vmul.f32 %v957, %v988
      %v993 = vmul.f32 %v959, %v988
      %v994 = vmul.f32 %v961, %v988
      %v995 = vmul.f32 %v963, %v988
      %v996 = vmul.f32 %v965, %v988
      %v997 = vmul.f32 %v967, %v988
      %v998 = vmul.f32 %v969, %v988
      %v999 = vmul.f32 %v971, %v988
      %v1000 = vmul.f32 %v973, %v988
      %v1001 = vmul.f32 %v975, %v988
      %v1002 = vmul.f32 %v977, %v988
      %v1003 = vmul.f32 %v979, %v988
      %v1004 = vmul.f32 %v981, %v988
      %v1005 = vsub.f32 %v932, %v989
      %v1006 = vsub.f32 %v933, %v990
      %v1007 = vsub.f32 %v934, %v991
      %v1008 = vsub.f32 %v935, %v992
      %v1009 = vsub.f32 %v936, %v993
      %v1010 = vsub.f32 %v937, %v994
      %v1011 = vsub.f32 %v938, %v995
      %v1012 = vsub.f32 %v939, %v996
      %v1013 = vsub.f32 %v940, %v997
      %v1014 = vsub.f32 %v941, %v998
      %v1015 = vsub.f32 %v942, %v999
      %v1016 = vsub.f32 %v943, %v1000
      %v1017 = vsub.f32 %v944, %v1001
      %v1018 = vsub.f32 %v945, %v1002
      %v1019 = vsub.f32 %v946, %v1003
      %v1020 = vsub.f32 %v947, %v1004
      %v1021 = vmul.f32 %v1005, %v1005
      %v1022 = vmul.f32 %v1006, %v1006
      %v1023 = vmul.f32 %v1007, %v1007
      %v1024 = vmul.f32 %v1008, %v1008
      %v1025 = vmul.f32 %v1009, %v1009
      %v1026 = vmul.f32 %v1010, %v1010
      %v1027 = vmul.f32 %v1011, %v1011
      %v1028 = vmul.f32 %v1012, %v1012
      %v1029 = vmul.f32 %v1013, %v1013
      %v1030 = vmul.f32 %v1014, %v1014
      %v1031 = vmul.f32 %v1015, %v1015
      %v1032 = vmul.f32 %v1016, %v1016
      %v1033 = vmul.f32 %v1017, %v1017
      %v1034 = vmul.f32 %v1018, %v1018
      %v1035 = vmul.f32 %v1019, %v1019
      %v1036 = vmul.f32 %v1020, %v1020
      %1037 = vadd.xlane.f32.xlu0 %v1021
      %v1038 = vpop.xlane.xlu0 %1037
      %1039 = vadd.xlane.f32.xlu0 %v1022
      %v1040 = vpop.xlane.xlu0 %1039
      %1041 = vadd.xlane.f32.xlu0 %v1023
      %v1042 = vpop.xlane.xlu0 %1041
      %1043 = vadd.xlane.f32.xlu0 %v1024
      %v1044 = vpop.xlane.xlu0 %1043
      %1045 = vadd.xlane.f32.xlu0 %v1025
      %v1046 = vpop.xlane.xlu0 %1045
      %1047 = vadd.xlane.f32.xlu0 %v1026
      %v1048 = vpop.xlane.xlu0 %1047
      %1049 = vadd.xlane.f32.xlu0 %v1027
      %v1050 = vpop.xlane.xlu0 %1049
      %1051 = vadd.xlane.f32.xlu0 %v1028
      %v1052 = vpop.xlane.xlu0 %1051
      %1053 = vadd.xlane.f32.xlu0 %v1029
      %v1054 = vpop.xlane.xlu0 %1053
      %1055 = vadd.xlane.f32.xlu0 %v1030
      %v1056 = vpop.xlane.xlu0 %1055
      %1057 = vadd.xlane.f32.xlu0 %v1031
      %v1058 = vpop.xlane.xlu0 %1057
      %1059 = vadd.xlane.f32.xlu0 %v1032
      %v1060 = vpop.xlane.xlu0 %1059
      %1061 = vadd.xlane.f32.xlu0 %v1033
      %v1062 = vpop.xlane.xlu0 %1061
      %1063 = vadd.xlane.f32.xlu0 %v1034
      %v1064 = vpop.xlane.xlu0 %1063
      %1065 = vadd.xlane.f32.xlu0 %v1035
      %v1066 = vpop.xlane.xlu0 %1065
      %1067 = vadd.xlane.f32.xlu0 %v1036
      %v1068 = vpop.xlane.xlu0 %1067
      %v1069 = vmul.f32 %v1038, %v988
      %v1070 = vmul.f32 %v1040, %v988
      %v1071 = vmul.f32 %v1042, %v988
      %v1072 = vmul.f32 %v1044, %v988
      %v1073 = vmul.f32 %v1046, %v988
      %v1074 = vmul.f32 %v1048, %v988
      %v1075 = vmul.f32 %v1050, %v988
      %v1076 = vmul.f32 %v1052, %v988
      %v1077 = vmul.f32 %v1054, %v988
      %v1078 = vmul.f32 %v1056, %v988
      %v1079 = vmul.f32 %v1058, %v988
      %v1080 = vmul.f32 %v1060, %v988
      %v1081 = vmul.f32 %v1062, %v988
      %v1082 = vmul.f32 %v1064, %v988
      %v1083 = vmul.f32 %v1066, %v988
      %v1084 = vmul.f32 %v1068, %v988
      %v1085 = vadd.f32 %v1069, 1e-06
      %v1086 = vadd.f32 %v1070, 1e-06
      %v1087 = vadd.f32 %v1071, 1e-06
      %v1088 = vadd.f32 %v1072, 1e-06
      %v1089 = vadd.f32 %v1073, 1e-06
      %v1090 = vadd.f32 %v1074, 1e-06
      %v1091 = vadd.f32 %v1075, 1e-06
      %v1092 = vadd.f32 %v1076, 1e-06
      %v1093 = vadd.f32 %v1077, 1e-06
      %v1094 = vadd.f32 %v1078, 1e-06
      %v1095 = vadd.f32 %v1079, 1e-06
      %v1096 = vadd.f32 %v1080, 1e-06
      %v1097 = vadd.f32 %v1081, 1e-06
      %v1098 = vadd.f32 %v1082, 1e-06
      %v1099 = vadd.f32 %v1083, 1e-06
      %v1100 = vadd.f32 %v1084, 1e-06
      %v1101 = vrsqrt.pop %v1085
      %v1102 = vmul.f32 %v1101, %v1085
      %v1103 = vmul.f32 %v1102, %v1101
      %v1104 = vmul.f32 0.5, %v1103
      %v1105 = vsub.f32 1.5, %v1104
      %v1106 = vmul.f32 %v1101, %v1105
      %vm1107 = vweird.f32 %v1085
      %vm1108 = vweird.f32 %v1101
      %vm1109 = vmor %vm1107, %vm1108
      %v1110 = vsel %vm1109, %v1101, %v1106
      %v1111 = vrsqrt.pop %v1086
      %v1112 = vmul.f32 %v1111, %v1086
      %v1113 = vmul.f32 %v1112, %v1111
      %v1114 = vmul.f32 0.5, %v1113
      %v1115 = vsub.f32 1.5, %v1114
      %v1116 = vmul.f32 %v1111, %v1115
      %vm1117 = vweird.f32 %v1086
      %vm1118 = vweird.f32 %v1111
      %vm1119 = vmor %vm1117, %vm1118
      %v1120 = vsel %vm1119, %v1111, %v1116
      %v1121 = vrsqrt.pop %v1087
      %v1122 = vmul.f32 %v1121, %v1087
      %v1123 = vmul.f32 %v1122, %v1121
      %v1124 = vmul.f32 0.5, %v1123
      %v1125 = vsub.f32 1.5, %v1124
      %v1126 = vmul.f32 %v1121, %v1125
      %vm1127 = vweird.f32 %v1087
      %vm1128 = vweird.f32 %v1121
      %vm1129 = vmor %vm1127, %vm1128
      %v1130 = vsel %vm1129, %v1121, %v1126
      %v1131 = vrsqrt.pop %v1088
      %v1132 = vmul.f32 %v1131, %v1088
      %v1133 = vmul.f32 %v1132, %v1131
      %v1134 = vmul.f32 0.5, %v1133
      %v1135 = vsub.f32 1.5, %v1134
      %v1136 = vmul.f32 %v1131, %v1135
      %vm1137 = vweird.f32 %v1088
      %vm1138 = vweird.f32 %v1131
      %vm1139 = vmor %vm1137, %vm1138
      %v1140 = vsel %vm1139, %v1131, %v1136
      %v1141 = vrsqrt.pop %v1089
      %v1142 = vmul.f32 %v1141, %v1089
      %v1143 = vmul.f32 %v1142, %v1141
      %v1144 = vmul.f32 0.5, %v1143
      %v1145 = vsub.f32 1.5, %v1144
      %v1146 = vmul.f32 %v1141, %v1145
      %vm1147 = vweird.f32 %v1089
      %vm1148 = vweird.f32 %v1141
      %vm1149 = vmor %vm1147, %vm1148
      %v1150 = vsel %vm1149, %v1141, %v1146
      %v1151 = vrsqrt.pop %v1090
      %v1152 = vmul.f32 %v1151, %v1090
      %v1153 = vmul.f32 %v1152, %v1151
      %v1154 = vmul.f32 0.5, %v1153
      %v1155 = vsub.f32 1.5, %v1154
      %v1156 = vmul.f32 %v1151, %v1155
      %vm1157 = vweird.f32 %v1090
      %vm1158 = vweird.f32 %v1151
      %vm1159 = vmor %vm1157, %vm1158
      %v1160 = vsel %vm1159, %v1151, %v1156
      %v1161 = vrsqrt.pop %v1091
      %v1162 = vmul.f32 %v1161, %v1091
      %v1163 = vmul.f32 %v1162, %v1161
      %v1164 = vmul.f32 0.5, %v1163
      %v1165 = vsub.f32 1.5, %v1164
      %v1166 = vmul.f32 %v1161, %v1165
      %vm1167 = vweird.f32 %v1091
      %vm1168 = vweird.f32 %v1161
      %vm1169 = vmor %vm1167, %vm1168
      %v1170 = vsel %vm1169, %v1161, %v1166
      %v1171 = vrsqrt.pop %v1092
      %v1172 = vmul.f32 %v1171, %v1092
      %v1173 = vmul.f32 %v1172, %v1171
      %v1174 = vmul.f32 0.5, %v1173
      %v1175 = vsub.f32 1.5, %v1174
      %v1176 = vmul.f32 %v1171, %v1175
      %vm1177 = vweird.f32 %v1092
      %vm1178 = vweird.f32 %v1171
      %vm1179 = vmor %vm1177, %vm1178
      %v1180 = vsel %vm1179, %v1171, %v1176
      %v1181 = vrsqrt.pop %v1093
      %v1182 = vmul.f32 %v1181, %v1093
      %v1183 = vmul.f32 %v1182, %v1181
      %v1184 = vmul.f32 0.5, %v1183
      %v1185 = vsub.f32 1.5, %v1184
      %v1186 = vmul.f32 %v1181, %v1185
      %vm1187 = vweird.f32 %v1093
      %vm1188 = vweird.f32 %v1181
      %vm1189 = vmor %vm1187, %vm1188
      %v1190 = vsel %vm1189, %v1181, %v1186
      %v1191 = vrsqrt.pop %v1094
      %v1192 = vmul.f32 %v1191, %v1094
      %v1193 = vmul.f32 %v1192, %v1191
      %v1194 = vmul.f32 0.5, %v1193
      %v1195 = vsub.f32 1.5, %v1194
      %v1196 = vmul.f32 %v1191, %v1195
      %vm1197 = vweird.f32 %v1094
      %vm1198 = vweird.f32 %v1191
      %vm1199 = vmor %vm1197, %vm1198
      %v1200 = vsel %vm1199, %v1191, %v1196
      %v1201 = vrsqrt.pop %v1095
      %v1202 = vmul.f32 %v1201, %v1095
      %v1203 = vmul.f32 %v1202, %v1201
      %v1204 = vmul.f32 0.5, %v1203
      %v1205 = vsub.f32 1.5, %v1204
      %v1206 = vmul.f32 %v1201, %v1205
      %vm1207 = vweird.f32 %v1095
      %vm1208 = vweird.f32 %v1201
      %vm1209 = vmor %vm1207, %vm1208
      %v1210 = vsel %vm1209, %v1201, %v1206
      %v1211 = vrsqrt.pop %v1096
      %v1212 = vmul.f32 %v1211, %v1096
      %v1213 = vmul.f32 %v1212, %v1211
      %v1214 = vmul.f32 0.5, %v1213
      %v1215 = vsub.f32 1.5, %v1214
      %v1216 = vmul.f32 %v1211, %v1215
      %vm1217 = vweird.f32 %v1096
      %vm1218 = vweird.f32 %v1211
      %vm1219 = vmor %vm1217, %vm1218
      %v1220 = vsel %vm1219, %v1211, %v1216
      %v1221 = vrsqrt.pop %v1097
      %v1222 = vmul.f32 %v1221, %v1097
      %v1223 = vmul.f32 %v1222, %v1221
      %v1224 = vmul.f32 0.5, %v1223
      %v1225 = vsub.f32 1.5, %v1224
      %v1226 = vmul.f32 %v1221, %v1225
      %vm1227 = vweird.f32 %v1097
      %vm1228 = vweird.f32 %v1221
      %vm1229 = vmor %vm1227, %vm1228
      %v1230 = vsel %vm1229, %v1221, %v1226
      %v1231 = vrsqrt.pop %v1098
      %v1232 = vmul.f32 %v1231, %v1098
      %v1233 = vmul.f32 %v1232, %v1231
      %v1234 = vmul.f32 0.5, %v1233
      %v1235 = vsub.f32 1.5, %v1234
      %v1236 = vmul.f32 %v1231, %v1235
      %vm1237 = vweird.f32 %v1098
      %vm1238 = vweird.f32 %v1231
      %vm1239 = vmor %vm1237, %vm1238
      %v1240 = vsel %vm1239, %v1231, %v1236
      %v1241 = vrsqrt.pop %v1099
      %v1242 = vmul.f32 %v1241, %v1099
      %v1243 = vmul.f32 %v1242, %v1241
      %v1244 = vmul.f32 0.5, %v1243
      %v1245 = vsub.f32 1.5, %v1244
      %v1246 = vmul.f32 %v1241, %v1245
      %vm1247 = vweird.f32 %v1099
      %vm1248 = vweird.f32 %v1241
      %vm1249 = vmor %vm1247, %vm1248
      %v1250 = vsel %vm1249, %v1241, %v1246
      %v1251 = vrsqrt.pop %v1100
      %v1252 = vmul.f32 %v1251, %v1100
      %v1253 = vmul.f32 %v1252, %v1251
      %v1254 = vmul.f32 0.5, %v1253
      %v1255 = vsub.f32 1.5, %v1254
      %v1256 = vmul.f32 %v1251, %v1255
      %vm1257 = vweird.f32 %v1100
      %vm1258 = vweird.f32 %v1251
      %vm1259 = vmor %vm1257, %vm1258
      %v1260 = vsel %vm1259, %v1251, %v1256
      %v1261 = vmul.f32 %v1005, %v1110
      %v1262 = vmul.f32 %v1006, %v1120
      %v1263 = vmul.f32 %v1007, %v1130
      %v1264 = vmul.f32 %v1008, %v1140
      %v1265 = vmul.f32 %v1009, %v1150
      %v1266 = vmul.f32 %v1010, %v1160
      %v1267 = vmul.f32 %v1011, %v1170
      %v1268 = vmul.f32 %v1012, %v1180
      %v1269 = vmul.f32 %v1013, %v1190
      %v1270 = vmul.f32 %v1014, %v1200
      %v1271 = vmul.f32 %v1015, %v1210
      %v1272 = vmul.f32 %v1016, %v1220
      %v1273 = vmul.f32 %v1017, %v1230
      %v1274 = vmul.f32 %v1018, %v1240
      %v1275 = vmul.f32 %v1019, %v1250
      %v1276 = vmul.f32 %v1020, %v1260
      %v1278 = vperm.slane %v948, 0
      %v1280 = vmul.f32 %v1261, %v1278
      %v1281 = vmul.f32 %v1262, %v1278
      %v1282 = vmul.f32 %v1263, %v1278
      %v1283 = vmul.f32 %v1264, %v1278
      %v1284 = vmul.f32 %v1265, %v1278
      %v1285 = vmul.f32 %v1266, %v1278
      %v1286 = vmul.f32 %v1267, %v1278
      %v1287 = vmul.f32 %v1268, %v1278
      %v1288 = vmul.f32 %v1269, %v1278
      %v1289 = vmul.f32 %v1270, %v1278
      %v1290 = vmul.f32 %v1271, %v1278
      %v1291 = vmul.f32 %v1272, %v1278
      %v1292 = vmul.f32 %v1273, %v1278
      %v1293 = vmul.f32 %v1274, %v1278
      %v1294 = vmul.f32 %v1275, %v1278
      %v1295 = vmul.f32 %v1276, %v1278
      %v1297 = vperm.slane %v949, 0
      %v1299 = vadd.f32 %v1280, %v1297
      %v1300 = vadd.f32 %v1281, %v1297
      %v1301 = vadd.f32 %v1282, %v1297
      %v1302 = vadd.f32 %v1283, %v1297
      %v1303 = vadd.f32 %v1284, %v1297
      %v1304 = vadd.f32 %v1285, %v1297
      %v1305 = vadd.f32 %v1286, %v1297
      %v1306 = vadd.f32 %v1287, %v1297
      %v1307 = vadd.f32 %v1288, %v1297
      %v1308 = vadd.f32 %v1289, %v1297
      %v1309 = vadd.f32 %v1290, %v1297
      %v1310 = vadd.f32 %v1291, %v1297
      %v1311 = vadd.f32 %v1292, %v1297
      %v1312 = vadd.f32 %v1293, %v1297
      %v1313 = vadd.f32 %v1294, %v1297
      %v1314 = vadd.f32 %v1295, %v1297
      %v1315 = vpack.c.bf16 %v1300, %v1299
      %v1316 = vpack.c.bf16 %v1302, %v1301
      %v1317 = vpack.c.bf16 %v1304, %v1303
      %v1318 = vpack.c.bf16 %v1306, %v1305
      %v1319 = vpack.c.bf16 %v1308, %v1307
      %v1320 = vpack.c.bf16 %v1310, %v1309
      %v1321 = vpack.c.bf16 %v1312, %v1311
      %v1322 = vpack.c.bf16 %v1314, %v1313
      %v1323 = vld [vmem:[%s718] sm:$0xff]
      %v1324 = vld [vmem:[%s718 + $0x8] sm:$0xf]
      %v1325 = vld [vmem:[%s718 + $0xc] sm:$0xff]
      %v1326 = vld [vmem:[%s718 + $0x14] sm:$0xf]
      %v1327 = vld [vmem:[%s718 + $0x18] sm:$0xff]
      %v1328 = vld [vmem:[%s718 + $0x20] sm:$0xf]
      %v1329 = vld [vmem:[%s718 + $0x24] sm:$0xff]
      %v1330 = vld [vmem:[%s718 + $0x2c] sm:$0xf]
      %v1331 = vld [vmem:[%s718 + $0x30] sm:$0xff]
      %v1332 = vld [vmem:[%s718 + $0x38] sm:$0xf]
      %v1333 = vld [vmem:[%s718 + $0x3c] sm:$0xff]
      %v1334 = vld [vmem:[%s718 + $0x44] sm:$0xf]
      %v1335 = vld [vmem:[%s718 + $0x48] sm:$0xff]
      %v1336 = vld [vmem:[%s718 + $0x50] sm:$0xf]
      %v1337 = vld [vmem:[%s718 + $0x54] sm:$0xff]
      %v1338 = vld [vmem:[%s718 + $0x5c] sm:$0xf]
      %v1339 = vld [vmem:[%s718 + $0x60] sm:$0xff]
      %v1340 = vld [vmem:[%s718 + $0x68] sm:$0xf]
      %v1341 = vld [vmem:[%s718 + $0x6c] sm:$0xff]
      %v1342 = vld [vmem:[%s718 + $0x74] sm:$0xf]
      %v1343 = vld [vmem:[%s718 + $0x78] sm:$0xff]
      %v1344 = vld [vmem:[%s718 + $0x80] sm:$0xf]
      %v1345 = vld [vmem:[%s718 + $0x84] sm:$0xff]
      %v1346 = vld [vmem:[%s718 + $0x8c] sm:$0xf]
      %v1347 = vld [vmem:[%s718 + $0x90] sm:$0xff]
      %v1348 = vld [vmem:[%s718 + $0x98] sm:$0xf]
      %v1349 = vld [vmem:[%s718 + $0x9c] sm:$0xff]
      %v1350 = vld [vmem:[%s718 + $0xa4] sm:$0xf]
      %v1351 = vld [vmem:[%s718 + $0xa8] sm:$0xff]
      %v1352 = vld [vmem:[%s718 + $0xb0] sm:$0xf]
      %v1353 = vld [vmem:[%s718 + $0xb4] sm:$0xff]
      %v1354 = vld [vmem:[%s718 + $0xbc] sm:$0xf]
      %v1355 = vld [vmem:[%s722] sm:$0x7]
      %v1357 = vperm.slane %v1355, 0
      %v1358 = vperm.slane %v1355, 1
      %v1359 = vperm.slane %v1355, 2
      %v1395 = vunpack.c.l.b16 %v1323
      %v1396 = vunpack.c.h.b16 %v1323
      %v1397 = vunpack.c.l.b16 %v1324
      %v1398 = vunpack.c.l.b16 %v1325
      %v1399 = vunpack.c.h.b16 %v1325
      %v1400 = vunpack.c.l.b16 %v1326
      %v1401 = vunpack.c.l.b16 %v1327
      %v1402 = vunpack.c.h.b16 %v1327
      %v1403 = vunpack.c.l.b16 %v1328
      %v1404 = vunpack.c.l.b16 %v1329
      %v1405 = vunpack.c.h.b16 %v1329
      %v1406 = vunpack.c.l.b16 %v1330
      %v1407 = vunpack.c.l.b16 %v1331
      %v1408 = vunpack.c.h.b16 %v1331
      %v1409 = vunpack.c.l.b16 %v1332
      %v1410 = vunpack.c.l.b16 %v1333
      %v1411 = vunpack.c.h.b16 %v1333
      %v1412 = vunpack.c.l.b16 %v1334
      %v1413 = vunpack.c.l.b16 %v1335
      %v1414 = vunpack.c.h.b16 %v1335
      %v1415 = vunpack.c.l.b16 %v1336
      %v1416 = vunpack.c.l.b16 %v1337
      %v1417 = vunpack.c.h.b16 %v1337
      %v1418 = vunpack.c.l.b16 %v1338
      %v1419 = vunpack.c.l.b16 %v1339
      %v1420 = vunpack.c.h.b16 %v1339
      %v1421 = vunpack.c.l.b16 %v1340
      %v1422 = vunpack.c.l.b16 %v1341
      %v1423 = vunpack.c.h.b16 %v1341
      %v1424 = vunpack.c.l.b16 %v1342
      %v1425 = vunpack.c.l.b16 %v1343
      %v1426 = vunpack.c.h.b16 %v1343
      %v1427 = vunpack.c.l.b16 %v1344
      %v1428 = vunpack.c.l.b16 %v1345
      %v1429 = vunpack.c.h.b16 %v1345
      %v1430 = vunpack.c.l.b16 %v1346
      %v1431 = vunpack.c.l.b16 %v1347
      %v1432 = vunpack.c.h.b16 %v1347
      %v1433 = vunpack.c.l.b16 %v1348
      %v1434 = vunpack.c.l.b16 %v1349
      %v1435 = vunpack.c.h.b16 %v1349
      %v1436 = vunpack.c.l.b16 %v1350
      %v1437 = vunpack.c.l.b16 %v1351
      %v1438 = vunpack.c.h.b16 %v1351
      %v1439 = vunpack.c.l.b16 %v1352
      %v1440 = vunpack.c.l.b16 %v1353
      %v1441 = vunpack.c.h.b16 %v1353
      %v1442 = vunpack.c.l.b16 %v1354
      %v1443 = vpack.c.b16 %v1398, %v1395
      %v1444 = vpack.c.b16 %v1399, %v1396
      %v1445 = vpack.c.b16 %v1400, %v1397
      %v1446 = vpack.c.b16 %v1404, %v1401
      %v1447 = vpack.c.b16 %v1405, %v1402
      %v1448 = vpack.c.b16 %v1406, %v1403
      %v1449 = vpack.c.b16 %v1410, %v1407
      %v1450 = vpack.c.b16 %v1411, %v1408
      %v1451 = vpack.c.b16 %v1412, %v1409
      %v1452 = vpack.c.b16 %v1416, %v1413
      %v1453 = vpack.c.b16 %v1417, %v1414
      %v1454 = vpack.c.b16 %v1418, %v1415
      %v1455 = vpack.c.b16 %v1422, %v1419
      %v1456 = vpack.c.b16 %v1423, %v1420
      %v1457 = vpack.c.b16 %v1424, %v1421
      %v1458 = vpack.c.b16 %v1428, %v1425
      %v1459 = vpack.c.b16 %v1429, %v1426
      %v1460 = vpack.c.b16 %v1430, %v1427
      %v1461 = vpack.c.b16 %v1434, %v1431
      %v1462 = vpack.c.b16 %v1435, %v1432
      %v1463 = vpack.c.b16 %v1436, %v1433
      %v1464 = vpack.c.b16 %v1440, %v1437
      %v1465 = vpack.c.b16 %v1441, %v1438
      %v1466 = vpack.c.b16 %v1442, %v1439
      %1491 = vmatpush.bf16.msra.mxu0 %v1464
      %1492 = vmatpush.bf16.msra.mxu0 %v1461
      %1493 = vmatpush.bf16.msra.mxu0 %v1458
      %1494 = vmatpush.bf16.msra.mxu0 %v1455
      %1495 = vmatpush.bf16.msra.mxu0 %v1452
      %1496 = vmatpush.bf16.msra.mxu0 %v1449
      %1497 = vmatpush.bf16.msra.mxu0 %v1446
      %1498 = vmatpush.bf16.msra.mxu0 %v1443
      %1499 = vmatmul.bf16.gmra.mxu0 %v1315
      %v1500 = vpop.f32.mrf.mxu0
      %v1501 = vadd.f32 %v1357, %v1500
      %v1502 = vpop.f32.mrf.mxu0
      %v1503 = vadd.f32 %v1357, %v1502
      %1504 = vmatmul.bf16.gmra.mxu0 %v1316
      %v1505 = vpop.f32.mrf.mxu0
      %v1506 = vadd.f32 %v1357, %v1505
      %v1507 = vpop.f32.mrf.mxu0
      %v1508 = vadd.f32 %v1357, %v1507
      %1509 = vmatmul.bf16.gmra.mxu0 %v1317
      %v1510 = vpop.f32.mrf.mxu0
      %v1511 = vadd.f32 %v1357, %v1510
      %v1512 = vpop.f32.mrf.mxu0
      %v1513 = vadd.f32 %v1357, %v1512
      %1514 = vmatmul.bf16.gmra.mxu0 %v1318
      %v1515 = vpop.f32.mrf.mxu0
      %v1516 = vadd.f32 %v1357, %v1515
      %v1517 = vpop.f32.mrf.mxu0
      %v1518 = vadd.f32 %v1357, %v1517
      %1519 = vmatmul.bf16.gmra.mxu0 %v1319
      %v1520 = vpop.f32.mrf.mxu0
      %v1521 = vadd.f32 %v1357, %v1520
      %v1522 = vpop.f32.mrf.mxu0
      %v1523 = vadd.f32 %v1357, %v1522
      %1524 = vmatmul.bf16.gmra.mxu0 %v1320
      %v1525 = vpop.f32.mrf.mxu0
      %v1526 = vadd.f32 %v1357, %v1525
      %v1527 = vpop.f32.mrf.mxu0
      %v1528 = vadd.f32 %v1357, %v1527
      %1529 = vmatmul.bf16.gmra.mxu0 %v1321
      %v1530 = vpop.f32.mrf.mxu0
      %v1531 = vadd.f32 %v1357, %v1530
      %v1532 = vpop.f32.mrf.mxu0
      %v1533 = vadd.f32 %v1357, %v1532
      %1534 = vmatmul.bf16.gmra.mxu0 %v1322
      %v1535 = vpop.f32.mrf.mxu0
      %v1536 = vadd.f32 %v1357, %v1535
      %v1537 = vpop.f32.mrf.mxu0
      %v1538 = vadd.f32 %v1357, %v1537
      %1539 = vdwg.mxu0
      %1540 = vmatpush.bf16.msra.mxu0 %v1465
      %1541 = vmatpush.bf16.msra.mxu0 %v1462
      %1542 = vmatpush.bf16.msra.mxu0 %v1459
      %1543 = vmatpush.bf16.msra.mxu0 %v1456
      %1544 = vmatpush.bf16.msra.mxu0 %v1453
      %1545 = vmatpush.bf16.msra.mxu0 %v1450
      %1546 = vmatpush.bf16.msra.mxu0 %v1447
      %1547 = vmatpush.bf16.msra.mxu0 %v1444
      %1548 = vmatmul.bf16.gmra.mxu0 %v1315
      %v1549 = vpop.f32.mrf.mxu0
      %v1550 = vadd.f32 %v1358, %v1549
      %v1551 = vpop.f32.mrf.mxu0
      %v1552 = vadd.f32 %v1358, %v1551
      %1553 = vmatmul.bf16.gmra.mxu0 %v1316
      %v1554 = vpop.f32.mrf.mxu0
      %v1555 = vadd.f32 %v1358, %v1554
      %v1556 = vpop.f32.mrf.mxu0
      %v1557 = vadd.f32 %v1358, %v1556
      %1558 = vmatmul.bf16.gmra.mxu0 %v1317
      %v1559 = vpop.f32.mrf.mxu0
      %v1560 = vadd.f32 %v1358, %v1559
      %v1561 = vpop.f32.mrf.mxu0
      %v1562 = vadd.f32 %v1358, %v1561
      %1563 = vmatmul.bf16.gmra.mxu0 %v1318
      %v1564 = vpop.f32.mrf.mxu0
      %v1565 = vadd.f32 %v1358, %v1564
      %v1566 = vpop.f32.mrf.mxu0
      %v1567 = vadd.f32 %v1358, %v1566
      %1568 = vmatmul.bf16.gmra.mxu0 %v1319
      %v1569 = vpop.f32.mrf.mxu0
      %v1570 = vadd.f32 %v1358, %v1569
      %v1571 = vpop.f32.mrf.mxu0
      %v1572 = vadd.f32 %v1358, %v1571
      %1573 = vmatmul.bf16.gmra.mxu0 %v1320
      %v1574 = vpop.f32.mrf.mxu0
      %v1575 = vadd.f32 %v1358, %v1574
      %v1576 = vpop.f32.mrf.mxu0
      %v1577 = vadd.f32 %v1358, %v1576
      %1578 = vmatmul.bf16.gmra.mxu0 %v1321
      %v1579 = vpop.f32.mrf.mxu0
      %v1580 = vadd.f32 %v1358, %v1579
      %v1581 = vpop.f32.mrf.mxu0
      %v1582 = vadd.f32 %v1358, %v1581
      %1583 = vmatmul.bf16.gmra.mxu0 %v1322
      %v1584 = vpop.f32.mrf.mxu0
      %v1585 = vadd.f32 %v1358, %v1584
      %v1586 = vpop.f32.mrf.mxu0
      %v1587 = vadd.f32 %v1358, %v1586
      %1588 = vdwg.mxu0
      %1589 = vmatpush.bf16.msra.mxu0 %v1466
      %1590 = vmatpush.bf16.msra.mxu0 %v1463
      %1591 = vmatpush.bf16.msra.mxu0 %v1460
      %1592 = vmatpush.bf16.msra.mxu0 %v1457
      %1593 = vmatpush.bf16.msra.mxu0 %v1454
      %1594 = vmatpush.bf16.msra.mxu0 %v1451
      %1595 = vmatpush.bf16.msra.mxu0 %v1448
      %1596 = vmatpush.bf16.msra.mxu0 %v1445
      %1597 = vmatmul.bf16.gmra.mxu0 %v1315
      %v1598 = vpop.f32.mrf.mxu0
      %v1599 = vadd.f32 %v1359, %v1598
      %v1600 = vpop.f32.mrf.mxu0
      %v1601 = vadd.f32 %v1359, %v1600
      %1602 = vmatmul.bf16.gmra.mxu0 %v1316
      %v1603 = vpop.f32.mrf.mxu0
      %v1604 = vadd.f32 %v1359, %v1603
      %v1605 = vpop.f32.mrf.mxu0
      %v1606 = vadd.f32 %v1359, %v1605
      %1607 = vmatmul.bf16.gmra.mxu0 %v1317
      %v1608 = vpop.f32.mrf.mxu0
      %v1609 = vadd.f32 %v1359, %v1608
      %v1610 = vpop.f32.mrf.mxu0
      %v1611 = vadd.f32 %v1359, %v1610
      %1612 = vmatmul.bf16.gmra.mxu0 %v1318
      %v1613 = vpop.f32.mrf.mxu0
      %v1614 = vadd.f32 %v1359, %v1613
      %v1615 = vpop.f32.mrf.mxu0
      %v1616 = vadd.f32 %v1359, %v1615
      %1617 = vmatmul.bf16.gmra.mxu0 %v1319
      %v1618 = vpop.f32.mrf.mxu0
      %v1619 = vadd.f32 %v1359, %v1618
      %v1620 = vpop.f32.mrf.mxu0
      %v1621 = vadd.f32 %v1359, %v1620
      %1622 = vmatmul.bf16.gmra.mxu0 %v1320
      %v1623 = vpop.f32.mrf.mxu0
      %v1624 = vadd.f32 %v1359, %v1623
      %v1625 = vpop.f32.mrf.mxu0
      %v1626 = vadd.f32 %v1359, %v1625
      %1627 = vmatmul.bf16.gmra.mxu0 %v1321
      %v1628 = vpop.f32.mrf.mxu0
      %v1629 = vadd.f32 %v1359, %v1628
      %v1630 = vpop.f32.mrf.mxu0
      %v1631 = vadd.f32 %v1359, %v1630
      %1632 = vmatmul.bf16.gmra.mxu0 %v1322
      %v1633 = vpop.f32.mrf.mxu0
      %v1634 = vadd.f32 %v1359, %v1633
      %v1635 = vpop.f32.mrf.mxu0
      %v1636 = vadd.f32 %v1359, %v1635
      %1637 = vdwg.mxu0
      %v1638 = vpack.c.bf16 %v1550, %v1501
      %v1639 = vpack.c.bf16 %v1599, %v1599
      %v1640 = vpack.c.bf16 %v1552, %v1503
      %v1641 = vpack.c.bf16 %v1601, %v1601
      %v1642 = vpack.c.bf16 %v1555, %v1506
      %v1643 = vpack.c.bf16 %v1604, %v1604
      %v1644 = vpack.c.bf16 %v1557, %v1508
      %v1645 = vpack.c.bf16 %v1606, %v1606
      %v1646 = vpack.c.bf16 %v1560, %v1511
      %v1647 = vpack.c.bf16 %v1609, %v1609
      %v1648 = vpack.c.bf16 %v1562, %v1513
      %v1649 = vpack.c.bf16 %v1611, %v1611
      %v1650 = vpack.c.bf16 %v1565, %v1516
      %v1651 = vpack.c.bf16 %v1614, %v1614
      %v1652 = vpack.c.bf16 %v1567, %v1518
      %v1653 = vpack.c.bf16 %v1616, %v1616
      %v1654 = vpack.c.bf16 %v1570, %v1521
      %v1655 = vpack.c.bf16 %v1619, %v1619
      %v1656 = vpack.c.bf16 %v1572, %v1523
      %v1657 = vpack.c.bf16 %v1621, %v1621
      %v1658 = vpack.c.bf16 %v1575, %v1526
      %v1659 = vpack.c.bf16 %v1624, %v1624
      %v1660 = vpack.c.bf16 %v1577, %v1528
      %v1661 = vpack.c.bf16 %v1626, %v1626
      %v1662 = vpack.c.bf16 %v1580, %v1531
      %v1663 = vpack.c.bf16 %v1629, %v1629
      %v1664 = vpack.c.bf16 %v1582, %v1533
      %v1665 = vpack.c.bf16 %v1631, %v1631
      %v1666 = vpack.c.bf16 %v1585, %v1536
      %v1667 = vpack.c.bf16 %v1634, %v1634
      %v1668 = vpack.c.bf16 %v1587, %v1538
      %v1669 = vpack.c.bf16 %v1636, %v1636
      %v1670 = vlaneseq
      %v1671 = vand.u32 %v1670, 127
      %vm1672 = vcmp.lt.s32.totalorder %v1671, 82
      %v1689 = vunpack.c.l.b16 %v1638
      %v1690 = vunpack.c.l.b16 %v1640
      %v1691 = vunpack.c.l.b16 %v1642
      %v1692 = vunpack.c.l.b16 %v1644
      %v1693 = vunpack.c.l.b16 %v1646
      %v1694 = vunpack.c.l.b16 %v1648
      %v1695 = vunpack.c.l.b16 %v1650
      %v1696 = vunpack.c.l.b16 %v1652
      %v1697 = vunpack.c.l.b16 %v1654
      %v1698 = vunpack.c.l.b16 %v1656
      %v1699 = vunpack.c.l.b16 %v1658
      %v1700 = vunpack.c.l.b16 %v1660
      %v1701 = vunpack.c.l.b16 %v1662
      %v1702 = vunpack.c.l.b16 %v1664
      %v1703 = vunpack.c.l.b16 %v1666
      %v1704 = vunpack.c.l.b16 %v1668
      %v1705 = vpack.c.b16 %v1690, %v1689
      %v1706 = vpack.c.b16 %v1692, %v1691
      %v1707 = vpack.c.b16 %v1694, %v1693
      %v1708 = vpack.c.b16 %v1696, %v1695
      %v1709 = vpack.c.b16 %v1698, %v1697
      %v1710 = vpack.c.b16 %v1700, %v1699
      %v1711 = vpack.c.b16 %v1702, %v1701
      %v1712 = vpack.c.b16 %v1704, %v1703
      %v1713 = vunpack.c.h.b16 %v1638
      %v1714 = vunpack.c.h.b16 %v1640
      %v1715 = vunpack.c.h.b16 %v1642
      %v1716 = vunpack.c.h.b16 %v1644
      %v1717 = vunpack.c.h.b16 %v1646
      %v1718 = vunpack.c.h.b16 %v1648
      %v1719 = vunpack.c.h.b16 %v1650
      %v1720 = vunpack.c.h.b16 %v1652
      %v1721 = vunpack.c.h.b16 %v1654
      %v1722 = vunpack.c.h.b16 %v1656
      %v1723 = vunpack.c.h.b16 %v1658
      %v1724 = vunpack.c.h.b16 %v1660
      %v1725 = vunpack.c.h.b16 %v1662
      %v1726 = vunpack.c.h.b16 %v1664
      %v1727 = vunpack.c.h.b16 %v1666
      %v1728 = vunpack.c.h.b16 %v1668
      %v1729 = vpack.c.b16 %v1714, %v1713
      %v1730 = vpack.c.b16 %v1716, %v1715
      %v1731 = vpack.c.b16 %v1718, %v1717
      %v1732 = vpack.c.b16 %v1720, %v1719
      %v1733 = vpack.c.b16 %v1722, %v1721
      %v1734 = vpack.c.b16 %v1724, %v1723
      %v1735 = vpack.c.b16 %v1726, %v1725
      %v1736 = vpack.c.b16 %v1728, %v1727
      %vm1737 = vcmask 261120
      %v1739 = vsel %vm1737, %v1705, 0
      %v1742 = vsel %vm1737, %v1706, 0
      %v1745 = vsel %vm1737, %v1707, 0
      %v1748 = vsel %vm1737, %v1708, 0
      %v1751 = vsel %vm1737, %v1709, 0
      %v1754 = vsel %vm1737, %v1710, 0
      %v1757 = vsel %vm1737, %v1711, 0
      %v1760 = vsel %vm1737, %v1712, 0
      %v1763 = vsel %vm1737, %v1729, 0
      %v1766 = vsel %vm1737, %v1730, 0
      %v1769 = vsel %vm1737, %v1731, 0
      %v1772 = vsel %vm1737, %v1732, 0
      %v1775 = vsel %vm1737, %v1733, 0
      %v1778 = vsel %vm1737, %v1734, 0
      %v1781 = vsel %vm1737, %v1735, 0
      %v1784 = vsel %vm1737, %v1736, 0
      %1786 = vmatpush.bf16.xpose.msra.mxu0 %v1784
      %1787 = vmatpush.bf16.xpose.msra.mxu0 %v1781
      %1788 = vmatpush.bf16.xpose.msra.mxu0 %v1778
      %1789 = vmatpush.bf16.xpose.msra.mxu0 %v1775
      %1790 = vmatpush.bf16.xpose.msra.mxu0 %v1772
      %1791 = vmatpush.bf16.xpose.msra.mxu0 %v1769
      %1792 = vmatpush.bf16.xpose.msra.mxu0 %v1766
      %1793 = vmatpush.bf16.xpose.msra.mxu0 %v1763
      %1794 = vmatmul.bf16.gmra.mxu0 %v1739
      %v1795 = vpop.f32.mrf.mxu0
      %v1796 = vadd.f32 0.0, %v1795
      %v1797 = vpop.f32.mrf.mxu0
      %v1798 = vadd.f32 0.0, %v1797
      %1799 = vmatmul.bf16.gmra.mxu0 %v1742
      %v1800 = vpop.f32.mrf.mxu0
      %v1801 = vadd.f32 0.0, %v1800
      %v1802 = vpop.f32.mrf.mxu0
      %v1803 = vadd.f32 0.0, %v1802
      %1804 = vmatmul.bf16.gmra.mxu0 %v1745
      %v1805 = vpop.f32.mrf.mxu0
      %v1806 = vadd.f32 0.0, %v1805
      %v1807 = vpop.f32.mrf.mxu0
      %v1808 = vadd.f32 0.0, %v1807
      %1809 = vmatmul.bf16.gmra.mxu0 %v1748
      %v1810 = vpop.f32.mrf.mxu0
      %v1811 = vadd.f32 0.0, %v1810
      %v1812 = vpop.f32.mrf.mxu0
      %v1813 = vadd.f32 0.0, %v1812
      %1814 = vmatmul.bf16.gmra.mxu0 %v1751
      %v1815 = vpop.f32.mrf.mxu0
      %v1816 = vadd.f32 0.0, %v1815
      %v1817 = vpop.f32.mrf.mxu0
      %v1818 = vadd.f32 0.0, %v1817
      %1819 = vmatmul.bf16.gmra.mxu0 %v1754
      %v1820 = vpop.f32.mrf.mxu0
      %v1821 = vadd.f32 0.0, %v1820
      %v1822 = vpop.f32.mrf.mxu0
      %v1823 = vadd.f32 0.0, %v1822
      %1824 = vmatmul.bf16.gmra.mxu0 %v1757
      %v1825 = vpop.f32.mrf.mxu0
      %v1826 = vadd.f32 0.0, %v1825
      %v1827 = vpop.f32.mrf.mxu0
      %v1828 = vadd.f32 0.0, %v1827
      %1829 = vmatmul.bf16.gmra.mxu0 %v1760
      %v1830 = vpop.f32.mrf.mxu0
      %v1831 = vadd.f32 0.0, %v1830
      %v1832 = vpop.f32.mrf.mxu0
      %v1833 = vadd.f32 0.0, %v1832
      %1834 = vdwg.mxu0
      %v1835 = vmul.f32 %v1796, 0.17677669
      %v1836 = vmul.f32 %v1798, 0.17677669
      %v1837 = vmul.f32 %v1801, 0.17677669
      %v1838 = vmul.f32 %v1803, 0.17677669
      %v1839 = vmul.f32 %v1806, 0.17677669
      %v1840 = vmul.f32 %v1808, 0.17677669
      %v1841 = vmul.f32 %v1811, 0.17677669
      %v1842 = vmul.f32 %v1813, 0.17677669
      %v1843 = vmul.f32 %v1816, 0.17677669
      %v1844 = vmul.f32 %v1818, 0.17677669
      %v1845 = vmul.f32 %v1821, 0.17677669
      %v1846 = vmul.f32 %v1823, 0.17677669
      %v1847 = vmul.f32 %v1826, 0.17677669
      %v1848 = vmul.f32 %v1828, 0.17677669
      %v1849 = vmul.f32 %v1831, 0.17677669
      %v1850 = vmul.f32 %v1833, 0.17677669
      %v1851 = vsel %vm1672, %v1835, -1e+30
      %v1852 = vsel %vm1672, %v1836, -1e+30
      %v1853 = vsel %vm1672, %v1837, -1e+30
      %v1854 = vsel %vm1672, %v1838, -1e+30
      %v1855 = vsel %vm1672, %v1839, -1e+30
      %v1856 = vsel %vm1672, %v1840, -1e+30
      %v1857 = vsel %vm1672, %v1841, -1e+30
      %v1858 = vsel %vm1672, %v1842, -1e+30
      %v1859 = vsel %vm1672, %v1843, -1e+30
      %v1860 = vsel %vm1672, %v1844, -1e+30
      %v1861 = vsel %vm1672, %v1845, -1e+30
      %v1862 = vsel %vm1672, %v1846, -1e+30
      %v1863 = vsel %vm1672, %v1847, -1e+30
      %v1864 = vsel %vm1672, %v1848, -1e+30
      %v1865 = vsel %vm1672, %v1849, -1e+30
      %v1866 = vsel %vm1672, %v1850, -1e+30
      %1867 = vmax.xlane.f32.xlu0 %v1851
      %v1868 = vpop.xlane.xlu0 %1867
      %1869 = vmax.xlane.f32.xlu0 %v1852
      %v1870 = vpop.xlane.xlu0 %1869
      %1871 = vmax.xlane.f32.xlu0 %v1853
      %v1872 = vpop.xlane.xlu0 %1871
      %1873 = vmax.xlane.f32.xlu0 %v1854
      %v1874 = vpop.xlane.xlu0 %1873
      %1875 = vmax.xlane.f32.xlu0 %v1855
      %v1876 = vpop.xlane.xlu0 %1875
      %1877 = vmax.xlane.f32.xlu0 %v1856
      %v1878 = vpop.xlane.xlu0 %1877
      %1879 = vmax.xlane.f32.xlu0 %v1857
      %v1880 = vpop.xlane.xlu0 %1879
      %1881 = vmax.xlane.f32.xlu0 %v1858
      %v1882 = vpop.xlane.xlu0 %1881
      %1883 = vmax.xlane.f32.xlu0 %v1859
      %v1884 = vpop.xlane.xlu0 %1883
      %1885 = vmax.xlane.f32.xlu0 %v1860
      %v1886 = vpop.xlane.xlu0 %1885
      %1887 = vmax.xlane.f32.xlu0 %v1861
      %v1888 = vpop.xlane.xlu0 %1887
      %1889 = vmax.xlane.f32.xlu0 %v1862
      %v1890 = vpop.xlane.xlu0 %1889
      %1891 = vmax.xlane.f32.xlu0 %v1863
      %v1892 = vpop.xlane.xlu0 %1891
      %1893 = vmax.xlane.f32.xlu0 %v1864
      %v1894 = vpop.xlane.xlu0 %1893
      %1895 = vmax.xlane.f32.xlu0 %v1865
      %v1896 = vpop.xlane.xlu0 %1895
      %1897 = vmax.xlane.f32.xlu0 %v1866
      %v1898 = vpop.xlane.xlu0 %1897
      %v1899 = vsub.f32 %v1851, %v1868
      %v1900 = vsub.f32 %v1852, %v1870
      %v1901 = vsub.f32 %v1853, %v1872
      %v1902 = vsub.f32 %v1854, %v1874
      %v1903 = vsub.f32 %v1855, %v1876
      %v1904 = vsub.f32 %v1856, %v1878
      %v1905 = vsub.f32 %v1857, %v1880
      %v1906 = vsub.f32 %v1858, %v1882
      %v1907 = vsub.f32 %v1859, %v1884
      %v1908 = vsub.f32 %v1860, %v1886
      %v1909 = vsub.f32 %v1861, %v1888
      %v1910 = vsub.f32 %v1862, %v1890
      %v1911 = vsub.f32 %v1863, %v1892
      %v1912 = vsub.f32 %v1864, %v1894
      %v1913 = vsub.f32 %v1865, %v1896
      %v1914 = vsub.f32 %v1866, %v1898
      %v1915 = vmul.f32 %v1899, 1.442695
      %v1916 = vpow.pop %v1915
      %v1917 = vmul.f32 %v1900, 1.442695
      %v1918 = vpow.pop %v1917
      %v1919 = vmul.f32 %v1901, 1.442695
      %v1920 = vpow.pop %v1919
      %v1921 = vmul.f32 %v1902, 1.442695
      %v1922 = vpow.pop %v1921
      %v1923 = vmul.f32 %v1903, 1.442695
      %v1924 = vpow.pop %v1923
      %v1925 = vmul.f32 %v1904, 1.442695
      %v1926 = vpow.pop %v1925
      %v1927 = vmul.f32 %v1905, 1.442695
      %v1928 = vpow.pop %v1927
      %v1929 = vmul.f32 %v1906, 1.442695
      %v1930 = vpow.pop %v1929
      %v1931 = vmul.f32 %v1907, 1.442695
      %v1932 = vpow.pop %v1931
      %v1933 = vmul.f32 %v1908, 1.442695
      %v1934 = vpow.pop %v1933
      %v1935 = vmul.f32 %v1909, 1.442695
      %v1936 = vpow.pop %v1935
      %v1937 = vmul.f32 %v1910, 1.442695
      %v1938 = vpow.pop %v1937
      %v1939 = vmul.f32 %v1911, 1.442695
      %v1940 = vpow.pop %v1939
      %v1941 = vmul.f32 %v1912, 1.442695
      %v1942 = vpow.pop %v1941
      %v1943 = vmul.f32 %v1913, 1.442695
      %v1944 = vpow.pop %v1943
      %v1945 = vmul.f32 %v1914, 1.442695
      %v1946 = vpow.pop %v1945
      %1947 = vadd.xlane.f32.xlu0 %v1916
      %v1948 = vpop.xlane.xlu0 %1947
      %1949 = vadd.xlane.f32.xlu0 %v1918
      %v1950 = vpop.xlane.xlu0 %1949
      %1951 = vadd.xlane.f32.xlu0 %v1920
      %v1952 = vpop.xlane.xlu0 %1951
      %1953 = vadd.xlane.f32.xlu0 %v1922
      %v1954 = vpop.xlane.xlu0 %1953
      %1955 = vadd.xlane.f32.xlu0 %v1924
      %v1956 = vpop.xlane.xlu0 %1955
      %1957 = vadd.xlane.f32.xlu0 %v1926
      %v1958 = vpop.xlane.xlu0 %1957
      %1959 = vadd.xlane.f32.xlu0 %v1928
      %v1960 = vpop.xlane.xlu0 %1959
      %1961 = vadd.xlane.f32.xlu0 %v1930
      %v1962 = vpop.xlane.xlu0 %1961
      %1963 = vadd.xlane.f32.xlu0 %v1932
      %v1964 = vpop.xlane.xlu0 %1963
      %1965 = vadd.xlane.f32.xlu0 %v1934
      %v1966 = vpop.xlane.xlu0 %1965
      %1967 = vadd.xlane.f32.xlu0 %v1936
      %v1968 = vpop.xlane.xlu0 %1967
      %1969 = vadd.xlane.f32.xlu0 %v1938
      %v1970 = vpop.xlane.xlu0 %1969
      %1971 = vadd.xlane.f32.xlu0 %v1940
      %v1972 = vpop.xlane.xlu0 %1971
      %1973 = vadd.xlane.f32.xlu0 %v1942
      %v1974 = vpop.xlane.xlu0 %1973
      %1975 = vadd.xlane.f32.xlu0 %v1944
      %v1976 = vpop.xlane.xlu0 %1975
      %1977 = vadd.xlane.f32.xlu0 %v1946
      %v1978 = vpop.xlane.xlu0 %1977
      %v1979 = vrcp.pop %v1948
      %v1980 = vrcp.pop %v1950
      %v1981 = vrcp.pop %v1952
      %v1982 = vrcp.pop %v1954
      %v1983 = vrcp.pop %v1956
      %v1984 = vrcp.pop %v1958
      %v1985 = vrcp.pop %v1960
      %v1986 = vrcp.pop %v1962
      %v1987 = vrcp.pop %v1964
      %v1988 = vrcp.pop %v1966
      %v1989 = vrcp.pop %v1968
      %v1990 = vrcp.pop %v1970
      %v1991 = vrcp.pop %v1972
      %v1992 = vrcp.pop %v1974
      %v1993 = vrcp.pop %v1976
      %v1994 = vrcp.pop %v1978
      %v1995 = vmul.f32 %v1916, %v1979
      %v1996 = vmul.f32 %v1918, %v1980
      %v1997 = vmul.f32 %v1920, %v1981
      %v1998 = vmul.f32 %v1922, %v1982
      %v1999 = vmul.f32 %v1924, %v1983
      %v2000 = vmul.f32 %v1926, %v1984
      %v2001 = vmul.f32 %v1928, %v1985
      %v2002 = vmul.f32 %v1930, %v1986
      %v2003 = vmul.f32 %v1932, %v1987
      %v2004 = vmul.f32 %v1934, %v1988
      %v2005 = vmul.f32 %v1936, %v1989
      %v2006 = vmul.f32 %v1938, %v1990
      %v2007 = vmul.f32 %v1940, %v1991
      %v2008 = vmul.f32 %v1942, %v1992
      %v2009 = vmul.f32 %v1944, %v1993
      %v2010 = vmul.f32 %v1946, %v1994
      %v2011 = vpack.c.bf16 %v1996, %v1995
      %v2012 = vpack.c.bf16 %v1998, %v1997
      %v2013 = vpack.c.bf16 %v2000, %v1999
      %v2014 = vpack.c.bf16 %v2002, %v2001
      %v2015 = vpack.c.bf16 %v2004, %v2003
      %v2016 = vpack.c.bf16 %v2006, %v2005
      %v2017 = vpack.c.bf16 %v2008, %v2007
      %v2018 = vpack.c.bf16 %v2010, %v2009
      %v2035 = vunpack.c.l.b16 %v1639
      %v2036 = vunpack.c.l.b16 %v1641
      %v2037 = vunpack.c.l.b16 %v1643
      %v2038 = vunpack.c.l.b16 %v1645
      %v2039 = vunpack.c.l.b16 %v1647
      %v2040 = vunpack.c.l.b16 %v1649
      %v2041 = vunpack.c.l.b16 %v1651
      %v2042 = vunpack.c.l.b16 %v1653
      %v2043 = vunpack.c.l.b16 %v1655
      %v2044 = vunpack.c.l.b16 %v1657
      %v2045 = vunpack.c.l.b16 %v1659
      %v2046 = vunpack.c.l.b16 %v1661
      %v2047 = vunpack.c.l.b16 %v1663
      %v2048 = vunpack.c.l.b16 %v1665
      %v2049 = vunpack.c.l.b16 %v1667
      %v2050 = vunpack.c.l.b16 %v1669
      %v2051 = vpack.c.b16 %v2036, %v2035
      %v2052 = vpack.c.b16 %v2038, %v2037
      %v2053 = vpack.c.b16 %v2040, %v2039
      %v2054 = vpack.c.b16 %v2042, %v2041
      %v2055 = vpack.c.b16 %v2044, %v2043
      %v2056 = vpack.c.b16 %v2046, %v2045
      %v2057 = vpack.c.b16 %v2048, %v2047
      %v2058 = vpack.c.b16 %v2050, %v2049
      %2067 = vmatpush.bf16.msra.mxu0 %v2058
      %2068 = vmatpush.bf16.msra.mxu0 %v2057
      %2069 = vmatpush.bf16.msra.mxu0 %v2056
      %2070 = vmatpush.bf16.msra.mxu0 %v2055
      %2071 = vmatpush.bf16.msra.mxu0 %v2054
      %2072 = vmatpush.bf16.msra.mxu0 %v2053
      %2073 = vmatpush.bf16.msra.mxu0 %v2052
      %2074 = vmatpush.bf16.msra.mxu0 %v2051
      %2075 = vmatmul.bf16.gmra.mxu0 %v2011
      %v2076 = vpop.f32.mrf.mxu0
      %v2077 = vadd.f32 0.0, %v2076
      %v2078 = vpop.f32.mrf.mxu0
      %v2079 = vadd.f32 0.0, %v2078
      %2080 = vmatmul.bf16.gmra.mxu0 %v2012
      %v2081 = vpop.f32.mrf.mxu0
      %v2082 = vadd.f32 0.0, %v2081
      %v2083 = vpop.f32.mrf.mxu0
      %v2084 = vadd.f32 0.0, %v2083
      %2085 = vmatmul.bf16.gmra.mxu0 %v2013
      %v2086 = vpop.f32.mrf.mxu0
      %v2087 = vadd.f32 0.0, %v2086
      %v2088 = vpop.f32.mrf.mxu0
      %v2089 = vadd.f32 0.0, %v2088
      %2090 = vmatmul.bf16.gmra.mxu0 %v2014
      %v2091 = vpop.f32.mrf.mxu0
      %v2092 = vadd.f32 0.0, %v2091
      %v2093 = vpop.f32.mrf.mxu0
      %v2094 = vadd.f32 0.0, %v2093
      %2095 = vmatmul.bf16.gmra.mxu0 %v2015
      %v2096 = vpop.f32.mrf.mxu0
      %v2097 = vadd.f32 0.0, %v2096
      %v2098 = vpop.f32.mrf.mxu0
      %v2099 = vadd.f32 0.0, %v2098
      %2100 = vmatmul.bf16.gmra.mxu0 %v2016
      %v2101 = vpop.f32.mrf.mxu0
      %v2102 = vadd.f32 0.0, %v2101
      %v2103 = vpop.f32.mrf.mxu0
      %v2104 = vadd.f32 0.0, %v2103
      %2105 = vmatmul.bf16.gmra.mxu0 %v2017
      %v2106 = vpop.f32.mrf.mxu0
      %v2107 = vadd.f32 0.0, %v2106
      %v2108 = vpop.f32.mrf.mxu0
      %v2109 = vadd.f32 0.0, %v2108
      %2110 = vmatmul.bf16.gmra.mxu0 %v2018
      %v2111 = vpop.f32.mrf.mxu0
      %v2112 = vadd.f32 0.0, %v2111
      %v2113 = vpop.f32.mrf.mxu0
      %v2114 = vadd.f32 0.0, %v2113
      %2115 = vdwg.mxu0
      %2116 = vrot.lane.b32.xlu0 %v1705, 96
      %v2117 = vpop.permute.xlu0 %2116
      %2118 = vrot.lane.b32.xlu0 %v1706, 96
      %v2119 = vpop.permute.xlu0 %2118
      %2120 = vrot.lane.b32.xlu0 %v1707, 96
      %v2121 = vpop.permute.xlu0 %2120
      %2122 = vrot.lane.b32.xlu0 %v1708, 96
      %v2123 = vpop.permute.xlu0 %2122
      %2124 = vrot.lane.b32.xlu0 %v1709, 96
      %v2125 = vpop.permute.xlu0 %2124
      %2126 = vrot.lane.b32.xlu0 %v1710, 96
      %v2127 = vpop.permute.xlu0 %2126
      %2128 = vrot.lane.b32.xlu0 %v1711, 96
      %v2129 = vpop.permute.xlu0 %2128
      %2130 = vrot.lane.b32.xlu0 %v1712, 96
      %v2131 = vpop.permute.xlu0 %2130
      %2132 = vrot.lane.b32.xlu0 %v1729, 96
      %v2133 = vpop.permute.xlu0 %2132
      %2134 = vrot.lane.b32.xlu0 %v1730, 96
      %v2135 = vpop.permute.xlu0 %2134
      %2136 = vrot.lane.b32.xlu0 %v1731, 96
      %v2137 = vpop.permute.xlu0 %2136
      %2138 = vrot.lane.b32.xlu0 %v1732, 96
      %v2139 = vpop.permute.xlu0 %2138
      %2140 = vrot.lane.b32.xlu0 %v1733, 96
      %v2141 = vpop.permute.xlu0 %2140
      %2142 = vrot.lane.b32.xlu0 %v1734, 96
      %v2143 = vpop.permute.xlu0 %2142
      %2144 = vrot.lane.b32.xlu0 %v1735, 96
      %v2145 = vpop.permute.xlu0 %2144
      %2146 = vrot.lane.b32.xlu0 %v1736, 96
      %v2147 = vpop.permute.xlu0 %2146
      %v2149 = vsel %vm1737, %v2117, 0
      %v2152 = vsel %vm1737, %v2119, 0
      %v2155 = vsel %vm1737, %v2121, 0
      %v2158 = vsel %vm1737, %v2123, 0
      %v2161 = vsel %vm1737, %v2125, 0
      %v2164 = vsel %vm1737, %v2127, 0
      %v2167 = vsel %vm1737, %v2129, 0
      %v2170 = vsel %vm1737, %v2131, 0
      %v2173 = vsel %vm1737, %v2133, 0
      %v2176 = vsel %vm1737, %v2135, 0
      %v2179 = vsel %vm1737, %v2137, 0
      %v2182 = vsel %vm1737, %v2139, 0
      %v2185 = vsel %vm1737, %v2141, 0
      %v2188 = vsel %vm1737, %v2143, 0
      %v2191 = vsel %vm1737, %v2145, 0
      %v2194 = vsel %vm1737, %v2147, 0
      %2196 = vmatpush.bf16.xpose.msra.mxu0 %v2194
      %2197 = vmatpush.bf16.xpose.msra.mxu0 %v2191
      %2198 = vmatpush.bf16.xpose.msra.mxu0 %v2188
      %2199 = vmatpush.bf16.xpose.msra.mxu0 %v2185
      %2200 = vmatpush.bf16.xpose.msra.mxu0 %v2182
      %2201 = vmatpush.bf16.xpose.msra.mxu0 %v2179
      %2202 = vmatpush.bf16.xpose.msra.mxu0 %v2176
      %2203 = vmatpush.bf16.xpose.msra.mxu0 %v2173
      %2204 = vmatmul.bf16.gmra.mxu0 %v2149
      %v2205 = vpop.f32.mrf.mxu0
      %v2206 = vadd.f32 0.0, %v2205
      %v2207 = vpop.f32.mrf.mxu0
      %v2208 = vadd.f32 0.0, %v2207
      %2209 = vmatmul.bf16.gmra.mxu0 %v2152
      %v2210 = vpop.f32.mrf.mxu0
      %v2211 = vadd.f32 0.0, %v2210
      %v2212 = vpop.f32.mrf.mxu0
      %v2213 = vadd.f32 0.0, %v2212
      %2214 = vmatmul.bf16.gmra.mxu0 %v2155
      %v2215 = vpop.f32.mrf.mxu0
      %v2216 = vadd.f32 0.0, %v2215
      %v2217 = vpop.f32.mrf.mxu0
      %v2218 = vadd.f32 0.0, %v2217
      %2219 = vmatmul.bf16.gmra.mxu0 %v2158
      %v2220 = vpop.f32.mrf.mxu0
      %v2221 = vadd.f32 0.0, %v2220
      %v2222 = vpop.f32.mrf.mxu0
      %v2223 = vadd.f32 0.0, %v2222
      %2224 = vmatmul.bf16.gmra.mxu0 %v2161
      %v2225 = vpop.f32.mrf.mxu0
      %v2226 = vadd.f32 0.0, %v2225
      %v2227 = vpop.f32.mrf.mxu0
      %v2228 = vadd.f32 0.0, %v2227
      %2229 = vmatmul.bf16.gmra.mxu0 %v2164
      %v2230 = vpop.f32.mrf.mxu0
      %v2231 = vadd.f32 0.0, %v2230
      %v2232 = vpop.f32.mrf.mxu0
      %v2233 = vadd.f32 0.0, %v2232
      %2234 = vmatmul.bf16.gmra.mxu0 %v2167
      %v2235 = vpop.f32.mrf.mxu0
      %v2236 = vadd.f32 0.0, %v2235
      %v2237 = vpop.f32.mrf.mxu0
      %v2238 = vadd.f32 0.0, %v2237
      %2239 = vmatmul.bf16.gmra.mxu0 %v2170
      %v2240 = vpop.f32.mrf.mxu0
      %v2241 = vadd.f32 0.0, %v2240
      %v2242 = vpop.f32.mrf.mxu0
      %v2243 = vadd.f32 0.0, %v2242
      %2244 = vdwg.mxu0
      %v2245 = vmul.f32 %v2206, 0.17677669
      %v2246 = vmul.f32 %v2208, 0.17677669
      %v2247 = vmul.f32 %v2211, 0.17677669
      %v2248 = vmul.f32 %v2213, 0.17677669
      %v2249 = vmul.f32 %v2216, 0.17677669
      %v2250 = vmul.f32 %v2218, 0.17677669
      %v2251 = vmul.f32 %v2221, 0.17677669
      %v2252 = vmul.f32 %v2223, 0.17677669
      %v2253 = vmul.f32 %v2226, 0.17677669
      %v2254 = vmul.f32 %v2228, 0.17677669
      %v2255 = vmul.f32 %v2231, 0.17677669
      %v2256 = vmul.f32 %v2233, 0.17677669
      %v2257 = vmul.f32 %v2236, 0.17677669
      %v2258 = vmul.f32 %v2238, 0.17677669
      %v2259 = vmul.f32 %v2241, 0.17677669
      %v2260 = vmul.f32 %v2243, 0.17677669
      %v2261 = vsel %vm1672, %v2245, -1e+30
      %v2262 = vsel %vm1672, %v2246, -1e+30
      %v2263 = vsel %vm1672, %v2247, -1e+30
      %v2264 = vsel %vm1672, %v2248, -1e+30
      %v2265 = vsel %vm1672, %v2249, -1e+30
      %v2266 = vsel %vm1672, %v2250, -1e+30
      %v2267 = vsel %vm1672, %v2251, -1e+30
      %v2268 = vsel %vm1672, %v2252, -1e+30
      %v2269 = vsel %vm1672, %v2253, -1e+30
      %v2270 = vsel %vm1672, %v2254, -1e+30
      %v2271 = vsel %vm1672, %v2255, -1e+30
      %v2272 = vsel %vm1672, %v2256, -1e+30
      %v2273 = vsel %vm1672, %v2257, -1e+30
      %v2274 = vsel %vm1672, %v2258, -1e+30
      %v2275 = vsel %vm1672, %v2259, -1e+30
      %v2276 = vsel %vm1672, %v2260, -1e+30
      %2277 = vmax.xlane.f32.xlu0 %v2261
      %v2278 = vpop.xlane.xlu0 %2277
      %2279 = vmax.xlane.f32.xlu0 %v2262
      %v2280 = vpop.xlane.xlu0 %2279
      %2281 = vmax.xlane.f32.xlu0 %v2263
      %v2282 = vpop.xlane.xlu0 %2281
      %2283 = vmax.xlane.f32.xlu0 %v2264
      %v2284 = vpop.xlane.xlu0 %2283
      %2285 = vmax.xlane.f32.xlu0 %v2265
      %v2286 = vpop.xlane.xlu0 %2285
      %2287 = vmax.xlane.f32.xlu0 %v2266
      %v2288 = vpop.xlane.xlu0 %2287
      %2289 = vmax.xlane.f32.xlu0 %v2267
      %v2290 = vpop.xlane.xlu0 %2289
      %2291 = vmax.xlane.f32.xlu0 %v2268
      %v2292 = vpop.xlane.xlu0 %2291
      %2293 = vmax.xlane.f32.xlu0 %v2269
      %v2294 = vpop.xlane.xlu0 %2293
      %2295 = vmax.xlane.f32.xlu0 %v2270
      %v2296 = vpop.xlane.xlu0 %2295
      %2297 = vmax.xlane.f32.xlu0 %v2271
      %v2298 = vpop.xlane.xlu0 %2297
      %2299 = vmax.xlane.f32.xlu0 %v2272
      %v2300 = vpop.xlane.xlu0 %2299
      %2301 = vmax.xlane.f32.xlu0 %v2273
      %v2302 = vpop.xlane.xlu0 %2301
      %2303 = vmax.xlane.f32.xlu0 %v2274
      %v2304 = vpop.xlane.xlu0 %2303
      %2305 = vmax.xlane.f32.xlu0 %v2275
      %v2306 = vpop.xlane.xlu0 %2305
      %2307 = vmax.xlane.f32.xlu0 %v2276
      %v2308 = vpop.xlane.xlu0 %2307
      %v2309 = vsub.f32 %v2261, %v2278
      %v2310 = vsub.f32 %v2262, %v2280
      %v2311 = vsub.f32 %v2263, %v2282
      %v2312 = vsub.f32 %v2264, %v2284
      %v2313 = vsub.f32 %v2265, %v2286
      %v2314 = vsub.f32 %v2266, %v2288
      %v2315 = vsub.f32 %v2267, %v2290
      %v2316 = vsub.f32 %v2268, %v2292
      %v2317 = vsub.f32 %v2269, %v2294
      %v2318 = vsub.f32 %v2270, %v2296
      %v2319 = vsub.f32 %v2271, %v2298
      %v2320 = vsub.f32 %v2272, %v2300
      %v2321 = vsub.f32 %v2273, %v2302
      %v2322 = vsub.f32 %v2274, %v2304
      %v2323 = vsub.f32 %v2275, %v2306
      %v2324 = vsub.f32 %v2276, %v2308
      %v2325 = vmul.f32 %v2309, 1.442695
      %v2326 = vpow.pop %v2325
      %v2327 = vmul.f32 %v2310, 1.442695
      %v2328 = vpow.pop %v2327
      %v2329 = vmul.f32 %v2311, 1.442695
      %v2330 = vpow.pop %v2329
      %v2331 = vmul.f32 %v2312, 1.442695
      %v2332 = vpow.pop %v2331
      %v2333 = vmul.f32 %v2313, 1.442695
      %v2334 = vpow.pop %v2333
      %v2335 = vmul.f32 %v2314, 1.442695
      %v2336 = vpow.pop %v2335
      %v2337 = vmul.f32 %v2315, 1.442695
      %v2338 = vpow.pop %v2337
      %v2339 = vmul.f32 %v2316, 1.442695
      %v2340 = vpow.pop %v2339
      %v2341 = vmul.f32 %v2317, 1.442695
      %v2342 = vpow.pop %v2341
      %v2343 = vmul.f32 %v2318, 1.442695
      %v2344 = vpow.pop %v2343
      %v2345 = vmul.f32 %v2319, 1.442695
      %v2346 = vpow.pop %v2345
      %v2347 = vmul.f32 %v2320, 1.442695
      %v2348 = vpow.pop %v2347
      %v2349 = vmul.f32 %v2321, 1.442695
      %v2350 = vpow.pop %v2349
      %v2351 = vmul.f32 %v2322, 1.442695
      %v2352 = vpow.pop %v2351
      %v2353 = vmul.f32 %v2323, 1.442695
      %v2354 = vpow.pop %v2353
      %v2355 = vmul.f32 %v2324, 1.442695
      %v2356 = vpow.pop %v2355
      %2357 = vadd.xlane.f32.xlu0 %v2326
      %v2358 = vpop.xlane.xlu0 %2357
      %2359 = vadd.xlane.f32.xlu0 %v2328
      %v2360 = vpop.xlane.xlu0 %2359
      %2361 = vadd.xlane.f32.xlu0 %v2330
      %v2362 = vpop.xlane.xlu0 %2361
      %2363 = vadd.xlane.f32.xlu0 %v2332
      %v2364 = vpop.xlane.xlu0 %2363
      %2365 = vadd.xlane.f32.xlu0 %v2334
      %v2366 = vpop.xlane.xlu0 %2365
      %2367 = vadd.xlane.f32.xlu0 %v2336
      %v2368 = vpop.xlane.xlu0 %2367
      %2369 = vadd.xlane.f32.xlu0 %v2338
      %v2370 = vpop.xlane.xlu0 %2369
      %2371 = vadd.xlane.f32.xlu0 %v2340
      %v2372 = vpop.xlane.xlu0 %2371
      %2373 = vadd.xlane.f32.xlu0 %v2342
      %v2374 = vpop.xlane.xlu0 %2373
      %2375 = vadd.xlane.f32.xlu0 %v2344
      %v2376 = vpop.xlane.xlu0 %2375
      %2377 = vadd.xlane.f32.xlu0 %v2346
      %v2378 = vpop.xlane.xlu0 %2377
      %2379 = vadd.xlane.f32.xlu0 %v2348
      %v2380 = vpop.xlane.xlu0 %2379
      %2381 = vadd.xlane.f32.xlu0 %v2350
      %v2382 = vpop.xlane.xlu0 %2381
      %2383 = vadd.xlane.f32.xlu0 %v2352
      %v2384 = vpop.xlane.xlu0 %2383
      %2385 = vadd.xlane.f32.xlu0 %v2354
      %v2386 = vpop.xlane.xlu0 %2385
      %2387 = vadd.xlane.f32.xlu0 %v2356
      %v2388 = vpop.xlane.xlu0 %2387
      %v2389 = vrcp.pop %v2358
      %v2390 = vrcp.pop %v2360
      %v2391 = vrcp.pop %v2362
      %v2392 = vrcp.pop %v2364
      %v2393 = vrcp.pop %v2366
      %v2394 = vrcp.pop %v2368
      %v2395 = vrcp.pop %v2370
      %v2396 = vrcp.pop %v2372
      %v2397 = vrcp.pop %v2374
      %v2398 = vrcp.pop %v2376
      %v2399 = vrcp.pop %v2378
      %v2400 = vrcp.pop %v2380
      %v2401 = vrcp.pop %v2382
      %v2402 = vrcp.pop %v2384
      %v2403 = vrcp.pop %v2386
      %v2404 = vrcp.pop %v2388
      %v2405 = vmul.f32 %v2326, %v2389
      %v2406 = vmul.f32 %v2328, %v2390
      %v2407 = vmul.f32 %v2330, %v2391
      %v2408 = vmul.f32 %v2332, %v2392
      %v2409 = vmul.f32 %v2334, %v2393
      %v2410 = vmul.f32 %v2336, %v2394
      %v2411 = vmul.f32 %v2338, %v2395
      %v2412 = vmul.f32 %v2340, %v2396
      %v2413 = vmul.f32 %v2342, %v2397
      %v2414 = vmul.f32 %v2344, %v2398
      %v2415 = vmul.f32 %v2346, %v2399
      %v2416 = vmul.f32 %v2348, %v2400
      %v2417 = vmul.f32 %v2350, %v2401
      %v2418 = vmul.f32 %v2352, %v2402
      %v2419 = vmul.f32 %v2354, %v2403
      %v2420 = vmul.f32 %v2356, %v2404
      %v2421 = vpack.c.bf16 %v2406, %v2405
      %v2422 = vpack.c.bf16 %v2408, %v2407
      %v2423 = vpack.c.bf16 %v2410, %v2409
      %v2424 = vpack.c.bf16 %v2412, %v2411
      %v2425 = vpack.c.bf16 %v2414, %v2413
      %v2426 = vpack.c.bf16 %v2416, %v2415
      %v2427 = vpack.c.bf16 %v2418, %v2417
      %v2428 = vpack.c.bf16 %v2420, %v2419
      %2429 = vrot.lane.b32.xlu0 %v2051, 96
      %v2430 = vpop.permute.xlu0 %2429
      %2431 = vrot.lane.b32.xlu0 %v2052, 96
      %v2432 = vpop.permute.xlu0 %2431
      %2433 = vrot.lane.b32.xlu0 %v2053, 96
      %v2434 = vpop.permute.xlu0 %2433
      %2435 = vrot.lane.b32.xlu0 %v2054, 96
      %v2436 = vpop.permute.xlu0 %2435
      %2437 = vrot.lane.b32.xlu0 %v2055, 96
      %v2438 = vpop.permute.xlu0 %2437
      %2439 = vrot.lane.b32.xlu0 %v2056, 96
      %v2440 = vpop.permute.xlu0 %2439
      %2441 = vrot.lane.b32.xlu0 %v2057, 96
      %v2442 = vpop.permute.xlu0 %2441
      %2443 = vrot.lane.b32.xlu0 %v2058, 96
      %v2444 = vpop.permute.xlu0 %2443
      %2453 = vmatpush.bf16.msra.mxu0 %v2444
      %2454 = vmatpush.bf16.msra.mxu0 %v2442
      %2455 = vmatpush.bf16.msra.mxu0 %v2440
      %2456 = vmatpush.bf16.msra.mxu0 %v2438
      %2457 = vmatpush.bf16.msra.mxu0 %v2436
      %2458 = vmatpush.bf16.msra.mxu0 %v2434
      %2459 = vmatpush.bf16.msra.mxu0 %v2432
      %2460 = vmatpush.bf16.msra.mxu0 %v2430
      %2461 = vmatmul.bf16.gmra.mxu0 %v2421
      %v2462 = vpop.f32.mrf.mxu0
      %v2463 = vadd.f32 0.0, %v2462
      %v2464 = vpop.f32.mrf.mxu0
      %v2465 = vadd.f32 0.0, %v2464
      %2466 = vmatmul.bf16.gmra.mxu0 %v2422
      %v2467 = vpop.f32.mrf.mxu0
      %v2468 = vadd.f32 0.0, %v2467
      %v2469 = vpop.f32.mrf.mxu0
      %v2470 = vadd.f32 0.0, %v2469
      %2471 = vmatmul.bf16.gmra.mxu0 %v2423
      %v2472 = vpop.f32.mrf.mxu0
      %v2473 = vadd.f32 0.0, %v2472
      %v2474 = vpop.f32.mrf.mxu0
      %v2475 = vadd.f32 0.0, %v2474
      %2476 = vmatmul.bf16.gmra.mxu0 %v2424
      %v2477 = vpop.f32.mrf.mxu0
      %v2478 = vadd.f32 0.0, %v2477
      %v2479 = vpop.f32.mrf.mxu0
      %v2480 = vadd.f32 0.0, %v2479
      %2481 = vmatmul.bf16.gmra.mxu0 %v2425
      %v2482 = vpop.f32.mrf.mxu0
      %v2483 = vadd.f32 0.0, %v2482
      %v2484 = vpop.f32.mrf.mxu0
      %v2485 = vadd.f32 0.0, %v2484
      %2486 = vmatmul.bf16.gmra.mxu0 %v2426
      %v2487 = vpop.f32.mrf.mxu0
      %v2488 = vadd.f32 0.0, %v2487
      %v2489 = vpop.f32.mrf.mxu0
      %v2490 = vadd.f32 0.0, %v2489
      %2491 = vmatmul.bf16.gmra.mxu0 %v2427
      %v2492 = vpop.f32.mrf.mxu0
      %v2493 = vadd.f32 0.0, %v2492
      %v2494 = vpop.f32.mrf.mxu0
      %v2495 = vadd.f32 0.0, %v2494
      %2496 = vmatmul.bf16.gmra.mxu0 %v2428
      %v2497 = vpop.f32.mrf.mxu0
      %v2498 = vadd.f32 0.0, %v2497
      %v2499 = vpop.f32.mrf.mxu0
      %v2500 = vadd.f32 0.0, %v2499
      %2501 = vdwg.mxu0
      %2502 = vrot.lane.b32.xlu0 %v1705, 64
      %v2503 = vpop.permute.xlu0 %2502
      %2504 = vrot.lane.b32.xlu0 %v1706, 64
      %v2505 = vpop.permute.xlu0 %2504
      %2506 = vrot.lane.b32.xlu0 %v1707, 64
      %v2507 = vpop.permute.xlu0 %2506
      %2508 = vrot.lane.b32.xlu0 %v1708, 64
      %v2509 = vpop.permute.xlu0 %2508
      %2510 = vrot.lane.b32.xlu0 %v1709, 64
      %v2511 = vpop.permute.xlu0 %2510
      %2512 = vrot.lane.b32.xlu0 %v1710, 64
      %v2513 = vpop.permute.xlu0 %2512
      %2514 = vrot.lane.b32.xlu0 %v1711, 64
      %v2515 = vpop.permute.xlu0 %2514
      %2516 = vrot.lane.b32.xlu0 %v1712, 64
      %v2517 = vpop.permute.xlu0 %2516
      %2518 = vrot.lane.b32.xlu0 %v1729, 64
      %v2519 = vpop.permute.xlu0 %2518
      %2520 = vrot.lane.b32.xlu0 %v1730, 64
      %v2521 = vpop.permute.xlu0 %2520
      %2522 = vrot.lane.b32.xlu0 %v1731, 64
      %v2523 = vpop.permute.xlu0 %2522
      %2524 = vrot.lane.b32.xlu0 %v1732, 64
      %v2525 = vpop.permute.xlu0 %2524
      %2526 = vrot.lane.b32.xlu0 %v1733, 64
      %v2527 = vpop.permute.xlu0 %2526
      %2528 = vrot.lane.b32.xlu0 %v1734, 64
      %v2529 = vpop.permute.xlu0 %2528
      %2530 = vrot.lane.b32.xlu0 %v1735, 64
      %v2531 = vpop.permute.xlu0 %2530
      %2532 = vrot.lane.b32.xlu0 %v1736, 64
      %v2533 = vpop.permute.xlu0 %2532
      %v2535 = vsel %vm1737, %v2503, 0
      %v2538 = vsel %vm1737, %v2505, 0
      %v2541 = vsel %vm1737, %v2507, 0
      %v2544 = vsel %vm1737, %v2509, 0
      %v2547 = vsel %vm1737, %v2511, 0
      %v2550 = vsel %vm1737, %v2513, 0
      %v2553 = vsel %vm1737, %v2515, 0
      %v2556 = vsel %vm1737, %v2517, 0
      %v2559 = vsel %vm1737, %v2519, 0
      %v2562 = vsel %vm1737, %v2521, 0
      %v2565 = vsel %vm1737, %v2523, 0
      %v2568 = vsel %vm1737, %v2525, 0
      %v2571 = vsel %vm1737, %v2527, 0
      %v2574 = vsel %vm1737, %v2529, 0
      %v2577 = vsel %vm1737, %v2531, 0
      %v2580 = vsel %vm1737, %v2533, 0
      %2582 = vmatpush.bf16.xpose.msra.mxu0 %v2580
      %2583 = vmatpush.bf16.xpose.msra.mxu0 %v2577
      %2584 = vmatpush.bf16.xpose.msra.mxu0 %v2574
      %2585 = vmatpush.bf16.xpose.msra.mxu0 %v2571
      %2586 = vmatpush.bf16.xpose.msra.mxu0 %v2568
      %2587 = vmatpush.bf16.xpose.msra.mxu0 %v2565
      %2588 = vmatpush.bf16.xpose.msra.mxu0 %v2562
      %2589 = vmatpush.bf16.xpose.msra.mxu0 %v2559
      %2590 = vmatmul.bf16.gmra.mxu0 %v2535
      %v2591 = vpop.f32.mrf.mxu0
      %v2592 = vadd.f32 0.0, %v2591
      %v2593 = vpop.f32.mrf.mxu0
      %v2594 = vadd.f32 0.0, %v2593
      %2595 = vmatmul.bf16.gmra.mxu0 %v2538
      %v2596 = vpop.f32.mrf.mxu0
      %v2597 = vadd.f32 0.0, %v2596
      %v2598 = vpop.f32.mrf.mxu0
      %v2599 = vadd.f32 0.0, %v2598
      %2600 = vmatmul.bf16.gmra.mxu0 %v2541
      %v2601 = vpop.f32.mrf.mxu0
      %v2602 = vadd.f32 0.0, %v2601
      %v2603 = vpop.f32.mrf.mxu0
      %v2604 = vadd.f32 0.0, %v2603
      %2605 = vmatmul.bf16.gmra.mxu0 %v2544
      %v2606 = vpop.f32.mrf.mxu0
      %v2607 = vadd.f32 0.0, %v2606
      %v2608 = vpop.f32.mrf.mxu0
      %v2609 = vadd.f32 0.0, %v2608
      %2610 = vmatmul.bf16.gmra.mxu0 %v2547
      %v2611 = vpop.f32.mrf.mxu0
      %v2612 = vadd.f32 0.0, %v2611
      %v2613 = vpop.f32.mrf.mxu0
      %v2614 = vadd.f32 0.0, %v2613
      %2615 = vmatmul.bf16.gmra.mxu0 %v2550
      %v2616 = vpop.f32.mrf.mxu0
      %v2617 = vadd.f32 0.0, %v2616
      %v2618 = vpop.f32.mrf.mxu0
      %v2619 = vadd.f32 0.0, %v2618
      %2620 = vmatmul.bf16.gmra.mxu0 %v2553
      %v2621 = vpop.f32.mrf.mxu0
      %v2622 = vadd.f32 0.0, %v2621
      %v2623 = vpop.f32.mrf.mxu0
      %v2624 = vadd.f32 0.0, %v2623
      %2625 = vmatmul.bf16.gmra.mxu0 %v2556
      %v2626 = vpop.f32.mrf.mxu0
      %v2627 = vadd.f32 0.0, %v2626
      %v2628 = vpop.f32.mrf.mxu0
      %v2629 = vadd.f32 0.0, %v2628
      %2630 = vdwg.mxu0
      %v2631 = vmul.f32 %v2592, 0.17677669
      %v2632 = vmul.f32 %v2594, 0.17677669
      %v2633 = vmul.f32 %v2597, 0.17677669
      %v2634 = vmul.f32 %v2599, 0.17677669
      %v2635 = vmul.f32 %v2602, 0.17677669
      %v2636 = vmul.f32 %v2604, 0.17677669
      %v2637 = vmul.f32 %v2607, 0.17677669
      %v2638 = vmul.f32 %v2609, 0.17677669
      %v2639 = vmul.f32 %v2612, 0.17677669
      %v2640 = vmul.f32 %v2614, 0.17677669
      %v2641 = vmul.f32 %v2617, 0.17677669
      %v2642 = vmul.f32 %v2619, 0.17677669
      %v2643 = vmul.f32 %v2622, 0.17677669
      %v2644 = vmul.f32 %v2624, 0.17677669
      %v2645 = vmul.f32 %v2627, 0.17677669
      %v2646 = vmul.f32 %v2629, 0.17677669
      %v2647 = vsel %vm1672, %v2631, -1e+30
      %v2648 = vsel %vm1672, %v2632, -1e+30
      %v2649 = vsel %vm1672, %v2633, -1e+30
      %v2650 = vsel %vm1672, %v2634, -1e+30
      %v2651 = vsel %vm1672, %v2635, -1e+30
      %v2652 = vsel %vm1672, %v2636, -1e+30
      %v2653 = vsel %vm1672, %v2637, -1e+30
      %v2654 = vsel %vm1672, %v2638, -1e+30
      %v2655 = vsel %vm1672, %v2639, -1e+30
      %v2656 = vsel %vm1672, %v2640, -1e+30
      %v2657 = vsel %vm1672, %v2641, -1e+30
      %v2658 = vsel %vm1672, %v2642, -1e+30
      %v2659 = vsel %vm1672, %v2643, -1e+30
      %v2660 = vsel %vm1672, %v2644, -1e+30
      %v2661 = vsel %vm1672, %v2645, -1e+30
      %v2662 = vsel %vm1672, %v2646, -1e+30
      %2663 = vmax.xlane.f32.xlu0 %v2647
      %v2664 = vpop.xlane.xlu0 %2663
      %2665 = vmax.xlane.f32.xlu0 %v2648
      %v2666 = vpop.xlane.xlu0 %2665
      %2667 = vmax.xlane.f32.xlu0 %v2649
      %v2668 = vpop.xlane.xlu0 %2667
      %2669 = vmax.xlane.f32.xlu0 %v2650
      %v2670 = vpop.xlane.xlu0 %2669
      %2671 = vmax.xlane.f32.xlu0 %v2651
      %v2672 = vpop.xlane.xlu0 %2671
      %2673 = vmax.xlane.f32.xlu0 %v2652
      %v2674 = vpop.xlane.xlu0 %2673
      %2675 = vmax.xlane.f32.xlu0 %v2653
      %v2676 = vpop.xlane.xlu0 %2675
      %2677 = vmax.xlane.f32.xlu0 %v2654
      %v2678 = vpop.xlane.xlu0 %2677
      %2679 = vmax.xlane.f32.xlu0 %v2655
      %v2680 = vpop.xlane.xlu0 %2679
      %2681 = vmax.xlane.f32.xlu0 %v2656
      %v2682 = vpop.xlane.xlu0 %2681
      %2683 = vmax.xlane.f32.xlu0 %v2657
      %v2684 = vpop.xlane.xlu0 %2683
      %2685 = vmax.xlane.f32.xlu0 %v2658
      %v2686 = vpop.xlane.xlu0 %2685
      %2687 = vmax.xlane.f32.xlu0 %v2659
      %v2688 = vpop.xlane.xlu0 %2687
      %2689 = vmax.xlane.f32.xlu0 %v2660
      %v2690 = vpop.xlane.xlu0 %2689
      %2691 = vmax.xlane.f32.xlu0 %v2661
      %v2692 = vpop.xlane.xlu0 %2691
      %2693 = vmax.xlane.f32.xlu0 %v2662
      %v2694 = vpop.xlane.xlu0 %2693
      %v2695 = vsub.f32 %v2647, %v2664
      %v2696 = vsub.f32 %v2648, %v2666
      %v2697 = vsub.f32 %v2649, %v2668
      %v2698 = vsub.f32 %v2650, %v2670
      %v2699 = vsub.f32 %v2651, %v2672
      %v2700 = vsub.f32 %v2652, %v2674
      %v2701 = vsub.f32 %v2653, %v2676
      %v2702 = vsub.f32 %v2654, %v2678
      %v2703 = vsub.f32 %v2655, %v2680
      %v2704 = vsub.f32 %v2656, %v2682
      %v2705 = vsub.f32 %v2657, %v2684
      %v2706 = vsub.f32 %v2658, %v2686
      %v2707 = vsub.f32 %v2659, %v2688
      %v2708 = vsub.f32 %v2660, %v2690
      %v2709 = vsub.f32 %v2661, %v2692
      %v2710 = vsub.f32 %v2662, %v2694
      %v2711 = vmul.f32 %v2695, 1.442695
      %v2712 = vpow.pop %v2711
      %v2713 = vmul.f32 %v2696, 1.442695
      %v2714 = vpow.pop %v2713
      %v2715 = vmul.f32 %v2697, 1.442695
      %v2716 = vpow.pop %v2715
      %v2717 = vmul.f32 %v2698, 1.442695
      %v2718 = vpow.pop %v2717
      %v2719 = vmul.f32 %v2699, 1.442695
      %v2720 = vpow.pop %v2719
      %v2721 = vmul.f32 %v2700, 1.442695
      %v2722 = vpow.pop %v2721
      %v2723 = vmul.f32 %v2701, 1.442695
      %v2724 = vpow.pop %v2723
      %v2725 = vmul.f32 %v2702, 1.442695
      %v2726 = vpow.pop %v2725
      %v2727 = vmul.f32 %v2703, 1.442695
      %v2728 = vpow.pop %v2727
      %v2729 = vmul.f32 %v2704, 1.442695
      %v2730 = vpow.pop %v2729
      %v2731 = vmul.f32 %v2705, 1.442695
      %v2732 = vpow.pop %v2731
      %v2733 = vmul.f32 %v2706, 1.442695
      %v2734 = vpow.pop %v2733
      %v2735 = vmul.f32 %v2707, 1.442695
      %v2736 = vpow.pop %v2735
      %v2737 = vmul.f32 %v2708, 1.442695
      %v2738 = vpow.pop %v2737
      %v2739 = vmul.f32 %v2709, 1.442695
      %v2740 = vpow.pop %v2739
      %v2741 = vmul.f32 %v2710, 1.442695
      %v2742 = vpow.pop %v2741
      %2743 = vadd.xlane.f32.xlu0 %v2712
      %v2744 = vpop.xlane.xlu0 %2743
      %2745 = vadd.xlane.f32.xlu0 %v2714
      %v2746 = vpop.xlane.xlu0 %2745
      %2747 = vadd.xlane.f32.xlu0 %v2716
      %v2748 = vpop.xlane.xlu0 %2747
      %2749 = vadd.xlane.f32.xlu0 %v2718
      %v2750 = vpop.xlane.xlu0 %2749
      %2751 = vadd.xlane.f32.xlu0 %v2720
      %v2752 = vpop.xlane.xlu0 %2751
      %2753 = vadd.xlane.f32.xlu0 %v2722
      %v2754 = vpop.xlane.xlu0 %2753
      %2755 = vadd.xlane.f32.xlu0 %v2724
      %v2756 = vpop.xlane.xlu0 %2755
      %2757 = vadd.xlane.f32.xlu0 %v2726
      %v2758 = vpop.xlane.xlu0 %2757
      %2759 = vadd.xlane.f32.xlu0 %v2728
      %v2760 = vpop.xlane.xlu0 %2759
      %2761 = vadd.xlane.f32.xlu0 %v2730
      %v2762 = vpop.xlane.xlu0 %2761
      %2763 = vadd.xlane.f32.xlu0 %v2732
      %v2764 = vpop.xlane.xlu0 %2763
      %2765 = vadd.xlane.f32.xlu0 %v2734
      %v2766 = vpop.xlane.xlu0 %2765
      %2767 = vadd.xlane.f32.xlu0 %v2736
      %v2768 = vpop.xlane.xlu0 %2767
      %2769 = vadd.xlane.f32.xlu0 %v2738
      %v2770 = vpop.xlane.xlu0 %2769
      %2771 = vadd.xlane.f32.xlu0 %v2740
      %v2772 = vpop.xlane.xlu0 %2771
      %2773 = vadd.xlane.f32.xlu0 %v2742
      %v2774 = vpop.xlane.xlu0 %2773
      %v2775 = vrcp.pop %v2744
      %v2776 = vrcp.pop %v2746
      %v2777 = vrcp.pop %v2748
      %v2778 = vrcp.pop %v2750
      %v2779 = vrcp.pop %v2752
      %v2780 = vrcp.pop %v2754
      %v2781 = vrcp.pop %v2756
      %v2782 = vrcp.pop %v2758
      %v2783 = vrcp.pop %v2760
      %v2784 = vrcp.pop %v2762
      %v2785 = vrcp.pop %v2764
      %v2786 = vrcp.pop %v2766
      %v2787 = vrcp.pop %v2768
      %v2788 = vrcp.pop %v2770
      %v2789 = vrcp.pop %v2772
      %v2790 = vrcp.pop %v2774
      %v2791 = vmul.f32 %v2712, %v2775
      %v2792 = vmul.f32 %v2714, %v2776
      %v2793 = vmul.f32 %v2716, %v2777
      %v2794 = vmul.f32 %v2718, %v2778
      %v2795 = vmul.f32 %v2720, %v2779
      %v2796 = vmul.f32 %v2722, %v2780
      %v2797 = vmul.f32 %v2724, %v2781
      %v2798 = vmul.f32 %v2726, %v2782
      %v2799 = vmul.f32 %v2728, %v2783
      %v2800 = vmul.f32 %v2730, %v2784
      %v2801 = vmul.f32 %v2732, %v2785
      %v2802 = vmul.f32 %v2734, %v2786
      %v2803 = vmul.f32 %v2736, %v2787
      %v2804 = vmul.f32 %v2738, %v2788
      %v2805 = vmul.f32 %v2740, %v2789
      %v2806 = vmul.f32 %v2742, %v2790
      %v2807 = vpack.c.bf16 %v2792, %v2791
      %v2808 = vpack.c.bf16 %v2794, %v2793
      %v2809 = vpack.c.bf16 %v2796, %v2795
      %v2810 = vpack.c.bf16 %v2798, %v2797
      %v2811 = vpack.c.bf16 %v2800, %v2799
      %v2812 = vpack.c.bf16 %v2802, %v2801
      %v2813 = vpack.c.bf16 %v2804, %v2803
      %v2814 = vpack.c.bf16 %v2806, %v2805
      %2815 = vrot.lane.b32.xlu0 %v2051, 64
      %v2816 = vpop.permute.xlu0 %2815
      %2817 = vrot.lane.b32.xlu0 %v2052, 64
      %v2818 = vpop.permute.xlu0 %2817
      %2819 = vrot.lane.b32.xlu0 %v2053, 64
      %v2820 = vpop.permute.xlu0 %2819
      %2821 = vrot.lane.b32.xlu0 %v2054, 64
      %v2822 = vpop.permute.xlu0 %2821
      %2823 = vrot.lane.b32.xlu0 %v2055, 64
      %v2824 = vpop.permute.xlu0 %2823
      %2825 = vrot.lane.b32.xlu0 %v2056, 64
      %v2826 = vpop.permute.xlu0 %2825
      %2827 = vrot.lane.b32.xlu0 %v2057, 64
      %v2828 = vpop.permute.xlu0 %2827
      %2829 = vrot.lane.b32.xlu0 %v2058, 64
      %v2830 = vpop.permute.xlu0 %2829
      %2839 = vmatpush.bf16.msra.mxu0 %v2830
      %2840 = vmatpush.bf16.msra.mxu0 %v2828
      %2841 = vmatpush.bf16.msra.mxu0 %v2826
      %2842 = vmatpush.bf16.msra.mxu0 %v2824
      %2843 = vmatpush.bf16.msra.mxu0 %v2822
      %2844 = vmatpush.bf16.msra.mxu0 %v2820
      %2845 = vmatpush.bf16.msra.mxu0 %v2818
      %2846 = vmatpush.bf16.msra.mxu0 %v2816
      %2847 = vmatmul.bf16.gmra.mxu0 %v2807
      %v2848 = vpop.f32.mrf.mxu0
      %v2849 = vadd.f32 0.0, %v2848
      %v2850 = vpop.f32.mrf.mxu0
      %v2851 = vadd.f32 0.0, %v2850
      %2852 = vmatmul.bf16.gmra.mxu0 %v2808
      %v2853 = vpop.f32.mrf.mxu0
      %v2854 = vadd.f32 0.0, %v2853
      %v2855 = vpop.f32.mrf.mxu0
      %v2856 = vadd.f32 0.0, %v2855
      %2857 = vmatmul.bf16.gmra.mxu0 %v2809
      %v2858 = vpop.f32.mrf.mxu0
      %v2859 = vadd.f32 0.0, %v2858
      %v2860 = vpop.f32.mrf.mxu0
      %v2861 = vadd.f32 0.0, %v2860
      %2862 = vmatmul.bf16.gmra.mxu0 %v2810
      %v2863 = vpop.f32.mrf.mxu0
      %v2864 = vadd.f32 0.0, %v2863
      %v2865 = vpop.f32.mrf.mxu0
      %v2866 = vadd.f32 0.0, %v2865
      %2867 = vmatmul.bf16.gmra.mxu0 %v2811
      %v2868 = vpop.f32.mrf.mxu0
      %v2869 = vadd.f32 0.0, %v2868
      %v2870 = vpop.f32.mrf.mxu0
      %v2871 = vadd.f32 0.0, %v2870
      %2872 = vmatmul.bf16.gmra.mxu0 %v2812
      %v2873 = vpop.f32.mrf.mxu0
      %v2874 = vadd.f32 0.0, %v2873
      %v2875 = vpop.f32.mrf.mxu0
      %v2876 = vadd.f32 0.0, %v2875
      %2877 = vmatmul.bf16.gmra.mxu0 %v2813
      %v2878 = vpop.f32.mrf.mxu0
      %v2879 = vadd.f32 0.0, %v2878
      %v2880 = vpop.f32.mrf.mxu0
      %v2881 = vadd.f32 0.0, %v2880
      %2882 = vmatmul.bf16.gmra.mxu0 %v2814
      %v2883 = vpop.f32.mrf.mxu0
      %v2884 = vadd.f32 0.0, %v2883
      %v2885 = vpop.f32.mrf.mxu0
      %v2886 = vadd.f32 0.0, %v2885
      %2887 = vdwg.mxu0
      %2888 = vrot.lane.b32.xlu0 %v1705, 32
      %v2889 = vpop.permute.xlu0 %2888
      %2890 = vrot.lane.b32.xlu0 %v1706, 32
      %v2891 = vpop.permute.xlu0 %2890
      %2892 = vrot.lane.b32.xlu0 %v1707, 32
      %v2893 = vpop.permute.xlu0 %2892
      %2894 = vrot.lane.b32.xlu0 %v1708, 32
      %v2895 = vpop.permute.xlu0 %2894
      %2896 = vrot.lane.b32.xlu0 %v1709, 32
      %v2897 = vpop.permute.xlu0 %2896
      %2898 = vrot.lane.b32.xlu0 %v1710, 32
      %v2899 = vpop.permute.xlu0 %2898
      %2900 = vrot.lane.b32.xlu0 %v1711, 32
      %v2901 = vpop.permute.xlu0 %2900
      %2902 = vrot.lane.b32.xlu0 %v1712, 32
      %v2903 = vpop.permute.xlu0 %2902
      %2904 = vrot.lane.b32.xlu0 %v1729, 32
      %v2905 = vpop.permute.xlu0 %2904
      %2906 = vrot.lane.b32.xlu0 %v1730, 32
      %v2907 = vpop.permute.xlu0 %2906
      %2908 = vrot.lane.b32.xlu0 %v1731, 32
      %v2909 = vpop.permute.xlu0 %2908
      %2910 = vrot.lane.b32.xlu0 %v1732, 32
      %v2911 = vpop.permute.xlu0 %2910
      %2912 = vrot.lane.b32.xlu0 %v1733, 32
      %v2913 = vpop.permute.xlu0 %2912
      %2914 = vrot.lane.b32.xlu0 %v1734, 32
      %v2915 = vpop.permute.xlu0 %2914
      %2916 = vrot.lane.b32.xlu0 %v1735, 32
      %v2917 = vpop.permute.xlu0 %2916
      %2918 = vrot.lane.b32.xlu0 %v1736, 32
      %v2919 = vpop.permute.xlu0 %2918
      %v2921 = vsel %vm1737, %v2889, 0
      %v2924 = vsel %vm1737, %v2891, 0
      %v2927 = vsel %vm1737, %v2893, 0
      %v2930 = vsel %vm1737, %v2895, 0
      %v2933 = vsel %vm1737, %v2897, 0
      %v2936 = vsel %vm1737, %v2899, 0
      %v2939 = vsel %vm1737, %v2901, 0
      %v2942 = vsel %vm1737, %v2903, 0
      %v2945 = vsel %vm1737, %v2905, 0
      %v2948 = vsel %vm1737, %v2907, 0
      %v2951 = vsel %vm1737, %v2909, 0
      %v2954 = vsel %vm1737, %v2911, 0
      %v2957 = vsel %vm1737, %v2913, 0
      %v2960 = vsel %vm1737, %v2915, 0
      %v2963 = vsel %vm1737, %v2917, 0
      %v2966 = vsel %vm1737, %v2919, 0
      %2968 = vmatpush.bf16.xpose.msra.mxu0 %v2966
      %2969 = vmatpush.bf16.xpose.msra.mxu0 %v2963
      %2970 = vmatpush.bf16.xpose.msra.mxu0 %v2960
      %2971 = vmatpush.bf16.xpose.msra.mxu0 %v2957
      %2972 = vmatpush.bf16.xpose.msra.mxu0 %v2954
      %2973 = vmatpush.bf16.xpose.msra.mxu0 %v2951
      %2974 = vmatpush.bf16.xpose.msra.mxu0 %v2948
      %2975 = vmatpush.bf16.xpose.msra.mxu0 %v2945
      %2976 = vmatmul.bf16.gmra.mxu0 %v2921
      %v2977 = vpop.f32.mrf.mxu0
      %v2978 = vadd.f32 0.0, %v2977
      %v2979 = vpop.f32.mrf.mxu0
      %v2980 = vadd.f32 0.0, %v2979
      %2981 = vmatmul.bf16.gmra.mxu0 %v2924
      %v2982 = vpop.f32.mrf.mxu0
      %v2983 = vadd.f32 0.0, %v2982
      %v2984 = vpop.f32.mrf.mxu0
      %v2985 = vadd.f32 0.0, %v2984
      %2986 = vmatmul.bf16.gmra.mxu0 %v2927
      %v2987 = vpop.f32.mrf.mxu0
      %v2988 = vadd.f32 0.0, %v2987
      %v2989 = vpop.f32.mrf.mxu0
      %v2990 = vadd.f32 0.0, %v2989
      %2991 = vmatmul.bf16.gmra.mxu0 %v2930
      %v2992 = vpop.f32.mrf.mxu0
      %v2993 = vadd.f32 0.0, %v2992
      %v2994 = vpop.f32.mrf.mxu0
      %v2995 = vadd.f32 0.0, %v2994
      %2996 = vmatmul.bf16.gmra.mxu0 %v2933
      %v2997 = vpop.f32.mrf.mxu0
      %v2998 = vadd.f32 0.0, %v2997
      %v2999 = vpop.f32.mrf.mxu0
      %v3000 = vadd.f32 0.0, %v2999
      %3001 = vmatmul.bf16.gmra.mxu0 %v2936
      %v3002 = vpop.f32.mrf.mxu0
      %v3003 = vadd.f32 0.0, %v3002
      %v3004 = vpop.f32.mrf.mxu0
      %v3005 = vadd.f32 0.0, %v3004
      %3006 = vmatmul.bf16.gmra.mxu0 %v2939
      %v3007 = vpop.f32.mrf.mxu0
      %v3008 = vadd.f32 0.0, %v3007
      %v3009 = vpop.f32.mrf.mxu0
      %v3010 = vadd.f32 0.0, %v3009
      %3011 = vmatmul.bf16.gmra.mxu0 %v2942
      %v3012 = vpop.f32.mrf.mxu0
      %v3013 = vadd.f32 0.0, %v3012
      %v3014 = vpop.f32.mrf.mxu0
      %v3015 = vadd.f32 0.0, %v3014
      %3016 = vdwg.mxu0
      %v3017 = vmul.f32 %v2978, 0.17677669
      %v3018 = vmul.f32 %v2980, 0.17677669
      %v3019 = vmul.f32 %v2983, 0.17677669
      %v3020 = vmul.f32 %v2985, 0.17677669
      %v3021 = vmul.f32 %v2988, 0.17677669
      %v3022 = vmul.f32 %v2990, 0.17677669
      %v3023 = vmul.f32 %v2993, 0.17677669
      %v3024 = vmul.f32 %v2995, 0.17677669
      %v3025 = vmul.f32 %v2998, 0.17677669
      %v3026 = vmul.f32 %v3000, 0.17677669
      %v3027 = vmul.f32 %v3003, 0.17677669
      %v3028 = vmul.f32 %v3005, 0.17677669
      %v3029 = vmul.f32 %v3008, 0.17677669
      %v3030 = vmul.f32 %v3010, 0.17677669
      %v3031 = vmul.f32 %v3013, 0.17677669
      %v3032 = vmul.f32 %v3015, 0.17677669
      %v3033 = vsel %vm1672, %v3017, -1e+30
      %v3034 = vsel %vm1672, %v3018, -1e+30
      %v3035 = vsel %vm1672, %v3019, -1e+30
      %v3036 = vsel %vm1672, %v3020, -1e+30
      %v3037 = vsel %vm1672, %v3021, -1e+30
      %v3038 = vsel %vm1672, %v3022, -1e+30
      %v3039 = vsel %vm1672, %v3023, -1e+30
      %v3040 = vsel %vm1672, %v3024, -1e+30
      %v3041 = vsel %vm1672, %v3025, -1e+30
      %v3042 = vsel %vm1672, %v3026, -1e+30
      %v3043 = vsel %vm1672, %v3027, -1e+30
      %v3044 = vsel %vm1672, %v3028, -1e+30
      %v3045 = vsel %vm1672, %v3029, -1e+30
      %v3046 = vsel %vm1672, %v3030, -1e+30
      %v3047 = vsel %vm1672, %v3031, -1e+30
      %v3048 = vsel %vm1672, %v3032, -1e+30
      %3049 = vmax.xlane.f32.xlu0 %v3033
      %v3050 = vpop.xlane.xlu0 %3049
      %3051 = vmax.xlane.f32.xlu0 %v3034
      %v3052 = vpop.xlane.xlu0 %3051
      %3053 = vmax.xlane.f32.xlu0 %v3035
      %v3054 = vpop.xlane.xlu0 %3053
      %3055 = vmax.xlane.f32.xlu0 %v3036
      %v3056 = vpop.xlane.xlu0 %3055
      %3057 = vmax.xlane.f32.xlu0 %v3037
      %v3058 = vpop.xlane.xlu0 %3057
      %3059 = vmax.xlane.f32.xlu0 %v3038
      %v3060 = vpop.xlane.xlu0 %3059
      %3061 = vmax.xlane.f32.xlu0 %v3039
      %v3062 = vpop.xlane.xlu0 %3061
      %3063 = vmax.xlane.f32.xlu0 %v3040
      %v3064 = vpop.xlane.xlu0 %3063
      %3065 = vmax.xlane.f32.xlu0 %v3041
      %v3066 = vpop.xlane.xlu0 %3065
      %3067 = vmax.xlane.f32.xlu0 %v3042
      %v3068 = vpop.xlane.xlu0 %3067
      %3069 = vmax.xlane.f32.xlu0 %v3043
      %v3070 = vpop.xlane.xlu0 %3069
      %3071 = vmax.xlane.f32.xlu0 %v3044
      %v3072 = vpop.xlane.xlu0 %3071
      %3073 = vmax.xlane.f32.xlu0 %v3045
      %v3074 = vpop.xlane.xlu0 %3073
      %3075 = vmax.xlane.f32.xlu0 %v3046
      %v3076 = vpop.xlane.xlu0 %3075
      %3077 = vmax.xlane.f32.xlu0 %v3047
      %v3078 = vpop.xlane.xlu0 %3077
      %3079 = vmax.xlane.f32.xlu0 %v3048
      %v3080 = vpop.xlane.xlu0 %3079
      %v3081 = vsub.f32 %v3033, %v3050
      %v3082 = vsub.f32 %v3034, %v3052
      %v3083 = vsub.f32 %v3035, %v3054
      %v3084 = vsub.f32 %v3036, %v3056
      %v3085 = vsub.f32 %v3037, %v3058
      %v3086 = vsub.f32 %v3038, %v3060
      %v3087 = vsub.f32 %v3039, %v3062
      %v3088 = vsub.f32 %v3040, %v3064
      %v3089 = vsub.f32 %v3041, %v3066
      %v3090 = vsub.f32 %v3042, %v3068
      %v3091 = vsub.f32 %v3043, %v3070
      %v3092 = vsub.f32 %v3044, %v3072
      %v3093 = vsub.f32 %v3045, %v3074
      %v3094 = vsub.f32 %v3046, %v3076
      %v3095 = vsub.f32 %v3047, %v3078
      %v3096 = vsub.f32 %v3048, %v3080
      %v3097 = vmul.f32 %v3081, 1.442695
      %v3098 = vpow.pop %v3097
      %v3099 = vmul.f32 %v3082, 1.442695
      %v3100 = vpow.pop %v3099
      %v3101 = vmul.f32 %v3083, 1.442695
      %v3102 = vpow.pop %v3101
      %v3103 = vmul.f32 %v3084, 1.442695
      %v3104 = vpow.pop %v3103
      %v3105 = vmul.f32 %v3085, 1.442695
      %v3106 = vpow.pop %v3105
      %v3107 = vmul.f32 %v3086, 1.442695
      %v3108 = vpow.pop %v3107
      %v3109 = vmul.f32 %v3087, 1.442695
      %v3110 = vpow.pop %v3109
      %v3111 = vmul.f32 %v3088, 1.442695
      %v3112 = vpow.pop %v3111
      %v3113 = vmul.f32 %v3089, 1.442695
      %v3114 = vpow.pop %v3113
      %v3115 = vmul.f32 %v3090, 1.442695
      %v3116 = vpow.pop %v3115
      %v3117 = vmul.f32 %v3091, 1.442695
      %v3118 = vpow.pop %v3117
      %v3119 = vmul.f32 %v3092, 1.442695
      %v3120 = vpow.pop %v3119
      %v3121 = vmul.f32 %v3093, 1.442695
      %v3122 = vpow.pop %v3121
      %v3123 = vmul.f32 %v3094, 1.442695
      %v3124 = vpow.pop %v3123
      %v3125 = vmul.f32 %v3095, 1.442695
      %v3126 = vpow.pop %v3125
      %v3127 = vmul.f32 %v3096, 1.442695
      %v3128 = vpow.pop %v3127
      %3129 = vadd.xlane.f32.xlu0 %v3098
      %v3130 = vpop.xlane.xlu0 %3129
      %3131 = vadd.xlane.f32.xlu0 %v3100
      %v3132 = vpop.xlane.xlu0 %3131
      %3133 = vadd.xlane.f32.xlu0 %v3102
      %v3134 = vpop.xlane.xlu0 %3133
      %3135 = vadd.xlane.f32.xlu0 %v3104
      %v3136 = vpop.xlane.xlu0 %3135
      %3137 = vadd.xlane.f32.xlu0 %v3106
      %v3138 = vpop.xlane.xlu0 %3137
      %3139 = vadd.xlane.f32.xlu0 %v3108
      %v3140 = vpop.xlane.xlu0 %3139
      %3141 = vadd.xlane.f32.xlu0 %v3110
      %v3142 = vpop.xlane.xlu0 %3141
      %3143 = vadd.xlane.f32.xlu0 %v3112
      %v3144 = vpop.xlane.xlu0 %3143
      %3145 = vadd.xlane.f32.xlu0 %v3114
      %v3146 = vpop.xlane.xlu0 %3145
      %3147 = vadd.xlane.f32.xlu0 %v3116
      %v3148 = vpop.xlane.xlu0 %3147
      %3149 = vadd.xlane.f32.xlu0 %v3118
      %v3150 = vpop.xlane.xlu0 %3149
      %3151 = vadd.xlane.f32.xlu0 %v3120
      %v3152 = vpop.xlane.xlu0 %3151
      %3153 = vadd.xlane.f32.xlu0 %v3122
      %v3154 = vpop.xlane.xlu0 %3153
      %3155 = vadd.xlane.f32.xlu0 %v3124
      %v3156 = vpop.xlane.xlu0 %3155
      %3157 = vadd.xlane.f32.xlu0 %v3126
      %v3158 = vpop.xlane.xlu0 %3157
      %3159 = vadd.xlane.f32.xlu0 %v3128
      %v3160 = vpop.xlane.xlu0 %3159
      %v3161 = vrcp.pop %v3130
      %v3162 = vrcp.pop %v3132
      %v3163 = vrcp.pop %v3134
      %v3164 = vrcp.pop %v3136
      %v3165 = vrcp.pop %v3138
      %v3166 = vrcp.pop %v3140
      %v3167 = vrcp.pop %v3142
      %v3168 = vrcp.pop %v3144
      %v3169 = vrcp.pop %v3146
      %v3170 = vrcp.pop %v3148
      %v3171 = vrcp.pop %v3150
      %v3172 = vrcp.pop %v3152
      %v3173 = vrcp.pop %v3154
      %v3174 = vrcp.pop %v3156
      %v3175 = vrcp.pop %v3158
      %v3176 = vrcp.pop %v3160
      %v3177 = vmul.f32 %v3098, %v3161
      %v3178 = vmul.f32 %v3100, %v3162
      %v3179 = vmul.f32 %v3102, %v3163
      %v3180 = vmul.f32 %v3104, %v3164
      %v3181 = vmul.f32 %v3106, %v3165
      %v3182 = vmul.f32 %v3108, %v3166
      %v3183 = vmul.f32 %v3110, %v3167
      %v3184 = vmul.f32 %v3112, %v3168
      %v3185 = vmul.f32 %v3114, %v3169
      %v3186 = vmul.f32 %v3116, %v3170
      %v3187 = vmul.f32 %v3118, %v3171
      %v3188 = vmul.f32 %v3120, %v3172
      %v3189 = vmul.f32 %v3122, %v3173
      %v3190 = vmul.f32 %v3124, %v3174
      %v3191 = vmul.f32 %v3126, %v3175
      %v3192 = vmul.f32 %v3128, %v3176
      %v3193 = vpack.c.bf16 %v3178, %v3177
      %v3194 = vpack.c.bf16 %v3180, %v3179
      %v3195 = vpack.c.bf16 %v3182, %v3181
      %v3196 = vpack.c.bf16 %v3184, %v3183
      %v3197 = vpack.c.bf16 %v3186, %v3185
      %v3198 = vpack.c.bf16 %v3188, %v3187
      %v3199 = vpack.c.bf16 %v3190, %v3189
      %v3200 = vpack.c.bf16 %v3192, %v3191
      %3201 = vrot.lane.b32.xlu0 %v2051, 32
      %v3202 = vpop.permute.xlu0 %3201
      %3203 = vrot.lane.b32.xlu0 %v2052, 32
      %v3204 = vpop.permute.xlu0 %3203
      %3205 = vrot.lane.b32.xlu0 %v2053, 32
      %v3206 = vpop.permute.xlu0 %3205
      %3207 = vrot.lane.b32.xlu0 %v2054, 32
      %v3208 = vpop.permute.xlu0 %3207
      %3209 = vrot.lane.b32.xlu0 %v2055, 32
      %v3210 = vpop.permute.xlu0 %3209
      %3211 = vrot.lane.b32.xlu0 %v2056, 32
      %v3212 = vpop.permute.xlu0 %3211
      %3213 = vrot.lane.b32.xlu0 %v2057, 32
      %v3214 = vpop.permute.xlu0 %3213
      %3215 = vrot.lane.b32.xlu0 %v2058, 32
      %v3216 = vpop.permute.xlu0 %3215
      %3225 = vmatpush.bf16.msra.mxu0 %v3216
      %3226 = vmatpush.bf16.msra.mxu0 %v3214
      %3227 = vmatpush.bf16.msra.mxu0 %v3212
      %3228 = vmatpush.bf16.msra.mxu0 %v3210
      %3229 = vmatpush.bf16.msra.mxu0 %v3208
      %3230 = vmatpush.bf16.msra.mxu0 %v3206
      %3231 = vmatpush.bf16.msra.mxu0 %v3204
      %3232 = vmatpush.bf16.msra.mxu0 %v3202
      %3233 = vmatmul.bf16.gmra.mxu0 %v3193
      %v3234 = vpop.f32.mrf.mxu0
      %v3235 = vadd.f32 0.0, %v3234
      %v3236 = vpop.f32.mrf.mxu0
      %v3237 = vadd.f32 0.0, %v3236
      %3238 = vmatmul.bf16.gmra.mxu0 %v3194
      %v3239 = vpop.f32.mrf.mxu0
      %v3240 = vadd.f32 0.0, %v3239
      %v3241 = vpop.f32.mrf.mxu0
      %v3242 = vadd.f32 0.0, %v3241
      %3243 = vmatmul.bf16.gmra.mxu0 %v3195
      %v3244 = vpop.f32.mrf.mxu0
      %v3245 = vadd.f32 0.0, %v3244
      %v3246 = vpop.f32.mrf.mxu0
      %v3247 = vadd.f32 0.0, %v3246
      %3248 = vmatmul.bf16.gmra.mxu0 %v3196
      %v3249 = vpop.f32.mrf.mxu0
      %v3250 = vadd.f32 0.0, %v3249
      %v3251 = vpop.f32.mrf.mxu0
      %v3252 = vadd.f32 0.0, %v3251
      %3253 = vmatmul.bf16.gmra.mxu0 %v3197
      %v3254 = vpop.f32.mrf.mxu0
      %v3255 = vadd.f32 0.0, %v3254
      %v3256 = vpop.f32.mrf.mxu0
      %v3257 = vadd.f32 0.0, %v3256
      %3258 = vmatmul.bf16.gmra.mxu0 %v3198
      %v3259 = vpop.f32.mrf.mxu0
      %v3260 = vadd.f32 0.0, %v3259
      %v3261 = vpop.f32.mrf.mxu0
      %v3262 = vadd.f32 0.0, %v3261
      %3263 = vmatmul.bf16.gmra.mxu0 %v3199
      %v3264 = vpop.f32.mrf.mxu0
      %v3265 = vadd.f32 0.0, %v3264
      %v3266 = vpop.f32.mrf.mxu0
      %v3267 = vadd.f32 0.0, %v3266
      %3268 = vmatmul.bf16.gmra.mxu0 %v3200
      %v3269 = vpop.f32.mrf.mxu0
      %v3270 = vadd.f32 0.0, %v3269
      %v3271 = vpop.f32.mrf.mxu0
      %v3272 = vadd.f32 0.0, %v3271
      %3273 = vdwg.mxu0
      %3290 = vrot.lane.b32.xlu0 %v2463, 32
      %v3291 = vpop.permute.xlu0 %3290
      %3292 = vrot.lane.b32.xlu0 %v2465, 32
      %v3293 = vpop.permute.xlu0 %3292
      %3294 = vrot.lane.b32.xlu0 %v2468, 32
      %v3295 = vpop.permute.xlu0 %3294
      %3296 = vrot.lane.b32.xlu0 %v2470, 32
      %v3297 = vpop.permute.xlu0 %3296
      %3298 = vrot.lane.b32.xlu0 %v2473, 32
      %v3299 = vpop.permute.xlu0 %3298
      %3300 = vrot.lane.b32.xlu0 %v2475, 32
      %v3301 = vpop.permute.xlu0 %3300
      %3302 = vrot.lane.b32.xlu0 %v2478, 32
      %v3303 = vpop.permute.xlu0 %3302
      %3304 = vrot.lane.b32.xlu0 %v2480, 32
      %v3305 = vpop.permute.xlu0 %3304
      %3306 = vrot.lane.b32.xlu0 %v2483, 32
      %v3307 = vpop.permute.xlu0 %3306
      %3308 = vrot.lane.b32.xlu0 %v2485, 32
      %v3309 = vpop.permute.xlu0 %3308
      %3310 = vrot.lane.b32.xlu0 %v2488, 32
      %v3311 = vpop.permute.xlu0 %3310
      %3312 = vrot.lane.b32.xlu0 %v2490, 32
      %v3313 = vpop.permute.xlu0 %3312
      %3314 = vrot.lane.b32.xlu0 %v2493, 32
      %v3315 = vpop.permute.xlu0 %3314
      %3316 = vrot.lane.b32.xlu0 %v2495, 32
      %v3317 = vpop.permute.xlu0 %3316
      %3318 = vrot.lane.b32.xlu0 %v2498, 32
      %v3319 = vpop.permute.xlu0 %3318
      %3320 = vrot.lane.b32.xlu0 %v2500, 32
      %v3321 = vpop.permute.xlu0 %3320
      %3354 = vrot.lane.b32.xlu0 %v2849, 64
      %v3355 = vpop.permute.xlu0 %3354
      %3356 = vrot.lane.b32.xlu0 %v2851, 64
      %v3357 = vpop.permute.xlu0 %3356
      %3358 = vrot.lane.b32.xlu0 %v2854, 64
      %v3359 = vpop.permute.xlu0 %3358
      %3360 = vrot.lane.b32.xlu0 %v2856, 64
      %v3361 = vpop.permute.xlu0 %3360
      %3362 = vrot.lane.b32.xlu0 %v2859, 64
      %v3363 = vpop.permute.xlu0 %3362
      %3364 = vrot.lane.b32.xlu0 %v2861, 64
      %v3365 = vpop.permute.xlu0 %3364
      %3366 = vrot.lane.b32.xlu0 %v2864, 64
      %v3367 = vpop.permute.xlu0 %3366
      %3368 = vrot.lane.b32.xlu0 %v2866, 64
      %v3369 = vpop.permute.xlu0 %3368
      %3370 = vrot.lane.b32.xlu0 %v2869, 64
      %v3371 = vpop.permute.xlu0 %3370
      %3372 = vrot.lane.b32.xlu0 %v2871, 64
      %v3373 = vpop.permute.xlu0 %3372
      %3374 = vrot.lane.b32.xlu0 %v2874, 64
      %v3375 = vpop.permute.xlu0 %3374
      %3376 = vrot.lane.b32.xlu0 %v2876, 64
      %v3377 = vpop.permute.xlu0 %3376
      %3378 = vrot.lane.b32.xlu0 %v2879, 64
      %v3379 = vpop.permute.xlu0 %3378
      %3380 = vrot.lane.b32.xlu0 %v2881, 64
      %v3381 = vpop.permute.xlu0 %3380
      %3382 = vrot.lane.b32.xlu0 %v2884, 64
      %v3383 = vpop.permute.xlu0 %3382
      %3384 = vrot.lane.b32.xlu0 %v2886, 64
      %v3385 = vpop.permute.xlu0 %3384
      %3418 = vrot.lane.b32.xlu0 %v3235, 96
      %v3419 = vpop.permute.xlu0 %3418
      %3420 = vrot.lane.b32.xlu0 %v3237, 96
      %v3421 = vpop.permute.xlu0 %3420
      %3422 = vrot.lane.b32.xlu0 %v3240, 96
      %v3423 = vpop.permute.xlu0 %3422
      %3424 = vrot.lane.b32.xlu0 %v3242, 96
      %v3425 = vpop.permute.xlu0 %3424
      %3426 = vrot.lane.b32.xlu0 %v3245, 96
      %v3427 = vpop.permute.xlu0 %3426
      %3428 = vrot.lane.b32.xlu0 %v3247, 96
      %v3429 = vpop.permute.xlu0 %3428
      %3430 = vrot.lane.b32.xlu0 %v3250, 96
      %v3431 = vpop.permute.xlu0 %3430
      %3432 = vrot.lane.b32.xlu0 %v3252, 96
      %v3433 = vpop.permute.xlu0 %3432
      %3434 = vrot.lane.b32.xlu0 %v3255, 96
      %v3435 = vpop.permute.xlu0 %3434
      %3436 = vrot.lane.b32.xlu0 %v3257, 96
      %v3437 = vpop.permute.xlu0 %3436
      %3438 = vrot.lane.b32.xlu0 %v3260, 96
      %v3439 = vpop.permute.xlu0 %3438
      %3440 = vrot.lane.b32.xlu0 %v3262, 96
      %v3441 = vpop.permute.xlu0 %3440
      %3442 = vrot.lane.b32.xlu0 %v3265, 96
      %v3443 = vpop.permute.xlu0 %3442
      %3444 = vrot.lane.b32.xlu0 %v3267, 96
      %v3445 = vpop.permute.xlu0 %3444
      %3446 = vrot.lane.b32.xlu0 %v3270, 96
      %v3447 = vpop.permute.xlu0 %3446
      %3448 = vrot.lane.b32.xlu0 %v3272, 96
      %v3449 = vpop.permute.xlu0 %3448
      %v3466 = vsel %vm1737, %v2077, %v3291
      %v3467 = vsel %vm1737, %v2079, %v3293
      %v3468 = vsel %vm1737, %v2082, %v3295
      %v3469 = vsel %vm1737, %v2084, %v3297
      %v3470 = vsel %vm1737, %v2087, %v3299
      %v3471 = vsel %vm1737, %v2089, %v3301
      %v3472 = vsel %vm1737, %v2092, %v3303
      %v3473 = vsel %vm1737, %v2094, %v3305
      %v3474 = vsel %vm1737, %v2097, %v3307
      %v3475 = vsel %vm1737, %v2099, %v3309
      %v3476 = vsel %vm1737, %v2102, %v3311
      %v3477 = vsel %vm1737, %v2104, %v3313
      %v3478 = vsel %vm1737, %v2107, %v3315
      %v3479 = vsel %vm1737, %v2109, %v3317
      %v3480 = vsel %vm1737, %v2112, %v3319
      %v3481 = vsel %vm1737, %v2114, %v3321
      %vm3482 = vcmask 523264
      %v3483 = vsel %vm3482, %v3466, %v3355
      %v3484 = vsel %vm3482, %v3467, %v3357
      %v3485 = vsel %vm3482, %v3468, %v3359
      %v3486 = vsel %vm3482, %v3469, %v3361
      %v3487 = vsel %vm3482, %v3470, %v3363
      %v3488 = vsel %vm3482, %v3471, %v3365
      %v3489 = vsel %vm3482, %v3472, %v3367
      %v3490 = vsel %vm3482, %v3473, %v3369
      %v3491 = vsel %vm3482, %v3474, %v3371
      %v3492 = vsel %vm3482, %v3475, %v3373
      %v3493 = vsel %vm3482, %v3476, %v3375
      %v3494 = vsel %vm3482, %v3477, %v3377
      %v3495 = vsel %vm3482, %v3478, %v3379
      %v3496 = vsel %vm3482, %v3479, %v3381
      %v3497 = vsel %vm3482, %v3480, %v3383
      %v3498 = vsel %vm3482, %v3481, %v3385
      %vm3499 = vcmask 785408
      %v3500 = vsel %vm3499, %v3483, %v3419
      %v3501 = vsel %vm3499, %v3484, %v3421
      %v3502 = vsel %vm3499, %v3485, %v3423
      %v3503 = vsel %vm3499, %v3486, %v3425
      %v3504 = vsel %vm3499, %v3487, %v3427
      %v3505 = vsel %vm3499, %v3488, %v3429
      %v3506 = vsel %vm3499, %v3489, %v3431
      %v3507 = vsel %vm3499, %v3490, %v3433
      %v3508 = vsel %vm3499, %v3491, %v3435
      %v3509 = vsel %vm3499, %v3492, %v3437
      %v3510 = vsel %vm3499, %v3493, %v3439
      %v3511 = vsel %vm3499, %v3494, %v3441
      %v3512 = vsel %vm3499, %v3495, %v3443
      %v3513 = vsel %vm3499, %v3496, %v3445
      %v3514 = vsel %vm3499, %v3497, %v3447
      %v3515 = vsel %vm3499, %v3498, %v3449
      %v3516 = vpack.c.bf16 %v3501, %v3500
      %v3517 = vpack.c.bf16 %v3503, %v3502
      %v3518 = vpack.c.bf16 %v3505, %v3504
      %v3519 = vpack.c.bf16 %v3507, %v3506
      %v3520 = vpack.c.bf16 %v3509, %v3508
      %v3521 = vpack.c.bf16 %v3511, %v3510
      %v3522 = vpack.c.bf16 %v3513, %v3512
      %v3523 = vpack.c.bf16 %v3515, %v3514
      %v3524 = vld [vmem:[%s727] sm:$0xf]
      %v3525 = vld [vmem:[%s727 + $0x4] sm:$0xf]
      %v3526 = vld [vmem:[%s727 + $0x8] sm:$0xf]
      %v3527 = vld [vmem:[%s727 + $0xc] sm:$0xf]
      %v3528 = vld [vmem:[%s727 + $0x10] sm:$0xf]
      %v3529 = vld [vmem:[%s727 + $0x14] sm:$0xf]
      %v3530 = vld [vmem:[%s727 + $0x18] sm:$0xf]
      %v3531 = vld [vmem:[%s727 + $0x1c] sm:$0xf]
      %v3532 = vld [vmem:[%s727 + $0x20] sm:$0xf]
      %v3533 = vld [vmem:[%s727 + $0x24] sm:$0xf]
      %v3534 = vld [vmem:[%s727 + $0x28] sm:$0xf]
      %v3535 = vld [vmem:[%s727 + $0x2c] sm:$0xf]
      %v3536 = vld [vmem:[%s727 + $0x30] sm:$0xf]
      %v3537 = vld [vmem:[%s727 + $0x34] sm:$0xf]
      %v3538 = vld [vmem:[%s727 + $0x38] sm:$0xf]
      %v3539 = vld [vmem:[%s727 + $0x3c] sm:$0xf]
      %v3556 = vunpack.c.l.b16 %v3524
      %v3557 = vunpack.c.l.b16 %v3525
      %v3558 = vunpack.c.l.b16 %v3526
      %v3559 = vunpack.c.l.b16 %v3527
      %v3560 = vunpack.c.l.b16 %v3528
      %v3561 = vunpack.c.l.b16 %v3529
      %v3562 = vunpack.c.l.b16 %v3530
      %v3563 = vunpack.c.l.b16 %v3531
      %v3564 = vunpack.c.l.b16 %v3532
      %v3565 = vunpack.c.l.b16 %v3533
      %v3566 = vunpack.c.l.b16 %v3534
      %v3567 = vunpack.c.l.b16 %v3535
      %v3568 = vunpack.c.l.b16 %v3536
      %v3569 = vunpack.c.l.b16 %v3537
      %v3570 = vunpack.c.l.b16 %v3538
      %v3571 = vunpack.c.l.b16 %v3539
      %v3572 = vpack.c.b16 %v3557, %v3556
      %v3573 = vpack.c.b16 %v3559, %v3558
      %v3574 = vpack.c.b16 %v3561, %v3560
      %v3575 = vpack.c.b16 %v3563, %v3562
      %v3576 = vpack.c.b16 %v3565, %v3564
      %v3577 = vpack.c.b16 %v3567, %v3566
      %v3578 = vpack.c.b16 %v3569, %v3568
      %v3579 = vpack.c.b16 %v3571, %v3570
      %3588 = vmatpush.bf16.msra.mxu0 %v3579
      %3589 = vmatpush.bf16.msra.mxu0 %v3578
      %3590 = vmatpush.bf16.msra.mxu0 %v3577
      %3591 = vmatpush.bf16.msra.mxu0 %v3576
      %3592 = vmatpush.bf16.msra.mxu0 %v3575
      %3593 = vmatpush.bf16.msra.mxu0 %v3574
      %3594 = vmatpush.bf16.msra.mxu0 %v3573
      %3595 = vmatpush.bf16.msra.mxu0 %v3572
      %3596 = vmatmul.bf16.gmra.mxu0 %v3516
      %v3597 = vpop.f32.mrf.mxu0
      %v3598 = vadd.f32 0.0, %v3597
      %v3599 = vpop.f32.mrf.mxu0
      %v3600 = vadd.f32 0.0, %v3599
      %3601 = vmatmul.bf16.gmra.mxu0 %v3517
      %v3602 = vpop.f32.mrf.mxu0
      %v3603 = vadd.f32 0.0, %v3602
      %v3604 = vpop.f32.mrf.mxu0
      %v3605 = vadd.f32 0.0, %v3604
      %3606 = vmatmul.bf16.gmra.mxu0 %v3518
      %v3607 = vpop.f32.mrf.mxu0
      %v3608 = vadd.f32 0.0, %v3607
      %v3609 = vpop.f32.mrf.mxu0
      %v3610 = vadd.f32 0.0, %v3609
      %3611 = vmatmul.bf16.gmra.mxu0 %v3519
      %v3612 = vpop.f32.mrf.mxu0
      %v3613 = vadd.f32 0.0, %v3612
      %v3614 = vpop.f32.mrf.mxu0
      %v3615 = vadd.f32 0.0, %v3614
      %3616 = vmatmul.bf16.gmra.mxu0 %v3520
      %v3617 = vpop.f32.mrf.mxu0
      %v3618 = vadd.f32 0.0, %v3617
      %v3619 = vpop.f32.mrf.mxu0
      %v3620 = vadd.f32 0.0, %v3619
      %3621 = vmatmul.bf16.gmra.mxu0 %v3521
      %v3622 = vpop.f32.mrf.mxu0
      %v3623 = vadd.f32 0.0, %v3622
      %v3624 = vpop.f32.mrf.mxu0
      %v3625 = vadd.f32 0.0, %v3624
      %3626 = vmatmul.bf16.gmra.mxu0 %v3522
      %v3627 = vpop.f32.mrf.mxu0
      %v3628 = vadd.f32 0.0, %v3627
      %v3629 = vpop.f32.mrf.mxu0
      %v3630 = vadd.f32 0.0, %v3629
      %3631 = vmatmul.bf16.gmra.mxu0 %v3523
      %v3632 = vpop.f32.mrf.mxu0
      %v3633 = vadd.f32 0.0, %v3632
      %v3634 = vpop.f32.mrf.mxu0
      %v3635 = vadd.f32 0.0, %v3634
      %3636 = vdwg.mxu0
      %v3637 = vadd.f32 %v932, %v3598
      %v3638 = vadd.f32 %v933, %v3600
      %v3639 = vadd.f32 %v934, %v3603
      %v3640 = vadd.f32 %v935, %v3605
      %v3641 = vadd.f32 %v936, %v3608
      %v3642 = vadd.f32 %v937, %v3610
      %v3643 = vadd.f32 %v938, %v3613
      %v3644 = vadd.f32 %v939, %v3615
      %v3645 = vadd.f32 %v940, %v3618
      %v3646 = vadd.f32 %v941, %v3620
      %v3647 = vadd.f32 %v942, %v3623
      %v3648 = vadd.f32 %v943, %v3625
      %v3649 = vadd.f32 %v944, %v3628
      %v3650 = vadd.f32 %v945, %v3630
      %v3651 = vadd.f32 %v946, %v3633
      %v3652 = vadd.f32 %v947, %v3635
      %v3653 = vld [vmem:[%s730] sm:$0x1]
      %v3655 = vperm.slane %v3653, 0
      %v3657 = vadd.f32 %v3637, %v3655
      %v3658 = vadd.f32 %v3638, %v3655
      %v3659 = vadd.f32 %v3639, %v3655
      %v3660 = vadd.f32 %v3640, %v3655
      %v3661 = vadd.f32 %v3641, %v3655
      %v3662 = vadd.f32 %v3642, %v3655
      %v3663 = vadd.f32 %v3643, %v3655
      %v3664 = vadd.f32 %v3644, %v3655
      %v3665 = vadd.f32 %v3645, %v3655
      %v3666 = vadd.f32 %v3646, %v3655
      %v3667 = vadd.f32 %v3647, %v3655
      %v3668 = vadd.f32 %v3648, %v3655
      %v3669 = vadd.f32 %v3649, %v3655
      %v3670 = vadd.f32 %v3650, %v3655
      %v3671 = vadd.f32 %v3651, %v3655
      %v3672 = vadd.f32 %v3652, %v3655
      %v3673 = vld [vmem:[%s733] sm:$0x1]
      %v3674 = vld [vmem:[%s736] sm:$0x1]
      %3675 = vadd.xlane.f32.xlu0 %v3657
      %v3676 = vpop.xlane.xlu0 %3675
      %3677 = vadd.xlane.f32.xlu0 %v3658
      %v3678 = vpop.xlane.xlu0 %3677
      %3679 = vadd.xlane.f32.xlu0 %v3659
      %v3680 = vpop.xlane.xlu0 %3679
      %3681 = vadd.xlane.f32.xlu0 %v3660
      %v3682 = vpop.xlane.xlu0 %3681
      %3683 = vadd.xlane.f32.xlu0 %v3661
      %v3684 = vpop.xlane.xlu0 %3683
      %3685 = vadd.xlane.f32.xlu0 %v3662
      %v3686 = vpop.xlane.xlu0 %3685
      %3687 = vadd.xlane.f32.xlu0 %v3663
      %v3688 = vpop.xlane.xlu0 %3687
      %3689 = vadd.xlane.f32.xlu0 %v3664
      %v3690 = vpop.xlane.xlu0 %3689
      %3691 = vadd.xlane.f32.xlu0 %v3665
      %v3692 = vpop.xlane.xlu0 %3691
      %3693 = vadd.xlane.f32.xlu0 %v3666
      %v3694 = vpop.xlane.xlu0 %3693
      %3695 = vadd.xlane.f32.xlu0 %v3667
      %v3696 = vpop.xlane.xlu0 %3695
      %3697 = vadd.xlane.f32.xlu0 %v3668
      %v3698 = vpop.xlane.xlu0 %3697
      %3699 = vadd.xlane.f32.xlu0 %v3669
      %v3700 = vpop.xlane.xlu0 %3699
      %3701 = vadd.xlane.f32.xlu0 %v3670
      %v3702 = vpop.xlane.xlu0 %3701
      %3703 = vadd.xlane.f32.xlu0 %v3671
      %v3704 = vpop.xlane.xlu0 %3703
      %3705 = vadd.xlane.f32.xlu0 %v3672
      %v3706 = vpop.xlane.xlu0 %3705
      %v3707 = vmul.f32 %v3676, %v988
      %v3708 = vmul.f32 %v3678, %v988
      %v3709 = vmul.f32 %v3680, %v988
      %v3710 = vmul.f32 %v3682, %v988
      %v3711 = vmul.f32 %v3684, %v988
      %v3712 = vmul.f32 %v3686, %v988
      %v3713 = vmul.f32 %v3688, %v988
      %v3714 = vmul.f32 %v3690, %v988
      %v3715 = vmul.f32 %v3692, %v988
      %v3716 = vmul.f32 %v3694, %v988
      %v3717 = vmul.f32 %v3696, %v988
      %v3718 = vmul.f32 %v3698, %v988
      %v3719 = vmul.f32 %v3700, %v988
      %v3720 = vmul.f32 %v3702, %v988
      %v3721 = vmul.f32 %v3704, %v988
      %v3722 = vmul.f32 %v3706, %v988
      %v3723 = vsub.f32 %v3657, %v3707
      %v3724 = vsub.f32 %v3658, %v3708
      %v3725 = vsub.f32 %v3659, %v3709
      %v3726 = vsub.f32 %v3660, %v3710
      %v3727 = vsub.f32 %v3661, %v3711
      %v3728 = vsub.f32 %v3662, %v3712
      %v3729 = vsub.f32 %v3663, %v3713
      %v3730 = vsub.f32 %v3664, %v3714
      %v3731 = vsub.f32 %v3665, %v3715
      %v3732 = vsub.f32 %v3666, %v3716
      %v3733 = vsub.f32 %v3667, %v3717
      %v3734 = vsub.f32 %v3668, %v3718
      %v3735 = vsub.f32 %v3669, %v3719
      %v3736 = vsub.f32 %v3670, %v3720
      %v3737 = vsub.f32 %v3671, %v3721
      %v3738 = vsub.f32 %v3672, %v3722
      %v3739 = vmul.f32 %v3723, %v3723
      %v3740 = vmul.f32 %v3724, %v3724
      %v3741 = vmul.f32 %v3725, %v3725
      %v3742 = vmul.f32 %v3726, %v3726
      %v3743 = vmul.f32 %v3727, %v3727
      %v3744 = vmul.f32 %v3728, %v3728
      %v3745 = vmul.f32 %v3729, %v3729
      %v3746 = vmul.f32 %v3730, %v3730
      %v3747 = vmul.f32 %v3731, %v3731
      %v3748 = vmul.f32 %v3732, %v3732
      %v3749 = vmul.f32 %v3733, %v3733
      %v3750 = vmul.f32 %v3734, %v3734
      %v3751 = vmul.f32 %v3735, %v3735
      %v3752 = vmul.f32 %v3736, %v3736
      %v3753 = vmul.f32 %v3737, %v3737
      %v3754 = vmul.f32 %v3738, %v3738
      %3755 = vadd.xlane.f32.xlu0 %v3739
      %v3756 = vpop.xlane.xlu0 %3755
      %3757 = vadd.xlane.f32.xlu0 %v3740
      %v3758 = vpop.xlane.xlu0 %3757
      %3759 = vadd.xlane.f32.xlu0 %v3741
      %v3760 = vpop.xlane.xlu0 %3759
      %3761 = vadd.xlane.f32.xlu0 %v3742
      %v3762 = vpop.xlane.xlu0 %3761
      %3763 = vadd.xlane.f32.xlu0 %v3743
      %v3764 = vpop.xlane.xlu0 %3763
      %3765 = vadd.xlane.f32.xlu0 %v3744
      %v3766 = vpop.xlane.xlu0 %3765
      %3767 = vadd.xlane.f32.xlu0 %v3745
      %v3768 = vpop.xlane.xlu0 %3767
      %3769 = vadd.xlane.f32.xlu0 %v3746
      %v3770 = vpop.xlane.xlu0 %3769
      %3771 = vadd.xlane.f32.xlu0 %v3747
      %v3772 = vpop.xlane.xlu0 %3771
      %3773 = vadd.xlane.f32.xlu0 %v3748
      %v3774 = vpop.xlane.xlu0 %3773
      %3775 = vadd.xlane.f32.xlu0 %v3749
      %v3776 = vpop.xlane.xlu0 %3775
      %3777 = vadd.xlane.f32.xlu0 %v3750
      %v3778 = vpop.xlane.xlu0 %3777
      %3779 = vadd.xlane.f32.xlu0 %v3751
      %v3780 = vpop.xlane.xlu0 %3779
      %3781 = vadd.xlane.f32.xlu0 %v3752
      %v3782 = vpop.xlane.xlu0 %3781
      %3783 = vadd.xlane.f32.xlu0 %v3753
      %v3784 = vpop.xlane.xlu0 %3783
      %3785 = vadd.xlane.f32.xlu0 %v3754
      %v3786 = vpop.xlane.xlu0 %3785
      %v3787 = vmul.f32 %v3756, %v988
      %v3788 = vmul.f32 %v3758, %v988
      %v3789 = vmul.f32 %v3760, %v988
      %v3790 = vmul.f32 %v3762, %v988
      %v3791 = vmul.f32 %v3764, %v988
      %v3792 = vmul.f32 %v3766, %v988
      %v3793 = vmul.f32 %v3768, %v988
      %v3794 = vmul.f32 %v3770, %v988
      %v3795 = vmul.f32 %v3772, %v988
      %v3796 = vmul.f32 %v3774, %v988
      %v3797 = vmul.f32 %v3776, %v988
      %v3798 = vmul.f32 %v3778, %v988
      %v3799 = vmul.f32 %v3780, %v988
      %v3800 = vmul.f32 %v3782, %v988
      %v3801 = vmul.f32 %v3784, %v988
      %v3802 = vmul.f32 %v3786, %v988
      %v3803 = vadd.f32 %v3787, 1e-06
      %v3804 = vadd.f32 %v3788, 1e-06
      %v3805 = vadd.f32 %v3789, 1e-06
      %v3806 = vadd.f32 %v3790, 1e-06
      %v3807 = vadd.f32 %v3791, 1e-06
      %v3808 = vadd.f32 %v3792, 1e-06
      %v3809 = vadd.f32 %v3793, 1e-06
      %v3810 = vadd.f32 %v3794, 1e-06
      %v3811 = vadd.f32 %v3795, 1e-06
      %v3812 = vadd.f32 %v3796, 1e-06
      %v3813 = vadd.f32 %v3797, 1e-06
      %v3814 = vadd.f32 %v3798, 1e-06
      %v3815 = vadd.f32 %v3799, 1e-06
      %v3816 = vadd.f32 %v3800, 1e-06
      %v3817 = vadd.f32 %v3801, 1e-06
      %v3818 = vadd.f32 %v3802, 1e-06
      %v3819 = vrsqrt.pop %v3803
      %v3820 = vmul.f32 %v3819, %v3803
      %v3821 = vmul.f32 %v3820, %v3819
      %v3822 = vmul.f32 0.5, %v3821
      %v3823 = vsub.f32 1.5, %v3822
      %v3824 = vmul.f32 %v3819, %v3823
      %vm3825 = vweird.f32 %v3803
      %vm3826 = vweird.f32 %v3819
      %vm3827 = vmor %vm3825, %vm3826
      %v3828 = vsel %vm3827, %v3819, %v3824
      %v3829 = vrsqrt.pop %v3804
      %v3830 = vmul.f32 %v3829, %v3804
      %v3831 = vmul.f32 %v3830, %v3829
      %v3832 = vmul.f32 0.5, %v3831
      %v3833 = vsub.f32 1.5, %v3832
      %v3834 = vmul.f32 %v3829, %v3833
      %vm3835 = vweird.f32 %v3804
      %vm3836 = vweird.f32 %v3829
      %vm3837 = vmor %vm3835, %vm3836
      %v3838 = vsel %vm3837, %v3829, %v3834
      %v3839 = vrsqrt.pop %v3805
      %v3840 = vmul.f32 %v3839, %v3805
      %v3841 = vmul.f32 %v3840, %v3839
      %v3842 = vmul.f32 0.5, %v3841
      %v3843 = vsub.f32 1.5, %v3842
      %v3844 = vmul.f32 %v3839, %v3843
      %vm3845 = vweird.f32 %v3805
      %vm3846 = vweird.f32 %v3839
      %vm3847 = vmor %vm3845, %vm3846
      %v3848 = vsel %vm3847, %v3839, %v3844
      %v3849 = vrsqrt.pop %v3806
      %v3850 = vmul.f32 %v3849, %v3806
      %v3851 = vmul.f32 %v3850, %v3849
      %v3852 = vmul.f32 0.5, %v3851
      %v3853 = vsub.f32 1.5, %v3852
      %v3854 = vmul.f32 %v3849, %v3853
      %vm3855 = vweird.f32 %v3806
      %vm3856 = vweird.f32 %v3849
      %vm3857 = vmor %vm3855, %vm3856
      %v3858 = vsel %vm3857, %v3849, %v3854
      %v3859 = vrsqrt.pop %v3807
      %v3860 = vmul.f32 %v3859, %v3807
      %v3861 = vmul.f32 %v3860, %v3859
      %v3862 = vmul.f32 0.5, %v3861
      %v3863 = vsub.f32 1.5, %v3862
      %v3864 = vmul.f32 %v3859, %v3863
      %vm3865 = vweird.f32 %v3807
      %vm3866 = vweird.f32 %v3859
      %vm3867 = vmor %vm3865, %vm3866
      %v3868 = vsel %vm3867, %v3859, %v3864
      %v3869 = vrsqrt.pop %v3808
      %v3870 = vmul.f32 %v3869, %v3808
      %v3871 = vmul.f32 %v3870, %v3869
      %v3872 = vmul.f32 0.5, %v3871
      %v3873 = vsub.f32 1.5, %v3872
      %v3874 = vmul.f32 %v3869, %v3873
      %vm3875 = vweird.f32 %v3808
      %vm3876 = vweird.f32 %v3869
      %vm3877 = vmor %vm3875, %vm3876
      %v3878 = vsel %vm3877, %v3869, %v3874
      %v3879 = vrsqrt.pop %v3809
      %v3880 = vmul.f32 %v3879, %v3809
      %v3881 = vmul.f32 %v3880, %v3879
      %v3882 = vmul.f32 0.5, %v3881
      %v3883 = vsub.f32 1.5, %v3882
      %v3884 = vmul.f32 %v3879, %v3883
      %vm3885 = vweird.f32 %v3809
      %vm3886 = vweird.f32 %v3879
      %vm3887 = vmor %vm3885, %vm3886
      %v3888 = vsel %vm3887, %v3879, %v3884
      %v3889 = vrsqrt.pop %v3810
      %v3890 = vmul.f32 %v3889, %v3810
      %v3891 = vmul.f32 %v3890, %v3889
      %v3892 = vmul.f32 0.5, %v3891
      %v3893 = vsub.f32 1.5, %v3892
      %v3894 = vmul.f32 %v3889, %v3893
      %vm3895 = vweird.f32 %v3810
      %vm3896 = vweird.f32 %v3889
      %vm3897 = vmor %vm3895, %vm3896
      %v3898 = vsel %vm3897, %v3889, %v3894
      %v3899 = vrsqrt.pop %v3811
      %v3900 = vmul.f32 %v3899, %v3811
      %v3901 = vmul.f32 %v3900, %v3899
      %v3902 = vmul.f32 0.5, %v3901
      %v3903 = vsub.f32 1.5, %v3902
      %v3904 = vmul.f32 %v3899, %v3903
      %vm3905 = vweird.f32 %v3811
      %vm3906 = vweird.f32 %v3899
      %vm3907 = vmor %vm3905, %vm3906
      %v3908 = vsel %vm3907, %v3899, %v3904
      %v3909 = vrsqrt.pop %v3812
      %v3910 = vmul.f32 %v3909, %v3812
      %v3911 = vmul.f32 %v3910, %v3909
      %v3912 = vmul.f32 0.5, %v3911
      %v3913 = vsub.f32 1.5, %v3912
      %v3914 = vmul.f32 %v3909, %v3913
      %vm3915 = vweird.f32 %v3812
      %vm3916 = vweird.f32 %v3909
      %vm3917 = vmor %vm3915, %vm3916
      %v3918 = vsel %vm3917, %v3909, %v3914
      %v3919 = vrsqrt.pop %v3813
      %v3920 = vmul.f32 %v3919, %v3813
      %v3921 = vmul.f32 %v3920, %v3919
      %v3922 = vmul.f32 0.5, %v3921
      %v3923 = vsub.f32 1.5, %v3922
      %v3924 = vmul.f32 %v3919, %v3923
      %vm3925 = vweird.f32 %v3813
      %vm3926 = vweird.f32 %v3919
      %vm3927 = vmor %vm3925, %vm3926
      %v3928 = vsel %vm3927, %v3919, %v3924
      %v3929 = vrsqrt.pop %v3814
      %v3930 = vmul.f32 %v3929, %v3814
      %v3931 = vmul.f32 %v3930, %v3929
      %v3932 = vmul.f32 0.5, %v3931
      %v3933 = vsub.f32 1.5, %v3932
      %v3934 = vmul.f32 %v3929, %v3933
      %vm3935 = vweird.f32 %v3814
      %vm3936 = vweird.f32 %v3929
      %vm3937 = vmor %vm3935, %vm3936
      %v3938 = vsel %vm3937, %v3929, %v3934
      %v3939 = vrsqrt.pop %v3815
      %v3940 = vmul.f32 %v3939, %v3815
      %v3941 = vmul.f32 %v3940, %v3939
      %v3942 = vmul.f32 0.5, %v3941
      %v3943 = vsub.f32 1.5, %v3942
      %v3944 = vmul.f32 %v3939, %v3943
      %vm3945 = vweird.f32 %v3815
      %vm3946 = vweird.f32 %v3939
      %vm3947 = vmor %vm3945, %vm3946
      %v3948 = vsel %vm3947, %v3939, %v3944
      %v3949 = vrsqrt.pop %v3816
      %v3950 = vmul.f32 %v3949, %v3816
      %v3951 = vmul.f32 %v3950, %v3949
      %v3952 = vmul.f32 0.5, %v3951
      %v3953 = vsub.f32 1.5, %v3952
      %v3954 = vmul.f32 %v3949, %v3953
      %vm3955 = vweird.f32 %v3816
      %vm3956 = vweird.f32 %v3949
      %vm3957 = vmor %vm3955, %vm3956
      %v3958 = vsel %vm3957, %v3949, %v3954
      %v3959 = vrsqrt.pop %v3817
      %v3960 = vmul.f32 %v3959, %v3817
      %v3961 = vmul.f32 %v3960, %v3959
      %v3962 = vmul.f32 0.5, %v3961
      %v3963 = vsub.f32 1.5, %v3962
      %v3964 = vmul.f32 %v3959, %v3963
      %vm3965 = vweird.f32 %v3817
      %vm3966 = vweird.f32 %v3959
      %vm3967 = vmor %vm3965, %vm3966
      %v3968 = vsel %vm3967, %v3959, %v3964
      %v3969 = vrsqrt.pop %v3818
      %v3970 = vmul.f32 %v3969, %v3818
      %v3971 = vmul.f32 %v3970, %v3969
      %v3972 = vmul.f32 0.5, %v3971
      %v3973 = vsub.f32 1.5, %v3972
      %v3974 = vmul.f32 %v3969, %v3973
      %vm3975 = vweird.f32 %v3818
      %vm3976 = vweird.f32 %v3969
      %vm3977 = vmor %vm3975, %vm3976
      %v3978 = vsel %vm3977, %v3969, %v3974
      %v3979 = vmul.f32 %v3723, %v3828
      %v3980 = vmul.f32 %v3724, %v3838
      %v3981 = vmul.f32 %v3725, %v3848
      %v3982 = vmul.f32 %v3726, %v3858
      %v3983 = vmul.f32 %v3727, %v3868
      %v3984 = vmul.f32 %v3728, %v3878
      %v3985 = vmul.f32 %v3729, %v3888
      %v3986 = vmul.f32 %v3730, %v3898
      %v3987 = vmul.f32 %v3731, %v3908
      %v3988 = vmul.f32 %v3732, %v3918
      %v3989 = vmul.f32 %v3733, %v3928
      %v3990 = vmul.f32 %v3734, %v3938
      %v3991 = vmul.f32 %v3735, %v3948
      %v3992 = vmul.f32 %v3736, %v3958
      %v3993 = vmul.f32 %v3737, %v3968
      %v3994 = vmul.f32 %v3738, %v3978
      %v3996 = vperm.slane %v3673, 0
      %v3998 = vmul.f32 %v3979, %v3996
      %v3999 = vmul.f32 %v3980, %v3996
      %v4000 = vmul.f32 %v3981, %v3996
      %v4001 = vmul.f32 %v3982, %v3996
      %v4002 = vmul.f32 %v3983, %v3996
      %v4003 = vmul.f32 %v3984, %v3996
      %v4004 = vmul.f32 %v3985, %v3996
      %v4005 = vmul.f32 %v3986, %v3996
      %v4006 = vmul.f32 %v3987, %v3996
      %v4007 = vmul.f32 %v3988, %v3996
      %v4008 = vmul.f32 %v3989, %v3996
      %v4009 = vmul.f32 %v3990, %v3996
      %v4010 = vmul.f32 %v3991, %v3996
      %v4011 = vmul.f32 %v3992, %v3996
      %v4012 = vmul.f32 %v3993, %v3996
      %v4013 = vmul.f32 %v3994, %v3996
      %v4015 = vperm.slane %v3674, 0
      %v4017 = vadd.f32 %v3998, %v4015
      %v4018 = vadd.f32 %v3999, %v4015
      %v4019 = vadd.f32 %v4000, %v4015
      %v4020 = vadd.f32 %v4001, %v4015
      %v4021 = vadd.f32 %v4002, %v4015
      %v4022 = vadd.f32 %v4003, %v4015
      %v4023 = vadd.f32 %v4004, %v4015
      %v4024 = vadd.f32 %v4005, %v4015
      %v4025 = vadd.f32 %v4006, %v4015
      %v4026 = vadd.f32 %v4007, %v4015
      %v4027 = vadd.f32 %v4008, %v4015
      %v4028 = vadd.f32 %v4009, %v4015
      %v4029 = vadd.f32 %v4010, %v4015
      %v4030 = vadd.f32 %v4011, %v4015
      %v4031 = vadd.f32 %v4012, %v4015
      %v4032 = vadd.f32 %v4013, %v4015
      %v4033 = vpack.c.bf16 %v4018, %v4017
      %v4034 = vpack.c.bf16 %v4020, %v4019
      %v4035 = vpack.c.bf16 %v4022, %v4021
      %v4036 = vpack.c.bf16 %v4024, %v4023
      %v4037 = vpack.c.bf16 %v4026, %v4025
      %v4038 = vpack.c.bf16 %v4028, %v4027
      %v4039 = vpack.c.bf16 %v4030, %v4029
      %v4040 = vpack.c.bf16 %v4032, %v4031
      %v4041 = vld [vmem:[%s741] sm:$0xff]
      %v4042 = vld [vmem:[%s741 + $0x8] sm:$0xff]
      %v4043 = vld [vmem:[%s741 + $0x10] sm:$0xff]
      %v4044 = vld [vmem:[%s741 + $0x18] sm:$0xff]
      %v4045 = vld [vmem:[%s741 + $0x20] sm:$0xff]
      %v4046 = vld [vmem:[%s741 + $0x28] sm:$0xff]
      %v4047 = vld [vmem:[%s741 + $0x30] sm:$0xff]
      %v4048 = vld [vmem:[%s741 + $0x38] sm:$0xff]
      %v4049 = vld [vmem:[%s741 + $0x40] sm:$0xff]
      %v4050 = vld [vmem:[%s741 + $0x48] sm:$0xff]
      %v4051 = vld [vmem:[%s741 + $0x50] sm:$0xff]
      %v4052 = vld [vmem:[%s741 + $0x58] sm:$0xff]
      %v4053 = vld [vmem:[%s741 + $0x60] sm:$0xff]
      %v4054 = vld [vmem:[%s741 + $0x68] sm:$0xff]
      %v4055 = vld [vmem:[%s741 + $0x70] sm:$0xff]
      %v4056 = vld [vmem:[%s741 + $0x78] sm:$0xff]
      %v4057 = vld [vmem:[%s745] sm:$0x3]
      %v4059 = vperm.slane %v4057, 0
      %v4060 = vperm.slane %v4057, 1
      %v4079 = vunpack.c.l.b16 %v4041
      %v4080 = vunpack.c.h.b16 %v4041
      %v4081 = vunpack.c.l.b16 %v4042
      %v4082 = vunpack.c.h.b16 %v4042
      %v4083 = vunpack.c.l.b16 %v4043
      %v4084 = vunpack.c.h.b16 %v4043
      %v4085 = vunpack.c.l.b16 %v4044
      %v4086 = vunpack.c.h.b16 %v4044
      %v4087 = vunpack.c.l.b16 %v4045
      %v4088 = vunpack.c.h.b16 %v4045
      %v4089 = vunpack.c.l.b16 %v4046
      %v4090 = vunpack.c.h.b16 %v4046
      %v4091 = vunpack.c.l.b16 %v4047
      %v4092 = vunpack.c.h.b16 %v4047
      %v4093 = vunpack.c.l.b16 %v4048
      %v4094 = vunpack.c.h.b16 %v4048
      %v4095 = vunpack.c.l.b16 %v4049
      %v4096 = vunpack.c.h.b16 %v4049
      %v4097 = vunpack.c.l.b16 %v4050
      %v4098 = vunpack.c.h.b16 %v4050
      %v4099 = vunpack.c.l.b16 %v4051
      %v4100 = vunpack.c.h.b16 %v4051
      %v4101 = vunpack.c.l.b16 %v4052
      %v4102 = vunpack.c.h.b16 %v4052
      %v4103 = vunpack.c.l.b16 %v4053
      %v4104 = vunpack.c.h.b16 %v4053
      %v4105 = vunpack.c.l.b16 %v4054
      %v4106 = vunpack.c.h.b16 %v4054
      %v4107 = vunpack.c.l.b16 %v4055
      %v4108 = vunpack.c.h.b16 %v4055
      %v4109 = vunpack.c.l.b16 %v4056
      %v4110 = vunpack.c.h.b16 %v4056
      %v4111 = vpack.c.b16 %v4081, %v4079
      %v4112 = vpack.c.b16 %v4082, %v4080
      %v4113 = vpack.c.b16 %v4085, %v4083
      %v4114 = vpack.c.b16 %v4086, %v4084
      %v4115 = vpack.c.b16 %v4089, %v4087
      %v4116 = vpack.c.b16 %v4090, %v4088
      %v4117 = vpack.c.b16 %v4093, %v4091
      %v4118 = vpack.c.b16 %v4094, %v4092
      %v4119 = vpack.c.b16 %v4097, %v4095
      %v4120 = vpack.c.b16 %v4098, %v4096
      %v4121 = vpack.c.b16 %v4101, %v4099
      %v4122 = vpack.c.b16 %v4102, %v4100
      %v4123 = vpack.c.b16 %v4105, %v4103
      %v4124 = vpack.c.b16 %v4106, %v4104
      %v4125 = vpack.c.b16 %v4109, %v4107
      %v4126 = vpack.c.b16 %v4110, %v4108
      %4143 = vmatpush.bf16.msra.mxu0 %v4125
      %4144 = vmatpush.bf16.msra.mxu0 %v4123
      %4145 = vmatpush.bf16.msra.mxu0 %v4121
      %4146 = vmatpush.bf16.msra.mxu0 %v4119
      %4147 = vmatpush.bf16.msra.mxu0 %v4117
      %4148 = vmatpush.bf16.msra.mxu0 %v4115
      %4149 = vmatpush.bf16.msra.mxu0 %v4113
      %4150 = vmatpush.bf16.msra.mxu0 %v4111
      %4151 = vmatmul.bf16.gmra.mxu0 %v4033
      %v4152 = vpop.f32.mrf.mxu0
      %v4153 = vadd.f32 %v4059, %v4152
      %v4154 = vpop.f32.mrf.mxu0
      %v4155 = vadd.f32 %v4059, %v4154
      %4156 = vmatmul.bf16.gmra.mxu0 %v4034
      %v4157 = vpop.f32.mrf.mxu0
      %v4158 = vadd.f32 %v4059, %v4157
      %v4159 = vpop.f32.mrf.mxu0
      %v4160 = vadd.f32 %v4059, %v4159
      %4161 = vmatmul.bf16.gmra.mxu0 %v4035
      %v4162 = vpop.f32.mrf.mxu0
      %v4163 = vadd.f32 %v4059, %v4162
      %v4164 = vpop.f32.mrf.mxu0
      %v4165 = vadd.f32 %v4059, %v4164
      %4166 = vmatmul.bf16.gmra.mxu0 %v4036
      %v4167 = vpop.f32.mrf.mxu0
      %v4168 = vadd.f32 %v4059, %v4167
      %v4169 = vpop.f32.mrf.mxu0
      %v4170 = vadd.f32 %v4059, %v4169
      %4171 = vmatmul.bf16.gmra.mxu0 %v4037
      %v4172 = vpop.f32.mrf.mxu0
      %v4173 = vadd.f32 %v4059, %v4172
      %v4174 = vpop.f32.mrf.mxu0
      %v4175 = vadd.f32 %v4059, %v4174
      %4176 = vmatmul.bf16.gmra.mxu0 %v4038
      %v4177 = vpop.f32.mrf.mxu0
      %v4178 = vadd.f32 %v4059, %v4177
      %v4179 = vpop.f32.mrf.mxu0
      %v4180 = vadd.f32 %v4059, %v4179
      %4181 = vmatmul.bf16.gmra.mxu0 %v4039
      %v4182 = vpop.f32.mrf.mxu0
      %v4183 = vadd.f32 %v4059, %v4182
      %v4184 = vpop.f32.mrf.mxu0
      %v4185 = vadd.f32 %v4059, %v4184
      %4186 = vmatmul.bf16.gmra.mxu0 %v4040
      %v4187 = vpop.f32.mrf.mxu0
      %v4188 = vadd.f32 %v4059, %v4187
      %v4189 = vpop.f32.mrf.mxu0
      %v4190 = vadd.f32 %v4059, %v4189
      %4191 = vdwg.mxu0
      %4192 = vmatpush.bf16.msra.mxu0 %v4126
      %4193 = vmatpush.bf16.msra.mxu0 %v4124
      %4194 = vmatpush.bf16.msra.mxu0 %v4122
      %4195 = vmatpush.bf16.msra.mxu0 %v4120
      %4196 = vmatpush.bf16.msra.mxu0 %v4118
      %4197 = vmatpush.bf16.msra.mxu0 %v4116
      %4198 = vmatpush.bf16.msra.mxu0 %v4114
      %4199 = vmatpush.bf16.msra.mxu0 %v4112
      %4200 = vmatmul.bf16.gmra.mxu0 %v4033
      %v4201 = vpop.f32.mrf.mxu0
      %v4202 = vadd.f32 %v4060, %v4201
      %v4203 = vpop.f32.mrf.mxu0
      %v4204 = vadd.f32 %v4060, %v4203
      %4205 = vmatmul.bf16.gmra.mxu0 %v4034
      %v4206 = vpop.f32.mrf.mxu0
      %v4207 = vadd.f32 %v4060, %v4206
      %v4208 = vpop.f32.mrf.mxu0
      %v4209 = vadd.f32 %v4060, %v4208
      %4210 = vmatmul.bf16.gmra.mxu0 %v4035
      %v4211 = vpop.f32.mrf.mxu0
      %v4212 = vadd.f32 %v4060, %v4211
      %v4213 = vpop.f32.mrf.mxu0
      %v4214 = vadd.f32 %v4060, %v4213
      %4215 = vmatmul.bf16.gmra.mxu0 %v4036
      %v4216 = vpop.f32.mrf.mxu0
      %v4217 = vadd.f32 %v4060, %v4216
      %v4218 = vpop.f32.mrf.mxu0
      %v4219 = vadd.f32 %v4060, %v4218
      %4220 = vmatmul.bf16.gmra.mxu0 %v4037
      %v4221 = vpop.f32.mrf.mxu0
      %v4222 = vadd.f32 %v4060, %v4221
      %v4223 = vpop.f32.mrf.mxu0
      %v4224 = vadd.f32 %v4060, %v4223
      %4225 = vmatmul.bf16.gmra.mxu0 %v4038
      %v4226 = vpop.f32.mrf.mxu0
      %v4227 = vadd.f32 %v4060, %v4226
      %v4228 = vpop.f32.mrf.mxu0
      %v4229 = vadd.f32 %v4060, %v4228
      %4230 = vmatmul.bf16.gmra.mxu0 %v4039
      %v4231 = vpop.f32.mrf.mxu0
      %v4232 = vadd.f32 %v4060, %v4231
      %v4233 = vpop.f32.mrf.mxu0
      %v4234 = vadd.f32 %v4060, %v4233
      %4235 = vmatmul.bf16.gmra.mxu0 %v4040
      %v4236 = vpop.f32.mrf.mxu0
      %v4237 = vadd.f32 %v4060, %v4236
      %v4238 = vpop.f32.mrf.mxu0
      %v4239 = vadd.f32 %v4060, %v4238
      %4240 = vdwg.mxu0
      %v4241 = vmul.f32 %v4153, %v4153
      %v4242 = vmul.f32 %v4202, %v4202
      %v4243 = vmul.f32 %v4155, %v4155
      %v4244 = vmul.f32 %v4204, %v4204
      %v4245 = vmul.f32 %v4158, %v4158
      %v4246 = vmul.f32 %v4207, %v4207
      %v4247 = vmul.f32 %v4160, %v4160
      %v4248 = vmul.f32 %v4209, %v4209
      %v4249 = vmul.f32 %v4163, %v4163
      %v4250 = vmul.f32 %v4212, %v4212
      %v4251 = vmul.f32 %v4165, %v4165
      %v4252 = vmul.f32 %v4214, %v4214
      %v4253 = vmul.f32 %v4168, %v4168
      %v4254 = vmul.f32 %v4217, %v4217
      %v4255 = vmul.f32 %v4170, %v4170
      %v4256 = vmul.f32 %v4219, %v4219
      %v4257 = vmul.f32 %v4173, %v4173
      %v4258 = vmul.f32 %v4222, %v4222
      %v4259 = vmul.f32 %v4175, %v4175
      %v4260 = vmul.f32 %v4224, %v4224
      %v4261 = vmul.f32 %v4178, %v4178
      %v4262 = vmul.f32 %v4227, %v4227
      %v4263 = vmul.f32 %v4180, %v4180
      %v4264 = vmul.f32 %v4229, %v4229
      %v4265 = vmul.f32 %v4183, %v4183
      %v4266 = vmul.f32 %v4232, %v4232
      %v4267 = vmul.f32 %v4185, %v4185
      %v4268 = vmul.f32 %v4234, %v4234
      %v4269 = vmul.f32 %v4188, %v4188
      %v4270 = vmul.f32 %v4237, %v4237
      %v4271 = vmul.f32 %v4190, %v4190
      %v4272 = vmul.f32 %v4239, %v4239
      %v4273 = vmul.f32 %v4153, %v4241
      %v4274 = vmul.f32 %v4202, %v4242
      %v4275 = vmul.f32 %v4155, %v4243
      %v4276 = vmul.f32 %v4204, %v4244
      %v4277 = vmul.f32 %v4158, %v4245
      %v4278 = vmul.f32 %v4207, %v4246
      %v4279 = vmul.f32 %v4160, %v4247
      %v4280 = vmul.f32 %v4209, %v4248
      %v4281 = vmul.f32 %v4163, %v4249
      %v4282 = vmul.f32 %v4212, %v4250
      %v4283 = vmul.f32 %v4165, %v4251
      %v4284 = vmul.f32 %v4214, %v4252
      %v4285 = vmul.f32 %v4168, %v4253
      %v4286 = vmul.f32 %v4217, %v4254
      %v4287 = vmul.f32 %v4170, %v4255
      %v4288 = vmul.f32 %v4219, %v4256
      %v4289 = vmul.f32 %v4173, %v4257
      %v4290 = vmul.f32 %v4222, %v4258
      %v4291 = vmul.f32 %v4175, %v4259
      %v4292 = vmul.f32 %v4224, %v4260
      %v4293 = vmul.f32 %v4178, %v4261
      %v4294 = vmul.f32 %v4227, %v4262
      %v4295 = vmul.f32 %v4180, %v4263
      %v4296 = vmul.f32 %v4229, %v4264
      %v4297 = vmul.f32 %v4183, %v4265
      %v4298 = vmul.f32 %v4232, %v4266
      %v4299 = vmul.f32 %v4185, %v4267
      %v4300 = vmul.f32 %v4234, %v4268
      %v4301 = vmul.f32 %v4188, %v4269
      %v4302 = vmul.f32 %v4237, %v4270
      %v4303 = vmul.f32 %v4190, %v4271
      %v4304 = vmul.f32 %v4239, %v4272
      %v4305 = vmul.f32 %v4273, 0.044715
      %v4306 = vmul.f32 %v4274, 0.044715
      %v4307 = vmul.f32 %v4275, 0.044715
      %v4308 = vmul.f32 %v4276, 0.044715
      %v4309 = vmul.f32 %v4277, 0.044715
      %v4310 = vmul.f32 %v4278, 0.044715
      %v4311 = vmul.f32 %v4279, 0.044715
      %v4312 = vmul.f32 %v4280, 0.044715
      %v4313 = vmul.f32 %v4281, 0.044715
      %v4314 = vmul.f32 %v4282, 0.044715
      %v4315 = vmul.f32 %v4283, 0.044715
      %v4316 = vmul.f32 %v4284, 0.044715
      %v4317 = vmul.f32 %v4285, 0.044715
      %v4318 = vmul.f32 %v4286, 0.044715
      %v4319 = vmul.f32 %v4287, 0.044715
      %v4320 = vmul.f32 %v4288, 0.044715
      %v4321 = vmul.f32 %v4289, 0.044715
      %v4322 = vmul.f32 %v4290, 0.044715
      %v4323 = vmul.f32 %v4291, 0.044715
      %v4324 = vmul.f32 %v4292, 0.044715
      %v4325 = vmul.f32 %v4293, 0.044715
      %v4326 = vmul.f32 %v4294, 0.044715
      %v4327 = vmul.f32 %v4295, 0.044715
      %v4328 = vmul.f32 %v4296, 0.044715
      %v4329 = vmul.f32 %v4297, 0.044715
      %v4330 = vmul.f32 %v4298, 0.044715
      %v4331 = vmul.f32 %v4299, 0.044715
      %v4332 = vmul.f32 %v4300, 0.044715
      %v4333 = vmul.f32 %v4301, 0.044715
      %v4334 = vmul.f32 %v4302, 0.044715
      %v4335 = vmul.f32 %v4303, 0.044715
      %v4336 = vmul.f32 %v4304, 0.044715
      %v4337 = vadd.f32 %v4153, %v4305
      %v4338 = vadd.f32 %v4202, %v4306
      %v4339 = vadd.f32 %v4155, %v4307
      %v4340 = vadd.f32 %v4204, %v4308
      %v4341 = vadd.f32 %v4158, %v4309
      %v4342 = vadd.f32 %v4207, %v4310
      %v4343 = vadd.f32 %v4160, %v4311
      %v4344 = vadd.f32 %v4209, %v4312
      %v4345 = vadd.f32 %v4163, %v4313
      %v4346 = vadd.f32 %v4212, %v4314
      %v4347 = vadd.f32 %v4165, %v4315
      %v4348 = vadd.f32 %v4214, %v4316
      %v4349 = vadd.f32 %v4168, %v4317
      %v4350 = vadd.f32 %v4217, %v4318
      %v4351 = vadd.f32 %v4170, %v4319
      %v4352 = vadd.f32 %v4219, %v4320
      %v4353 = vadd.f32 %v4173, %v4321
      %v4354 = vadd.f32 %v4222, %v4322
      %v4355 = vadd.f32 %v4175, %v4323
      %v4356 = vadd.f32 %v4224, %v4324
      %v4357 = vadd.f32 %v4178, %v4325
      %v4358 = vadd.f32 %v4227, %v4326
      %v4359 = vadd.f32 %v4180, %v4327
      %v4360 = vadd.f32 %v4229, %v4328
      %v4361 = vadd.f32 %v4183, %v4329
      %v4362 = vadd.f32 %v4232, %v4330
      %v4363 = vadd.f32 %v4185, %v4331
      %v4364 = vadd.f32 %v4234, %v4332
      %v4365 = vadd.f32 %v4188, %v4333
      %v4366 = vadd.f32 %v4237, %v4334
      %v4367 = vadd.f32 %v4190, %v4335
      %v4368 = vadd.f32 %v4239, %v4336
      %v4369 = vmul.f32 %v4337, 0.7978846
      %v4370 = vmul.f32 %v4338, 0.7978846
      %v4371 = vmul.f32 %v4339, 0.7978846
      %v4372 = vmul.f32 %v4340, 0.7978846
      %v4373 = vmul.f32 %v4341, 0.7978846
      %v4374 = vmul.f32 %v4342, 0.7978846
      %v4375 = vmul.f32 %v4343, 0.7978846
      %v4376 = vmul.f32 %v4344, 0.7978846
      %v4377 = vmul.f32 %v4345, 0.7978846
      %v4378 = vmul.f32 %v4346, 0.7978846
      %v4379 = vmul.f32 %v4347, 0.7978846
      %v4380 = vmul.f32 %v4348, 0.7978846
      %v4381 = vmul.f32 %v4349, 0.7978846
      %v4382 = vmul.f32 %v4350, 0.7978846
      %v4383 = vmul.f32 %v4351, 0.7978846
      %v4384 = vmul.f32 %v4352, 0.7978846
      %v4385 = vmul.f32 %v4353, 0.7978846
      %v4386 = vmul.f32 %v4354, 0.7978846
      %v4387 = vmul.f32 %v4355, 0.7978846
      %v4388 = vmul.f32 %v4356, 0.7978846
      %v4389 = vmul.f32 %v4357, 0.7978846
      %v4390 = vmul.f32 %v4358, 0.7978846
      %v4391 = vmul.f32 %v4359, 0.7978846
      %v4392 = vmul.f32 %v4360, 0.7978846
      %v4393 = vmul.f32 %v4361, 0.7978846
      %v4394 = vmul.f32 %v4362, 0.7978846
      %v4395 = vmul.f32 %v4363, 0.7978846
      %v4396 = vmul.f32 %v4364, 0.7978846
      %v4397 = vmul.f32 %v4365, 0.7978846
      %v4398 = vmul.f32 %v4366, 0.7978846
      %v4399 = vmul.f32 %v4367, 0.7978846
      %v4400 = vmul.f32 %v4368, 0.7978846
      %v4401 = vtanh.pop %v4369
      %v4402 = vtanh.pop %v4370
      %v4403 = vtanh.pop %v4371
      %v4404 = vtanh.pop %v4372
      %v4405 = vtanh.pop %v4373
      %v4406 = vtanh.pop %v4374
      %v4407 = vtanh.pop %v4375
      %v4408 = vtanh.pop %v4376
      %v4409 = vtanh.pop %v4377
      %v4410 = vtanh.pop %v4378
      %v4411 = vtanh.pop %v4379
      %v4412 = vtanh.pop %v4380
      %v4413 = vtanh.pop %v4381
      %v4414 = vtanh.pop %v4382
      %v4415 = vtanh.pop %v4383
      %v4416 = vtanh.pop %v4384
      %v4417 = vtanh.pop %v4385
      %v4418 = vtanh.pop %v4386
      %v4419 = vtanh.pop %v4387
      %v4420 = vtanh.pop %v4388
      %v4421 = vtanh.pop %v4389
      %v4422 = vtanh.pop %v4390
      %v4423 = vtanh.pop %v4391
      %v4424 = vtanh.pop %v4392
      %v4425 = vtanh.pop %v4393
      %v4426 = vtanh.pop %v4394
      %v4427 = vtanh.pop %v4395
      %v4428 = vtanh.pop %v4396
      %v4429 = vtanh.pop %v4397
      %v4430 = vtanh.pop %v4398
      %v4431 = vtanh.pop %v4399
      %v4432 = vtanh.pop %v4400
      %v4433 = vadd.f32 %v4401, 1.0
      %v4434 = vadd.f32 %v4402, 1.0
      %v4435 = vadd.f32 %v4403, 1.0
      %v4436 = vadd.f32 %v4404, 1.0
      %v4437 = vadd.f32 %v4405, 1.0
      %v4438 = vadd.f32 %v4406, 1.0
      %v4439 = vadd.f32 %v4407, 1.0
      %v4440 = vadd.f32 %v4408, 1.0
      %v4441 = vadd.f32 %v4409, 1.0
      %v4442 = vadd.f32 %v4410, 1.0
      %v4443 = vadd.f32 %v4411, 1.0
      %v4444 = vadd.f32 %v4412, 1.0
      %v4445 = vadd.f32 %v4413, 1.0
      %v4446 = vadd.f32 %v4414, 1.0
      %v4447 = vadd.f32 %v4415, 1.0
      %v4448 = vadd.f32 %v4416, 1.0
      %v4449 = vadd.f32 %v4417, 1.0
      %v4450 = vadd.f32 %v4418, 1.0
      %v4451 = vadd.f32 %v4419, 1.0
      %v4452 = vadd.f32 %v4420, 1.0
      %v4453 = vadd.f32 %v4421, 1.0
      %v4454 = vadd.f32 %v4422, 1.0
      %v4455 = vadd.f32 %v4423, 1.0
      %v4456 = vadd.f32 %v4424, 1.0
      %v4457 = vadd.f32 %v4425, 1.0
      %v4458 = vadd.f32 %v4426, 1.0
      %v4459 = vadd.f32 %v4427, 1.0
      %v4460 = vadd.f32 %v4428, 1.0
      %v4461 = vadd.f32 %v4429, 1.0
      %v4462 = vadd.f32 %v4430, 1.0
      %v4463 = vadd.f32 %v4431, 1.0
      %v4464 = vadd.f32 %v4432, 1.0
      %v4465 = vmul.f32 %v4433, 0.5
      %v4466 = vmul.f32 %v4434, 0.5
      %v4467 = vmul.f32 %v4435, 0.5
      %v4468 = vmul.f32 %v4436, 0.5
      %v4469 = vmul.f32 %v4437, 0.5
      %v4470 = vmul.f32 %v4438, 0.5
      %v4471 = vmul.f32 %v4439, 0.5
      %v4472 = vmul.f32 %v4440, 0.5
      %v4473 = vmul.f32 %v4441, 0.5
      %v4474 = vmul.f32 %v4442, 0.5
      %v4475 = vmul.f32 %v4443, 0.5
      %v4476 = vmul.f32 %v4444, 0.5
      %v4477 = vmul.f32 %v4445, 0.5
      %v4478 = vmul.f32 %v4446, 0.5
      %v4479 = vmul.f32 %v4447, 0.5
      %v4480 = vmul.f32 %v4448, 0.5
      %v4481 = vmul.f32 %v4449, 0.5
      %v4482 = vmul.f32 %v4450, 0.5
      %v4483 = vmul.f32 %v4451, 0.5
      %v4484 = vmul.f32 %v4452, 0.5
      %v4485 = vmul.f32 %v4453, 0.5
      %v4486 = vmul.f32 %v4454, 0.5
      %v4487 = vmul.f32 %v4455, 0.5
      %v4488 = vmul.f32 %v4456, 0.5
      %v4489 = vmul.f32 %v4457, 0.5
      %v4490 = vmul.f32 %v4458, 0.5
      %v4491 = vmul.f32 %v4459, 0.5
      %v4492 = vmul.f32 %v4460, 0.5
      %v4493 = vmul.f32 %v4461, 0.5
      %v4494 = vmul.f32 %v4462, 0.5
      %v4495 = vmul.f32 %v4463, 0.5
      %v4496 = vmul.f32 %v4464, 0.5
      %v4497 = vmul.f32 %v4153, %v4465
      %v4498 = vmul.f32 %v4202, %v4466
      %v4499 = vmul.f32 %v4155, %v4467
      %v4500 = vmul.f32 %v4204, %v4468
      %v4501 = vmul.f32 %v4158, %v4469
      %v4502 = vmul.f32 %v4207, %v4470
      %v4503 = vmul.f32 %v4160, %v4471
      %v4504 = vmul.f32 %v4209, %v4472
      %v4505 = vmul.f32 %v4163, %v4473
      %v4506 = vmul.f32 %v4212, %v4474
      %v4507 = vmul.f32 %v4165, %v4475
      %v4508 = vmul.f32 %v4214, %v4476
      %v4509 = vmul.f32 %v4168, %v4477
      %v4510 = vmul.f32 %v4217, %v4478
      %v4511 = vmul.f32 %v4170, %v4479
      %v4512 = vmul.f32 %v4219, %v4480
      %v4513 = vmul.f32 %v4173, %v4481
      %v4514 = vmul.f32 %v4222, %v4482
      %v4515 = vmul.f32 %v4175, %v4483
      %v4516 = vmul.f32 %v4224, %v4484
      %v4517 = vmul.f32 %v4178, %v4485
      %v4518 = vmul.f32 %v4227, %v4486
      %v4519 = vmul.f32 %v4180, %v4487
      %v4520 = vmul.f32 %v4229, %v4488
      %v4521 = vmul.f32 %v4183, %v4489
      %v4522 = vmul.f32 %v4232, %v4490
      %v4523 = vmul.f32 %v4185, %v4491
      %v4524 = vmul.f32 %v4234, %v4492
      %v4525 = vmul.f32 %v4188, %v4493
      %v4526 = vmul.f32 %v4237, %v4494
      %v4527 = vmul.f32 %v4190, %v4495
      %v4528 = vmul.f32 %v4239, %v4496
      %v4529 = vpack.c.bf16 %v4499, %v4497
      %v4530 = vpack.c.bf16 %v4500, %v4498
      %v4531 = vpack.c.bf16 %v4503, %v4501
      %v4532 = vpack.c.bf16 %v4504, %v4502
      %v4533 = vpack.c.bf16 %v4507, %v4505
      %v4534 = vpack.c.bf16 %v4508, %v4506
      %v4535 = vpack.c.bf16 %v4511, %v4509
      %v4536 = vpack.c.bf16 %v4512, %v4510
      %v4537 = vpack.c.bf16 %v4515, %v4513
      %v4538 = vpack.c.bf16 %v4516, %v4514
      %v4539 = vpack.c.bf16 %v4519, %v4517
      %v4540 = vpack.c.bf16 %v4520, %v4518
      %v4541 = vpack.c.bf16 %v4523, %v4521
      %v4542 = vpack.c.bf16 %v4524, %v4522
      %v4543 = vpack.c.bf16 %v4527, %v4525
      %v4544 = vpack.c.bf16 %v4528, %v4526
      %v4545 = vld [vmem:[%s750] sm:$0xf]
      %v4546 = vld [vmem:[%s750 + $0x4] sm:$0xf]
      %v4547 = vld [vmem:[%s750 + $0x8] sm:$0xf]
      %v4548 = vld [vmem:[%s750 + $0xc] sm:$0xf]
      %v4549 = vld [vmem:[%s750 + $0x10] sm:$0xf]
      %v4550 = vld [vmem:[%s750 + $0x14] sm:$0xf]
      %v4551 = vld [vmem:[%s750 + $0x18] sm:$0xf]
      %v4552 = vld [vmem:[%s750 + $0x1c] sm:$0xf]
      %v4553 = vld [vmem:[%s750 + $0x20] sm:$0xf]
      %v4554 = vld [vmem:[%s750 + $0x24] sm:$0xf]
      %v4555 = vld [vmem:[%s750 + $0x28] sm:$0xf]
      %v4556 = vld [vmem:[%s750 + $0x2c] sm:$0xf]
      %v4557 = vld [vmem:[%s750 + $0x30] sm:$0xf]
      %v4558 = vld [vmem:[%s750 + $0x34] sm:$0xf]
      %v4559 = vld [vmem:[%s750 + $0x38] sm:$0xf]
      %v4560 = vld [vmem:[%s750 + $0x3c] sm:$0xf]
      %v4561 = vld [vmem:[%s750 + $0x40] sm:$0xf]
      %v4562 = vld [vmem:[%s750 + $0x44] sm:$0xf]
      %v4563 = vld [vmem:[%s750 + $0x48] sm:$0xf]
      %v4564 = vld [vmem:[%s750 + $0x4c] sm:$0xf]
      %v4565 = vld [vmem:[%s750 + $0x50] sm:$0xf]
      %v4566 = vld [vmem:[%s750 + $0x54] sm:$0xf]
      %v4567 = vld [vmem:[%s750 + $0x58] sm:$0xf]
      %v4568 = vld [vmem:[%s750 + $0x5c] sm:$0xf]
      %v4569 = vld [vmem:[%s750 + $0x60] sm:$0xf]
      %v4570 = vld [vmem:[%s750 + $0x64] sm:$0xf]
      %v4571 = vld [vmem:[%s750 + $0x68] sm:$0xf]
      %v4572 = vld [vmem:[%s750 + $0x6c] sm:$0xf]
      %v4573 = vld [vmem:[%s750 + $0x70] sm:$0xf]
      %v4574 = vld [vmem:[%s750 + $0x74] sm:$0xf]
      %v4575 = vld [vmem:[%s750 + $0x78] sm:$0xf]
      %v4576 = vld [vmem:[%s750 + $0x7c] sm:$0xf]
      %v4609 = vunpack.c.l.b16 %v4545
      %v4610 = vunpack.c.l.b16 %v4546
      %v4611 = vunpack.c.l.b16 %v4547
      %v4612 = vunpack.c.l.b16 %v4548
      %v4613 = vunpack.c.l.b16 %v4549
      %v4614 = vunpack.c.l.b16 %v4550
      %v4615 = vunpack.c.l.b16 %v4551
      %v4616 = vunpack.c.l.b16 %v4552
      %v4617 = vunpack.c.l.b16 %v4553
      %v4618 = vunpack.c.l.b16 %v4554
      %v4619 = vunpack.c.l.b16 %v4555
      %v4620 = vunpack.c.l.b16 %v4556
      %v4621 = vunpack.c.l.b16 %v4557
      %v4622 = vunpack.c.l.b16 %v4558
      %v4623 = vunpack.c.l.b16 %v4559
      %v4624 = vunpack.c.l.b16 %v4560
      %v4625 = vunpack.c.l.b16 %v4561
      %v4626 = vunpack.c.l.b16 %v4562
      %v4627 = vunpack.c.l.b16 %v4563
      %v4628 = vunpack.c.l.b16 %v4564
      %v4629 = vunpack.c.l.b16 %v4565
      %v4630 = vunpack.c.l.b16 %v4566
      %v4631 = vunpack.c.l.b16 %v4567
      %v4632 = vunpack.c.l.b16 %v4568
      %v4633 = vunpack.c.l.b16 %v4569
      %v4634 = vunpack.c.l.b16 %v4570
      %v4635 = vunpack.c.l.b16 %v4571
      %v4636 = vunpack.c.l.b16 %v4572
      %v4637 = vunpack.c.l.b16 %v4573
      %v4638 = vunpack.c.l.b16 %v4574
      %v4639 = vunpack.c.l.b16 %v4575
      %v4640 = vunpack.c.l.b16 %v4576
      %v4641 = vpack.c.b16 %v4610, %v4609
      %v4642 = vpack.c.b16 %v4612, %v4611
      %v4643 = vpack.c.b16 %v4614, %v4613
      %v4644 = vpack.c.b16 %v4616, %v4615
      %v4645 = vpack.c.b16 %v4618, %v4617
      %v4646 = vpack.c.b16 %v4620, %v4619
      %v4647 = vpack.c.b16 %v4622, %v4621
      %v4648 = vpack.c.b16 %v4624, %v4623
      %v4649 = vpack.c.b16 %v4626, %v4625
      %v4650 = vpack.c.b16 %v4628, %v4627
      %v4651 = vpack.c.b16 %v4630, %v4629
      %v4652 = vpack.c.b16 %v4632, %v4631
      %v4653 = vpack.c.b16 %v4634, %v4633
      %v4654 = vpack.c.b16 %v4636, %v4635
      %v4655 = vpack.c.b16 %v4638, %v4637
      %v4656 = vpack.c.b16 %v4640, %v4639
      %4673 = vmatpush.bf16.msra.mxu0 %v4648
      %4674 = vmatpush.bf16.msra.mxu0 %v4647
      %4675 = vmatpush.bf16.msra.mxu0 %v4646
      %4676 = vmatpush.bf16.msra.mxu0 %v4645
      %4677 = vmatpush.bf16.msra.mxu0 %v4644
      %4678 = vmatpush.bf16.msra.mxu0 %v4643
      %4679 = vmatpush.bf16.msra.mxu0 %v4642
      %4680 = vmatpush.bf16.msra.mxu0 %v4641
      %4681 = vmatmul.bf16.gmra.mxu0 %v4529
      %v4682 = vpop.f32.mrf.mxu0
      %v4683 = vadd.f32 0.0, %v4682
      %v4684 = vpop.f32.mrf.mxu0
      %v4685 = vadd.f32 0.0, %v4684
      %4686 = vmatmul.bf16.gmra.mxu0 %v4531
      %v4687 = vpop.f32.mrf.mxu0
      %v4688 = vadd.f32 0.0, %v4687
      %v4689 = vpop.f32.mrf.mxu0
      %v4690 = vadd.f32 0.0, %v4689
      %4691 = vmatmul.bf16.gmra.mxu0 %v4533
      %v4692 = vpop.f32.mrf.mxu0
      %v4693 = vadd.f32 0.0, %v4692
      %v4694 = vpop.f32.mrf.mxu0
      %v4695 = vadd.f32 0.0, %v4694
      %4696 = vmatmul.bf16.gmra.mxu0 %v4535
      %v4697 = vpop.f32.mrf.mxu0
      %v4698 = vadd.f32 0.0, %v4697
      %v4699 = vpop.f32.mrf.mxu0
      %v4700 = vadd.f32 0.0, %v4699
      %4701 = vmatmul.bf16.gmra.mxu0 %v4537
      %v4702 = vpop.f32.mrf.mxu0
      %v4703 = vadd.f32 0.0, %v4702
      %v4704 = vpop.f32.mrf.mxu0
      %v4705 = vadd.f32 0.0, %v4704
      %4706 = vmatmul.bf16.gmra.mxu0 %v4539
      %v4707 = vpop.f32.mrf.mxu0
      %v4708 = vadd.f32 0.0, %v4707
      %v4709 = vpop.f32.mrf.mxu0
      %v4710 = vadd.f32 0.0, %v4709
      %4711 = vmatmul.bf16.gmra.mxu0 %v4541
      %v4712 = vpop.f32.mrf.mxu0
      %v4713 = vadd.f32 0.0, %v4712
      %v4714 = vpop.f32.mrf.mxu0
      %v4715 = vadd.f32 0.0, %v4714
      %4716 = vmatmul.bf16.gmra.mxu0 %v4543
      %v4717 = vpop.f32.mrf.mxu0
      %v4718 = vadd.f32 0.0, %v4717
      %v4719 = vpop.f32.mrf.mxu0
      %v4720 = vadd.f32 0.0, %v4719
      %4721 = vdwg.mxu0
      %4722 = vmatpush.bf16.msra.mxu0 %v4656
      %4723 = vmatpush.bf16.msra.mxu0 %v4655
      %4724 = vmatpush.bf16.msra.mxu0 %v4654
      %4725 = vmatpush.bf16.msra.mxu0 %v4653
      %4726 = vmatpush.bf16.msra.mxu0 %v4652
      %4727 = vmatpush.bf16.msra.mxu0 %v4651
      %4728 = vmatpush.bf16.msra.mxu0 %v4650
      %4729 = vmatpush.bf16.msra.mxu0 %v4649
      %4730 = vmatmul.bf16.gmra.mxu0 %v4530
      %v4731 = vpop.f32.mrf.mxu0
      %v4732 = vadd.f32 %v4683, %v4731
      %v4733 = vpop.f32.mrf.mxu0
      %v4734 = vadd.f32 %v4685, %v4733
      %4735 = vmatmul.bf16.gmra.mxu0 %v4532
      %v4736 = vpop.f32.mrf.mxu0
      %v4737 = vadd.f32 %v4688, %v4736
      %v4738 = vpop.f32.mrf.mxu0
      %v4739 = vadd.f32 %v4690, %v4738
      %4740 = vmatmul.bf16.gmra.mxu0 %v4534
      %v4741 = vpop.f32.mrf.mxu0
      %v4742 = vadd.f32 %v4693, %v4741
      %v4743 = vpop.f32.mrf.mxu0
      %v4744 = vadd.f32 %v4695, %v4743
      %4745 = vmatmul.bf16.gmra.mxu0 %v4536
      %v4746 = vpop.f32.mrf.mxu0
      %v4747 = vadd.f32 %v4698, %v4746
      %v4748 = vpop.f32.mrf.mxu0
      %v4749 = vadd.f32 %v4700, %v4748
      %4750 = vmatmul.bf16.gmra.mxu0 %v4538
      %v4751 = vpop.f32.mrf.mxu0
      %v4752 = vadd.f32 %v4703, %v4751
      %v4753 = vpop.f32.mrf.mxu0
      %v4754 = vadd.f32 %v4705, %v4753
      %4755 = vmatmul.bf16.gmra.mxu0 %v4540
      %v4756 = vpop.f32.mrf.mxu0
      %v4757 = vadd.f32 %v4708, %v4756
      %v4758 = vpop.f32.mrf.mxu0
      %v4759 = vadd.f32 %v4710, %v4758
      %4760 = vmatmul.bf16.gmra.mxu0 %v4542
      %v4761 = vpop.f32.mrf.mxu0
      %v4762 = vadd.f32 %v4713, %v4761
      %v4763 = vpop.f32.mrf.mxu0
      %v4764 = vadd.f32 %v4715, %v4763
      %4765 = vmatmul.bf16.gmra.mxu0 %v4544
      %v4766 = vpop.f32.mrf.mxu0
      %v4767 = vadd.f32 %v4718, %v4766
      %v4768 = vpop.f32.mrf.mxu0
      %v4769 = vadd.f32 %v4720, %v4768
      %4770 = vdwg.mxu0
      %v4771 = vadd.f32 %v3657, %v4732
      %v4772 = vadd.f32 %v3658, %v4734
      %v4773 = vadd.f32 %v3659, %v4737
      %v4774 = vadd.f32 %v3660, %v4739
      %v4775 = vadd.f32 %v3661, %v4742
      %v4776 = vadd.f32 %v3662, %v4744
      %v4777 = vadd.f32 %v3663, %v4747
      %v4778 = vadd.f32 %v3664, %v4749
      %v4779 = vadd.f32 %v3665, %v4752
      %v4780 = vadd.f32 %v3666, %v4754
      %v4781 = vadd.f32 %v3667, %v4757
      %v4782 = vadd.f32 %v3668, %v4759
      %v4783 = vadd.f32 %v3669, %v4762
      %v4784 = vadd.f32 %v3670, %v4764
      %v4785 = vadd.f32 %v3671, %v4767
      %v4786 = vadd.f32 %v3672, %v4769
      %v4787 = vld [vmem:[%s753] sm:$0x1]
      %v4789 = vperm.slane %v4787, 0
      %v4791 = vadd.f32 %v4771, %v4789
      %v4792 = vadd.f32 %v4772, %v4789
      %v4793 = vadd.f32 %v4773, %v4789
      %v4794 = vadd.f32 %v4774, %v4789
      %v4795 = vadd.f32 %v4775, %v4789
      %v4796 = vadd.f32 %v4776, %v4789
      %v4797 = vadd.f32 %v4777, %v4789
      %v4798 = vadd.f32 %v4778, %v4789
      %v4799 = vadd.f32 %v4779, %v4789
      %v4800 = vadd.f32 %v4780, %v4789
      %v4801 = vadd.f32 %v4781, %v4789
      %v4802 = vadd.f32 %v4782, %v4789
      %v4803 = vadd.f32 %v4783, %v4789
      %v4804 = vadd.f32 %v4784, %v4789
      %v4805 = vadd.f32 %v4785, %v4789
      %v4806 = vadd.f32 %v4786, %v4789
      %4807 = vst [vmem:[#allocation2] sm:$0xff] %v4791
      %4808 = vst [vmem:[#allocation2 + $0x8] sm:$0xff] %v4792
      %4809 = vst [vmem:[#allocation2 + $0x10] sm:$0xff] %v4793
      %4810 = vst [vmem:[#allocation2 + $0x18] sm:$0xff] %v4794
      %4811 = vst [vmem:[#allocation2 + $0x20] sm:$0xff] %v4795
      %4812 = vst [vmem:[#allocation2 + $0x28] sm:$0xff] %v4796
      %4813 = vst [vmem:[#allocation2 + $0x30] sm:$0xff] %v4797
      %4814 = vst [vmem:[#allocation2 + $0x38] sm:$0xff] %v4798
      %4815 = vst [vmem:[#allocation2 + $0x40] sm:$0xff] %v4799
      %4816 = vst [vmem:[#allocation2 + $0x48] sm:$0xff] %v4800
      %4817 = vst [vmem:[#allocation2 + $0x50] sm:$0xff] %v4801
      %4818 = vst [vmem:[#allocation2 + $0x58] sm:$0xff] %v4802
      %4819 = vst [vmem:[#allocation2 + $0x60] sm:$0xff] %v4803
      %4820 = vst [vmem:[#allocation2 + $0x68] sm:$0xff] %v4804
      %4821 = vst [vmem:[#allocation2 + $0x70] sm:$0xff] %v4805
      %4822 = vst [vmem:[#allocation2 + $0x78] sm:$0xff] %v4806
      %p4823 = scmp.eq.s32.totalorder %s33, 1
      // Predicated region
      $region93: #{encoder2d_forward.1} parent=87 // pred_check
        %p4824 = pneg %p4823
      $region94: #{encoder2d_forward.1} parent=87 // pred_check_branch
        %4826 = sbr.rel (%p4824) target = $region96
      $region95: #{encoder2d_forward.1} parent=87 // pred_region
        %v4827 = vld [vmem:[%s15] sm:$0x1]
        %v4828 = vld [vmem:[%s16] sm:$0x1]
        %4829 = vadd.xlane.f32.xlu0 %v4791
        %v4830 = vpop.xlane.xlu0 %4829
        %4831 = vadd.xlane.f32.xlu0 %v4792
        %v4832 = vpop.xlane.xlu0 %4831
        %4833 = vadd.xlane.f32.xlu0 %v4793
        %v4834 = vpop.xlane.xlu0 %4833
        %4835 = vadd.xlane.f32.xlu0 %v4794
        %v4836 = vpop.xlane.xlu0 %4835
        %4837 = vadd.xlane.f32.xlu0 %v4795
        %v4838 = vpop.xlane.xlu0 %4837
        %4839 = vadd.xlane.f32.xlu0 %v4796
        %v4840 = vpop.xlane.xlu0 %4839
        %4841 = vadd.xlane.f32.xlu0 %v4797
        %v4842 = vpop.xlane.xlu0 %4841
        %4843 = vadd.xlane.f32.xlu0 %v4798
        %v4844 = vpop.xlane.xlu0 %4843
        %4845 = vadd.xlane.f32.xlu0 %v4799
        %v4846 = vpop.xlane.xlu0 %4845
        %4847 = vadd.xlane.f32.xlu0 %v4800
        %v4848 = vpop.xlane.xlu0 %4847
        %4849 = vadd.xlane.f32.xlu0 %v4801
        %v4850 = vpop.xlane.xlu0 %4849
        %4851 = vadd.xlane.f32.xlu0 %v4802
        %v4852 = vpop.xlane.xlu0 %4851
        %4853 = vadd.xlane.f32.xlu0 %v4803
        %v4854 = vpop.xlane.xlu0 %4853
        %4855 = vadd.xlane.f32.xlu0 %v4804
        %v4856 = vpop.xlane.xlu0 %4855
        %4857 = vadd.xlane.f32.xlu0 %v4805
        %v4858 = vpop.xlane.xlu0 %4857
        %4859 = vadd.xlane.f32.xlu0 %v4806
        %v4860 = vpop.xlane.xlu0 %4859
        %v4861 = vmul.f32 %v4830, %v988
        %v4862 = vmul.f32 %v4832, %v988
        %v4863 = vmul.f32 %v4834, %v988
        %v4864 = vmul.f32 %v4836, %v988
        %v4865 = vmul.f32 %v4838, %v988
        %v4866 = vmul.f32 %v4840, %v988
        %v4867 = vmul.f32 %v4842, %v988
        %v4868 = vmul.f32 %v4844, %v988
        %v4869 = vmul.f32 %v4846, %v988
        %v4870 = vmul.f32 %v4848, %v988
        %v4871 = vmul.f32 %v4850, %v988
        %v4872 = vmul.f32 %v4852, %v988
        %v4873 = vmul.f32 %v4854, %v988
        %v4874 = vmul.f32 %v4856, %v988
        %v4875 = vmul.f32 %v4858, %v988
        %v4876 = vmul.f32 %v4860, %v988
        %v4877 = vsub.f32 %v4791, %v4861
        %v4878 = vsub.f32 %v4792, %v4862
        %v4879 = vsub.f32 %v4793, %v4863
        %v4880 = vsub.f32 %v4794, %v4864
        %v4881 = vsub.f32 %v4795, %v4865
        %v4882 = vsub.f32 %v4796, %v4866
        %v4883 = vsub.f32 %v4797, %v4867
        %v4884 = vsub.f32 %v4798, %v4868
        %v4885 = vsub.f32 %v4799, %v4869
        %v4886 = vsub.f32 %v4800, %v4870
        %v4887 = vsub.f32 %v4801, %v4871
        %v4888 = vsub.f32 %v4802, %v4872
        %v4889 = vsub.f32 %v4803, %v4873
        %v4890 = vsub.f32 %v4804, %v4874
        %v4891 = vsub.f32 %v4805, %v4875
        %v4892 = vsub.f32 %v4806, %v4876
        %v4893 = vmul.f32 %v4877, %v4877
        %v4894 = vmul.f32 %v4878, %v4878
        %v4895 = vmul.f32 %v4879, %v4879
        %v4896 = vmul.f32 %v4880, %v4880
        %v4897 = vmul.f32 %v4881, %v4881
        %v4898 = vmul.f32 %v4882, %v4882
        %v4899 = vmul.f32 %v4883, %v4883
        %v4900 = vmul.f32 %v4884, %v4884
        %v4901 = vmul.f32 %v4885, %v4885
        %v4902 = vmul.f32 %v4886, %v4886
        %v4903 = vmul.f32 %v4887, %v4887
        %v4904 = vmul.f32 %v4888, %v4888
        %v4905 = vmul.f32 %v4889, %v4889
        %v4906 = vmul.f32 %v4890, %v4890
        %v4907 = vmul.f32 %v4891, %v4891
        %v4908 = vmul.f32 %v4892, %v4892
        %4909 = vadd.xlane.f32.xlu0 %v4893
        %v4910 = vpop.xlane.xlu0 %4909
        %4911 = vadd.xlane.f32.xlu0 %v4894
        %v4912 = vpop.xlane.xlu0 %4911
        %4913 = vadd.xlane.f32.xlu0 %v4895
        %v4914 = vpop.xlane.xlu0 %4913
        %4915 = vadd.xlane.f32.xlu0 %v4896
        %v4916 = vpop.xlane.xlu0 %4915
        %4917 = vadd.xlane.f32.xlu0 %v4897
        %v4918 = vpop.xlane.xlu0 %4917
        %4919 = vadd.xlane.f32.xlu0 %v4898
        %v4920 = vpop.xlane.xlu0 %4919
        %4921 = vadd.xlane.f32.xlu0 %v4899
        %v4922 = vpop.xlane.xlu0 %4921
        %4923 = vadd.xlane.f32.xlu0 %v4900
        %v4924 = vpop.xlane.xlu0 %4923
        %4925 = vadd.xlane.f32.xlu0 %v4901
        %v4926 = vpop.xlane.xlu0 %4925
        %4927 = vadd.xlane.f32.xlu0 %v4902
        %v4928 = vpop.xlane.xlu0 %4927
        %4929 = vadd.xlane.f32.xlu0 %v4903
        %v4930 = vpop.xlane.xlu0 %4929
        %4931 = vadd.xlane.f32.xlu0 %v4904
        %v4932 = vpop.xlane.xlu0 %4931
        %4933 = vadd.xlane.f32.xlu0 %v4905
        %v4934 = vpop.xlane.xlu0 %4933
        %4935 = vadd.xlane.f32.xlu0 %v4906
        %v4936 = vpop.xlane.xlu0 %4935
        %4937 = vadd.xlane.f32.xlu0 %v4907
        %v4938 = vpop.xlane.xlu0 %4937
        %4939 = vadd.xlane.f32.xlu0 %v4908
        %v4940 = vpop.xlane.xlu0 %4939
        %v4941 = vmul.f32 %v4910, %v988
        %v4942 = vmul.f32 %v4912, %v988
        %v4943 = vmul.f32 %v4914, %v988
        %v4944 = vmul.f32 %v4916, %v988
        %v4945 = vmul.f32 %v4918, %v988
        %v4946 = vmul.f32 %v4920, %v988
        %v4947 = vmul.f32 %v4922, %v988
        %v4948 = vmul.f32 %v4924, %v988
        %v4949 = vmul.f32 %v4926, %v988
        %v4950 = vmul.f32 %v4928, %v988
        %v4951 = vmul.f32 %v4930, %v988
        %v4952 = vmul.f32 %v4932, %v988
        %v4953 = vmul.f32 %v4934, %v988
        %v4954 = vmul.f32 %v4936, %v988
        %v4955 = vmul.f32 %v4938, %v988
        %v4956 = vmul.f32 %v4940, %v988
        %v4957 = vadd.f32 %v4941, 1e-06
        %v4958 = vadd.f32 %v4942, 1e-06
        %v4959 = vadd.f32 %v4943, 1e-06
        %v4960 = vadd.f32 %v4944, 1e-06
        %v4961 = vadd.f32 %v4945, 1e-06
        %v4962 = vadd.f32 %v4946, 1e-06
        %v4963 = vadd.f32 %v4947, 1e-06
        %v4964 = vadd.f32 %v4948, 1e-06
        %v4965 = vadd.f32 %v4949, 1e-06
        %v4966 = vadd.f32 %v4950, 1e-06
        %v4967 = vadd.f32 %v4951, 1e-06
        %v4968 = vadd.f32 %v4952, 1e-06
        %v4969 = vadd.f32 %v4953, 1e-06
        %v4970 = vadd.f32 %v4954, 1e-06
        %v4971 = vadd.f32 %v4955, 1e-06
        %v4972 = vadd.f32 %v4956, 1e-06
        %v4973 = vrsqrt.pop %v4957
        %v4974 = vmul.f32 %v4973, %v4957
        %v4975 = vmul.f32 %v4974, %v4973
        %v4976 = vmul.f32 0.5, %v4975
        %v4977 = vsub.f32 1.5, %v4976
        %v4978 = vmul.f32 %v4973, %v4977
        %vm4979 = vweird.f32 %v4957
        %vm4980 = vweird.f32 %v4973
        %vm4981 = vmor %vm4979, %vm4980
        %v4982 = vsel %vm4981, %v4973, %v4978
        %v4983 = vrsqrt.pop %v4958
        %v4984 = vmul.f32 %v4983, %v4958
        %v4985 = vmul.f32 %v4984, %v4983
        %v4986 = vmul.f32 0.5, %v4985
        %v4987 = vsub.f32 1.5, %v4986
        %v4988 = vmul.f32 %v4983, %v4987
        %vm4989 = vweird.f32 %v4958
        %vm4990 = vweird.f32 %v4983
        %vm4991 = vmor %vm4989, %vm4990
        %v4992 = vsel %vm4991, %v4983, %v4988
        %v4993 = vrsqrt.pop %v4959
        %v4994 = vmul.f32 %v4993, %v4959
        %v4995 = vmul.f32 %v4994, %v4993
        %v4996 = vmul.f32 0.5, %v4995
        %v4997 = vsub.f32 1.5, %v4996
        %v4998 = vmul.f32 %v4993, %v4997
        %vm4999 = vweird.f32 %v4959
        %vm5000 = vweird.f32 %v4993
        %vm5001 = vmor %vm4999, %vm5000
        %v5002 = vsel %vm5001, %v4993, %v4998
        %v5003 = vrsqrt.pop %v4960
        %v5004 = vmul.f32 %v5003, %v4960
        %v5005 = vmul.f32 %v5004, %v5003
        %v5006 = vmul.f32 0.5, %v5005
        %v5007 = vsub.f32 1.5, %v5006
        %v5008 = vmul.f32 %v5003, %v5007
        %vm5009 = vweird.f32 %v4960
        %vm5010 = vweird.f32 %v5003
        %vm5011 = vmor %vm5009, %vm5010
        %v5012 = vsel %vm5011, %v5003, %v5008
        %v5013 = vrsqrt.pop %v4961
        %v5014 = vmul.f32 %v5013, %v4961
        %v5015 = vmul.f32 %v5014, %v5013
        %v5016 = vmul.f32 0.5, %v5015
        %v5017 = vsub.f32 1.5, %v5016
        %v5018 = vmul.f32 %v5013, %v5017
        %vm5019 = vweird.f32 %v4961
        %vm5020 = vweird.f32 %v5013
        %vm5021 = vmor %vm5019, %vm5020
        %v5022 = vsel %vm5021, %v5013, %v5018
        %v5023 = vrsqrt.pop %v4962
        %v5024 = vmul.f32 %v5023, %v4962
        %v5025 = vmul.f32 %v5024, %v5023
        %v5026 = vmul.f32 0.5, %v5025
        %v5027 = vsub.f32 1.5, %v5026
        %v5028 = vmul.f32 %v5023, %v5027
        %vm5029 = vweird.f32 %v4962
        %vm5030 = vweird.f32 %v5023
        %vm5031 = vmor %vm5029, %vm5030
        %v5032 = vsel %vm5031, %v5023, %v5028
        %v5033 = vrsqrt.pop %v4963
        %v5034 = vmul.f32 %v5033, %v4963
        %v5035 = vmul.f32 %v5034, %v5033
        %v5036 = vmul.f32 0.5, %v5035
        %v5037 = vsub.f32 1.5, %v5036
        %v5038 = vmul.f32 %v5033, %v5037
        %vm5039 = vweird.f32 %v4963
        %vm5040 = vweird.f32 %v5033
        %vm5041 = vmor %vm5039, %vm5040
        %v5042 = vsel %vm5041, %v5033, %v5038
        %v5043 = vrsqrt.pop %v4964
        %v5044 = vmul.f32 %v5043, %v4964
        %v5045 = vmul.f32 %v5044, %v5043
        %v5046 = vmul.f32 0.5, %v5045
        %v5047 = vsub.f32 1.5, %v5046
        %v5048 = vmul.f32 %v5043, %v5047
        %vm5049 = vweird.f32 %v4964
        %vm5050 = vweird.f32 %v5043
        %vm5051 = vmor %vm5049, %vm5050
        %v5052 = vsel %vm5051, %v5043, %v5048
        %v5053 = vrsqrt.pop %v4965
        %v5054 = vmul.f32 %v5053, %v4965
        %v5055 = vmul.f32 %v5054, %v5053
        %v5056 = vmul.f32 0.5, %v5055
        %v5057 = vsub.f32 1.5, %v5056
        %v5058 = vmul.f32 %v5053, %v5057
        %vm5059 = vweird.f32 %v4965
        %vm5060 = vweird.f32 %v5053
        %vm5061 = vmor %vm5059, %vm5060
        %v5062 = vsel %vm5061, %v5053, %v5058
        %v5063 = vrsqrt.pop %v4966
        %v5064 = vmul.f32 %v5063, %v4966
        %v5065 = vmul.f32 %v5064, %v5063
        %v5066 = vmul.f32 0.5, %v5065
        %v5067 = vsub.f32 1.5, %v5066
        %v5068 = vmul.f32 %v5063, %v5067
        %vm5069 = vweird.f32 %v4966
        %vm5070 = vweird.f32 %v5063
        %vm5071 = vmor %vm5069, %vm5070
        %v5072 = vsel %vm5071, %v5063, %v5068
        %v5073 = vrsqrt.pop %v4967
        %v5074 = vmul.f32 %v5073, %v4967
        %v5075 = vmul.f32 %v5074, %v5073
        %v5076 = vmul.f32 0.5, %v5075
        %v5077 = vsub.f32 1.5, %v5076
        %v5078 = vmul.f32 %v5073, %v5077
        %vm5079 = vweird.f32 %v4967
        %vm5080 = vweird.f32 %v5073
        %vm5081 = vmor %vm5079, %vm5080
        %v5082 = vsel %vm5081, %v5073, %v5078
        %v5083 = vrsqrt.pop %v4968
        %v5084 = vmul.f32 %v5083, %v4968
        %v5085 = vmul.f32 %v5084, %v5083
        %v5086 = vmul.f32 0.5, %v5085
        %v5087 = vsub.f32 1.5, %v5086
        %v5088 = vmul.f32 %v5083, %v5087
        %vm5089 = vweird.f32 %v4968
        %vm5090 = vweird.f32 %v5083
        %vm5091 = vmor %vm5089, %vm5090
        %v5092 = vsel %vm5091, %v5083, %v5088
        %v5093 = vrsqrt.pop %v4969
        %v5094 = vmul.f32 %v5093, %v4969
        %v5095 = vmul.f32 %v5094, %v5093
        %v5096 = vmul.f32 0.5, %v5095
        %v5097 = vsub.f32 1.5, %v5096
        %v5098 = vmul.f32 %v5093, %v5097
        %vm5099 = vweird.f32 %v4969
        %vm5100 = vweird.f32 %v5093
        %vm5101 = vmor %vm5099, %vm5100
        %v5102 = vsel %vm5101, %v5093, %v5098
        %v5103 = vrsqrt.pop %v4970
        %v5104 = vmul.f32 %v5103, %v4970
        %v5105 = vmul.f32 %v5104, %v5103
        %v5106 = vmul.f32 0.5, %v5105
        %v5107 = vsub.f32 1.5, %v5106
        %v5108 = vmul.f32 %v5103, %v5107
        %vm5109 = vweird.f32 %v4970
        %vm5110 = vweird.f32 %v5103
        %vm5111 = vmor %vm5109, %vm5110
        %v5112 = vsel %vm5111, %v5103, %v5108
        %v5113 = vrsqrt.pop %v4971
        %v5114 = vmul.f32 %v5113, %v4971
        %v5115 = vmul.f32 %v5114, %v5113
        %v5116 = vmul.f32 0.5, %v5115
        %v5117 = vsub.f32 1.5, %v5116
        %v5118 = vmul.f32 %v5113, %v5117
        %vm5119 = vweird.f32 %v4971
        %vm5120 = vweird.f32 %v5113
        %vm5121 = vmor %vm5119, %vm5120
        %v5122 = vsel %vm5121, %v5113, %v5118
        %v5123 = vrsqrt.pop %v4972
        %v5124 = vmul.f32 %v5123, %v4972
        %v5125 = vmul.f32 %v5124, %v5123
        %v5126 = vmul.f32 0.5, %v5125
        %v5127 = vsub.f32 1.5, %v5126
        %v5128 = vmul.f32 %v5123, %v5127
        %vm5129 = vweird.f32 %v4972
        %vm5130 = vweird.f32 %v5123
        %vm5131 = vmor %vm5129, %vm5130
        %v5132 = vsel %vm5131, %v5123, %v5128
        %v5133 = vmul.f32 %v4877, %v4982
        %v5134 = vmul.f32 %v4878, %v4992
        %v5135 = vmul.f32 %v4879, %v5002
        %v5136 = vmul.f32 %v4880, %v5012
        %v5137 = vmul.f32 %v4881, %v5022
        %v5138 = vmul.f32 %v4882, %v5032
        %v5139 = vmul.f32 %v4883, %v5042
        %v5140 = vmul.f32 %v4884, %v5052
        %v5141 = vmul.f32 %v4885, %v5062
        %v5142 = vmul.f32 %v4886, %v5072
        %v5143 = vmul.f32 %v4887, %v5082
        %v5144 = vmul.f32 %v4888, %v5092
        %v5145 = vmul.f32 %v4889, %v5102
        %v5146 = vmul.f32 %v4890, %v5112
        %v5147 = vmul.f32 %v4891, %v5122
        %v5148 = vmul.f32 %v4892, %v5132
        %v5150 = vperm.slane %v4827, 0
        %v5152 = vmul.f32 %v5133, %v5150
        %v5153 = vmul.f32 %v5134, %v5150
        %v5154 = vmul.f32 %v5135, %v5150
        %v5155 = vmul.f32 %v5136, %v5150
        %v5156 = vmul.f32 %v5137, %v5150
        %v5157 = vmul.f32 %v5138, %v5150
        %v5158 = vmul.f32 %v5139, %v5150
        %v5159 = vmul.f32 %v5140, %v5150
        %v5160 = vmul.f32 %v5141, %v5150
        %v5161 = vmul.f32 %v5142, %v5150
        %v5162 = vmul.f32 %v5143, %v5150
        %v5163 = vmul.f32 %v5144, %v5150
        %v5164 = vmul.f32 %v5145, %v5150
        %v5165 = vmul.f32 %v5146, %v5150
        %v5166 = vmul.f32 %v5147, %v5150
        %v5167 = vmul.f32 %v5148, %v5150
        %v5169 = vperm.slane %v4828, 0
        %v5171 = vadd.f32 %v5152, %v5169
        %v5172 = vadd.f32 %v5153, %v5169
        %v5173 = vadd.f32 %v5154, %v5169
        %v5174 = vadd.f32 %v5155, %v5169
        %v5175 = vadd.f32 %v5156, %v5169
        %v5176 = vadd.f32 %v5157, %v5169
        %v5177 = vadd.f32 %v5158, %v5169
        %v5178 = vadd.f32 %v5159, %v5169
        %v5179 = vadd.f32 %v5160, %v5169
        %v5180 = vadd.f32 %v5161, %v5169
        %v5181 = vadd.f32 %v5162, %v5169
        %v5182 = vadd.f32 %v5163, %v5169
        %v5183 = vadd.f32 %v5164, %v5169
        %v5184 = vadd.f32 %v5165, %v5169
        %v5185 = vadd.f32 %v5166, %v5169
        %v5186 = vadd.f32 %v5167, %v5169
        %5187 = vst [vmem:[%s758] sm:$0xff] %v5171
        %5188 = vst [vmem:[%s758 + $0x8] sm:$0xff] %v5172
        %5189 = vst [vmem:[%s758 + $0x10] sm:$0xff] %v5173
        %5190 = vst [vmem:[%s758 + $0x18] sm:$0xff] %v5174
        %5191 = vst [vmem:[%s758 + $0x20] sm:$0xff] %v5175
        %5192 = vst [vmem:[%s758 + $0x28] sm:$0xff] %v5176
        %5193 = vst [vmem:[%s758 + $0x30] sm:$0xff] %v5177
        %5194 = vst [vmem:[%s758 + $0x38] sm:$0xff] %v5178
        %5195 = vst [vmem:[%s758 + $0x40] sm:$0xff] %v5179
        %5196 = vst [vmem:[%s758 + $0x48] sm:$0xff] %v5180
        %5197 = vst [vmem:[%s758 + $0x50] sm:$0xff] %v5181
        %5198 = vst [vmem:[%s758 + $0x58] sm:$0xff] %v5182
        %5199 = vst [vmem:[%s758 + $0x60] sm:$0xff] %v5183
        %5200 = vst [vmem:[%s758 + $0x68] sm:$0xff] %v5184
        %5201 = vst [vmem:[%s758 + $0x70] sm:$0xff] %v5185
        %5202 = vst [vmem:[%s758 + $0x78] sm:$0xff] %v5186
      $region96: #{encoder2d_forward.1} parent=87 // pred_fallthru
        _
      %p5203 = scmp.lt.s32.totalorder %s32, 1
      %s5204 = scalar_select %p5203, %s32, 1
      %s5205 = smul.addr %s5204, 16
      %s5206 = smul.addr %s5205, 8
      %s5207 = scalar_lea.vmem %s17, %s5206
      // Predicated region
      $region97: #{encoder2d_forward.1} parent=87 // pred_check
        %p5208 = pneg %p480
      $region98: #{encoder2d_forward.1} parent=87 // pred_check_branch
        %5210 = sbr.rel (%p5208) target = $region100
      $region99: #{encoder2d_forward.1} parent=87 // pred_region
        _
      $region100: #{encoder2d_forward.1} parent=87 // pred_fallthru
        _
    $region88: #{encoder2d_forward.1} parent=5 // pred_fallthru
      _
    %p5211 = scmp.le.s32.totalorder 2, %s23
    // Predicated region
    $region101: #{encoder2d_forward.1} parent=5 // pred_check
      %p5212 = pneg %p5211
    $region102: #{encoder2d_forward.1} parent=5 // pred_check_branch
      %5214 = sbr.rel (%p5212) target = $region104
    $region103: #{encoder2d_forward.1} parent=5 // pred_region
      %s5215 = ssub.s32 %s23, 2
      // Predicated region
      $region105: #{encoder2d_forward.1} parent=103 // pred_check
        %p5216 = pneg %p486
      $region106: #{encoder2d_forward.1} parent=103 // pred_check_branch
        %5218 = sbr.rel (%p5216) target = $region108
      $region107: #{encoder2d_forward.1} parent=103 // pred_region
        %p5219 = scmp.lt.s32.totalorder %s34, 1
        %s5220 = scalar_select %p5219, %s34, 1
        %s5221 = smul.addr %s5220, 16
        %s5222 = smul.addr %s5221, 8
        %s5223 = scalar_lea.vmem %s17, %s5222
      $region108: #{encoder2d_forward.1} parent=103 // pred_fallthru
        _
    $region104: #{encoder2d_forward.1} parent=5 // pred_fallthru
      _
  $region6: #{encoder2d_forward.1} parent=0 // loop_footer
    %s27 = sadd.s32 1, %s23
  $region7: #{encoder2d_forward.1} parent=0 // loop_footer_branch
    %22 = sbr.rel target = $region3
  $region8: #{encoder2d_forward.1} parent=0 // loop_exit
    _

</llo_original>
